<compile_context>
chip_gen: v6e
topology: v6e:2x2x1
jax: 0.10.0
libtpu: 0.0.40
codegen_flags: <defaults>
</compile_context>

<pallas_src>
import jax
import jax.numpy as jnp
from jax import lax
from jax.experimental import pallas as pl
from jax.experimental.pallas import tpu as pltpu

# ------------------------- hyperparameters (small synthetic) -------------------------
GRID_H, GRID_W = 256, 128          # fixed by the module (self.grid_size)
FLAT = GRID_H * GRID_W             # 32768
D_MODEL = 32                       # mamba_dim (small for the synthetic test)
N_LAYERS = 1
STATE_MULT = 1
D_STATE = 16 * STATE_MULT
EXPAND = 2
D_INNER = EXPAND * D_MODEL
D_CONV = 4
DT_RANK = max(1, (D_MODEL + 15) // 16)
LN_EPS = 1e-5
RMS_EPS = 1e-6


def _sigmoid(x):
    return 1.0 / (1.0 + jnp.exp(-x))


def _softplus(x):
    # numerically stable softplus
    return jnp.maximum(x, 0.0) + jnp.log(1.0 + jnp.exp(-jnp.abs(x)))


# ===================== encoder kernel: bernoulli + Linear + LayerNorm =====================
def _encoder_kernel(x_ref, u_ref, w_ref, b_ref, g_ref, be_ref, o_ref, acc_ref):
    k = pl.program_id(0)

    @pl.when(k == 0)
    def _():
        acc_ref[...] = jnp.zeros_like(acc_ref)

    # clamp(x,0,1) + Bernoulli sample fused with the reduction matmul.  The uniform
    # noise comes from the caller (jax.random) so the kernel also runs under
    # interpret mode (pltpu.prng_* has no CPU lowering).
    p = jnp.clip(x_ref[...], 0.0, 1.0)
    sample = (u_ref[...] < p).astype(jnp.bfloat16)          # 0/1 exact in bf16
    acc_ref[...] += jnp.dot(sample, w_ref[...], preferred_element_type=jnp.float32)

    @pl.when(k == pl.num_programs(0) - 1)
    def _():
        h = acc_ref[...] + b_ref[...]
        mu = jnp.mean(h, axis=-1, keepdims=True)
        var = jnp.mean((h - mu) ** 2, axis=-1, keepdims=True)
        o_ref[...] = (h - mu) * lax.rsqrt(var + LN_EPS) * g_ref[...] + be_ref[...]


def encode(x_flat, u, enc_w, enc_b, ln_g, ln_b, *, tk=8192):
    n, f = x_flat.shape
    d = enc_w.shape[1]
    # tk=8192 -> only 4 grid steps for the 32768-wide reduction (per-step overhead
    # no longer dominates the ~2 MiB weight stream); blocks fit scoped VMEM on
    # v5e/v6e/v7x with double buffering.
    # TODO(synk): for B*S >= 16 on v7x add a second "parallel" token grid axis so
    # both TensorCores are used; at n=8 tokens a single token block is optimal.
    return pl.pallas_call(
        _encoder_kernel,
        out_shape=jax.ShapeDtypeStruct((n, d), jnp.float32),
        grid_spec=pltpu.PrefetchScalarGridSpec(
            num_scalar_prefetch=0,
            grid=(f // tk,),
            in_specs=[
                pl.BlockSpec((n, tk), lambda k: (0, k)),
                pl.BlockSpec((n, tk), lambda k: (0, k)),
                pl.BlockSpec((tk, d), lambda k: (k, 0)),
                pl.BlockSpec((1, d), lambda k: (0, 0)),
                pl.BlockSpec((1, d), lambda k: (0, 0)),
                pl.BlockSpec((1, d), lambda k: (0, 0)),
            ],
            out_specs=pl.BlockSpec((n, d), lambda k: (0, 0)),
            scratch_shapes=[pltpu.VMEM((n, d), jnp.float32)],
        ),
        compiler_params=pltpu.CompilerParams(dimension_semantics=("arbitrary",)),
    )(x_flat, u, enc_w, enc_b, ln_g, ln_b)


# ===================== decoder kernel: LayerNorm + Linear(D -> 32768) =====================
def _decoder_kernel(z_ref, g_ref, be_ref, w_ref, b_ref, o_ref):
    # The tiny (n, D) LayerNorm is recomputed per output tile: it is negligible
    # VPU work next to the 512 KiB weight-block DMA, and hoisting it into a
    # pl.when(j==0) scratch would be unsafe under megacore "parallel" sharding
    # (the second core never executes j == 0).
    z = z_ref[...]
    mu = jnp.mean(z, axis=-1, keepdims=True)
    var = jnp.mean((z - mu) ** 2, axis=-1, keepdims=True)
    zn = ((z - mu) * lax.rsqrt(var + LN_EPS) * g_ref[...] + be_ref[...]).astype(jnp.bfloat16)
    o_ref[...] = jnp.dot(zn, w_ref[...], preferred_element_type=jnp.float32) + b_ref[...]


def decode(z, ln_g, ln_b, dec_w, dec_b, *, tn=8192):
    n, d = z.shape
    f = dec_w.shape[1]
    # tn=8192 -> 4 lane-dense output tiles (multiple of 128, unmasked stores).
    return pl.pallas_call(
        _decoder_kernel,
        out_shape=jax.ShapeDtypeStruct((n, f), jnp.float32),
        grid_spec=pltpu.PrefetchScalarGridSpec(
            num_scalar_prefetch=0,
            grid=(f // tn,),
            in_specs=[
                pl.BlockSpec((n, d), lambda j: (0, 0)),
                pl.BlockSpec((1, d), lambda j: (0, 0)),
                pl.BlockSpec((1, d), lambda j: (0, 0)),
                pl.BlockSpec((d, tn), lambda j: (0, j)),
                pl.BlockSpec((1, tn), lambda j: (0, j)),
            ],
            out_specs=pl.BlockSpec((n, tn), lambda j: (0, j)),
        ),
        compiler_params=pltpu.CompilerParams(dimension_semantics=("parallel",)),
    )(z, ln_g, ln_b, dec_w, dec_b)


# ===================== fused StackedMamba kernel (all layers, whole batch, one call) =====================
_MAMBA_PARAM_ORDER = ("rmsw", "win_x", "win_z", "convw", "convb",
                      "wx_dt", "wx_b", "wx_c", "wdt", "bdt",
                      "a_t", "dpar", "wout")


def _mamba_stack_kernel(x_ref,
                        rmsw_ref, winx_ref, winz_ref, convw_ref, convb_ref,
                        wxdt_ref, wxb_ref, wxc_ref, wdt_ref, bdt_ref,
                        at_ref, dpar_ref, wout_ref,
                        o_ref,
                        dA_scr, dBu_scr, h_scr):
    B, L, D = x_ref.shape
    NL = rmsw_ref.shape[0]
    d_inner = winx_ref.shape[2]
    d_state = at_ref.shape[1]
    K = convw_ref.shape[1]

    cur = x_ref[...]                                        # residual stream (B, L, D)

    for l in range(NL):                                     # static: weights stacked on axis 0
        xf = cur.reshape(B * L, D)

        # --- pre-norm (RMSNorm) ---
        ms = jnp.mean(xf * xf, axis=-1, keepdims=True)
        xn = xf * lax.rsqrt(ms + RMS_EPS) * rmsw_ref[l]

        # --- input projection, pre-split into x / gate branches (lane-aligned outputs) ---
        xp = jnp.dot(xn, winx_ref[l], preferred_element_type=jnp.float32)   # (B*L, d_inner)
        zg = jnp.dot(xn, winz_ref[l], preferred_element_type=jnp.float32)   # (B*L, d_inner)

        # --- causal depthwise conv1d via sublane time shifts (no LxL shift-matrix matmuls) ---
        # out[b, t] = sum_j w[j] * x[b, t - (K-1-j)]   (PyTorch Conv1d, left zero padding)
        xp3 = xp.reshape(B, L, d_inner)
        xpad = jnp.concatenate(
            [jnp.zeros((B, K - 1, d_inner), jnp.float32), xp3], axis=1)
        w_l = convw_ref[l]                                  # (K, d_inner)
        conv = jnp.zeros((B, L, d_inner), jnp.float32)
        for j in range(K):                                  # static, K = 4
            conv = conv + xpad[:, j:j + L, :] * w_l[j:j + 1, :][None]
        xc3 = conv + convb_ref[l][None]
        xc3 = xc3 * _sigmoid(xc3)                           # SiLU
        xc = xc3.reshape(B * L, d_inner)

        # --- data-dependent SSM parameters (x_proj weight pre-split -> lane-aligned) ---
        dtr = jnp.dot(xc, wxdt_ref[l], preferred_element_type=jnp.float32)  # (B*L, dt_rank)
        Bm = jnp.dot(xc, wxb_ref[l], preferred_element_type=jnp.float32)    # (B*L, d_state)
        Cm = jnp.dot(xc, wxc_ref[l], preferred_element_type=jnp.float32)    # (B*L, d_state)
        delta = _softplus(
            jnp.dot(dtr, wdt_ref[l], preferred_element_type=jnp.float32) + bdt_ref[l])

        AT = at_ref[l]                                      # (d_state, d_inner) = (-exp(A_log)).T
        delta3 = delta.reshape(B, L, d_inner)
        Bm3 = Bm.reshape(B, L, d_state)
        Cm3 = Cm.reshape(B, L, d_state)

        # Pre-compute the per-step scan operands once (vectorised over B and L)
        # into VMEM scratch; the sequential loop below is then only mul/add + a
        # row write (sublane-time layout, no lane-1 column slices, no concat+T).
        dA_scr[...] = jnp.exp(delta3[:, :, None, :] * AT[None, None, :, :])     # (B,L,S,Din)
        dBu_scr[...] = (delta3 * xc3)[:, :, None, :] * Bm3[:, :, :, None]       # (B,L,S,Din)

        for b in range(B):                                  # static, small batch
            def scan_body(t, h, _b=b):
                h = dA_scr[_b, pl.ds(t, 1)][0] * h + dBu_scr[_b, pl.ds(t, 1)][0]
                h_scr[_b, pl.ds(t, 1)] = h[None]
                return h

            lax.fori_loop(0, L, scan_body,
                          jnp.zeros((d_state, d_inner), jnp.float32),
                          unroll=True)

        # y[b,t,d] = sum_n h[b,t,n,d] * C[b,t,n] + D[d] * xc[b,t,d]
        y3 = jnp.sum(h_scr[...] * Cm3[:, :, :, None], axis=2) + xc3 * dpar_ref[l][None]
        zg3 = zg.reshape(B, L, d_inner)
        y3 = y3 * (zg3 * _sigmoid(zg3))                     # gate with SiLU(z)
        out = jnp.dot(y3.reshape(B * L, d_inner), wout_ref[l],
                      preferred_element_type=jnp.float32)   # (B*L, D)
        cur = cur + out.reshape(B, L, D)                    # residual

    o_ref[...] = cur


def mamba_stack(x_bld, mp):
    b, l, d = x_bld.shape
    params = [mp[k] for k in _MAMBA_PARAM_ORDER]
    d_inner = mp["win_x"].shape[2]
    d_state = mp["a_t"].shape[1]

    def _full_spec(p):
        nd = p.ndim
        return pl.BlockSpec(p.shape, lambda i, _nd=nd: (0,) * _nd)

    # Whole batch + all layers in ONE grid step: the entire working set is
    # well under 1 MiB of VMEM, so per-step / per-pallas_call overhead and the
    # inter-layer HBM round trip of latents are eliminated.
    return pl.pallas_call(
        _mamba_stack_kernel,
        out_shape=jax.ShapeDtypeStruct((b, l, d), jnp.float32),
        grid_spec=pltpu.PrefetchScalarGridSpec(
            num_scalar_prefetch=0,
            grid=(1,),
            in_specs=[pl.BlockSpec((b, l, d), lambda i: (0, 0, 0))]
                     + [_full_spec(p) for p in params],
            out_specs=pl.BlockSpec((b, l, d), lambda i: (0, 0, 0)),
            scratch_shapes=[
                pltpu.VMEM((b, l, d_state, d_inner), jnp.float32),   # dA
                pltpu.VMEM((b, l, d_state, d_inner), jnp.float32),   # dB*u
                pltpu.VMEM((b, l, d_state, d_inner), jnp.float32),   # h trajectory
            ],
        ),
        compiler_params=pltpu.CompilerParams(dimension_semantics=("arbitrary",)),
    )(x_bld, *params)


# ===================== GBM forward (glue) =====================
def gbm_forward(x, params, noise_key):
    b, s, gh, gw = x.shape
    n = b * s
    x_flat = x.reshape(n, gh * gw).astype(jnp.float32)
    # torch.bernoulli equivalent: uniform noise compared against clamped probs
    # inside the encoder kernel.
    u = jax.random.uniform(noise_key, (n, gh * gw), jnp.float32)

    latents = encode(x_flat, u, params["enc_w"], params["enc_b"],
                     params["ln_g"], params["ln_b"])                 # (B*S, D)
    latents = mamba_stack(latents.reshape(b, s, -1), params["mamba"])
    # Shared ln_g/ln_b: GBM uses the same autoencoder.norm in encode() and decode().
    pred_flat = decode(latents.reshape(n, -1), params["ln_g"], params["ln_b"],
                       params["dec_w"], params["dec_b"])             # (B*S, 32768)
    preds = pred_flat.reshape(b, s, GRID_H, GRID_W)
    return preds[:, :-1]                                             # (B, S-1, 256, 128)


# ===================== deterministic parameter init =====================
def init_params(key):
    ks = jax.random.split(key, 3)

    def nrm(k, shape, fan_in, dtype=jnp.float32):
        return (jax.random.normal(k, shape, jnp.float32) / jnp.sqrt(fan_in)).astype(dtype)

    p = {
        # bf16 weights halve HBM traffic of the two big (4 MiB @ f32) streams;
        # the kernels keep f32 accumulation via preferred_element_type.
        "enc_w": nrm(ks[0], (FLAT, D_MODEL), FLAT, jnp.bfloat16),
        "enc_b": jnp.zeros((1, D_MODEL), jnp.float32),
        "ln_g": jnp.ones((1, D_MODEL), jnp.float32),
        "ln_b": jnp.zeros((1, D_MODEL), jnp.float32),
        "dec_w": nrm(ks[1], (D_MODEL, FLAT), D_MODEL, jnp.bfloat16),
        "dec_b": jnp.zeros((1, FLAT), jnp.float32),
    }

    rmsw, winx, winz, convw, convb = [], [], [], [], []
    wxdt, wxb, wxc, wdt, bdt, a_t, dpar, wout = [], [], [], [], [], [], [], []
    layer_keys = jax.random.split(ks[2], N_LAYERS)
    for i in range(N_LAYERS):
        kk = jax.random.split(layer_keys[i], 8)
        rmsw.append(jnp.ones((1, D_MODEL), jnp.float32))
        winx.append(nrm(kk[0], (D_MODEL, D_INNER), D_MODEL))
        winz.append(nrm(kk[1], (D_MODEL, D_INNER), D_MODEL))
        convw.append(nrm(kk[2], (D_CONV, D_INNER), D_CONV))
        convb.append(jnp.zeros((1, D_INNER), jnp.float32))
        wxdt.append(nrm(kk[3], (D_INNER, DT_RANK), D_INNER))
        wxb.append(nrm(kk[4], (D_INNER, D_STATE), D_INNER))
        wxc.append(nrm(kk[5], (D_INNER, D_STATE), D_INNER))
        wdt.append(nrm(kk[6], (DT_RANK, D_INNER), DT_RANK))
        bdt.append(jnp.zeros((1, D_INNER), jnp.float32))
        alog = jnp.log(jnp.broadcast_to(
            jnp.arange(1, D_STATE + 1, dtype=jnp.float32)[None, :],
            (D_INNER, D_STATE)))
        a_t.append((-jnp.exp(alog)).T)          # A = -exp(A_log), hoisted out of the kernel
        dpar.append(jnp.ones((1, D_INNER), jnp.float32))
        wout.append(nrm(kk[7], (D_INNER, D_MODEL), D_INNER))

    p["mamba"] = {
        "rmsw": jnp.stack(rmsw), "win_x": jnp.stack(winx), "win_z": jnp.stack(winz),
        "convw": jnp.stack(convw), "convb": jnp.stack(convb),
        "wx_dt": jnp.stack(wxdt), "wx_b": jnp.stack(wxb), "wx_c": jnp.stack(wxc),
        "wdt": jnp.stack(wdt), "bdt": jnp.stack(bdt),
        "a_t": jnp.stack(a_t), "dpar": jnp.stack(dpar), "wout": jnp.stack(wout),
    }
    return p


if __name__ == "__main__":
    key = jax.random.PRNGKey(0)
    kx, kp, kn = jax.random.split(key, 3)

    B, S = 2, 4
    x = jax.random.uniform(kx, (B, S, GRID_H, GRID_W), jnp.float32)  # spike probabilities
    params = init_params(kp)

    out = gbm_forward(x, params, kn)
    out = jax.block_until_ready(out)

    assert out.shape == (B, S - 1, GRID_H, GRID_W), out.shape
    assert out.dtype == jnp.float32
    assert bool(jnp.all(jnp.isfinite(out)))
    print("KERNEL_OK")
</pallas_src>

<mosaic_0001>
module attributes {stable_mosaic.version = 11 : i64} {
  func.func @_encoder_kernel(%arg0: i32, %arg1: memref<8x8192xf32, #tpu.memory_space<vmem>>, %arg2: memref<8x8192xf32, #tpu.memory_space<vmem>>, %arg3: memref<8192x32xbf16, #tpu.memory_space<vmem>>, %arg4: memref<1x32xf32, #tpu.memory_space<vmem>>, %arg5: memref<1x32xf32, #tpu.memory_space<vmem>>, %arg6: memref<1x32xf32, #tpu.memory_space<vmem>>, %arg7: memref<8x32xf32, #tpu.memory_space<vmem>>, %arg8: memref<8x32xf32, #tpu.memory_space<vmem>>) attributes {dimension_semantics = [#tpu.dimension_semantics<arbitrary>], iteration_bounds = array<i64: 4>, scalar_prefetch = 0 : i64, scratch_operands = 1 : i64, tpu.core_type = #tpu.core_type<tc>, window_params = [{transform_indices = @transform_0, window_bounds = array<i64: 8, 8192>}, {transform_indices = @transform_1, window_bounds = array<i64: 8, 8192>}, {transform_indices = @transform_2, window_bounds = array<i64: 8192, 32>}, {pipeline_mode = #tpu.pipeline_mode<synchronous>, transform_indices = @transform_3, window_bounds = array<i64: 1, 32>}, {pipeline_mode = #tpu.pipeline_mode<synchronous>, transform_indices = @transform_4, window_bounds = array<i64: 1, 32>}, {pipeline_mode = #tpu.pipeline_mode<synchronous>, transform_indices = @transform_5, window_bounds = array<i64: 1, 32>}, {pipeline_mode = #tpu.pipeline_mode<synchronous>, transform_indices = @transform_6, window_bounds = array<i64: 8, 32>}]} {
    %c0_i32 = arith.constant 0 : i32
    %0 = arith.cmpi eq, %arg0, %c0_i32 : i32
    %1 = arith.extui %0 : i1 to i32
    %c0_i32_0 = arith.constant 0 : i32
    %2 = arith.cmpi ne, %1, %c0_i32_0 : i32
    scf.if %2 {
      %cst_13 = arith.constant 0.000000e+00 : f32
      %21 = vector.broadcast %cst_13 : f32 to vector<8x32xf32>
      %c0_14 = arith.constant 0 : index
      %c0_15 = arith.constant 0 : index
      %22 = vector.load %arg8[%c0_14, %c0_15] : memref<8x32xf32, #tpu.memory_space<vmem>>, vector<8x32xf32>
      tpu.vector_store %arg8[%c0_14, %c0_15], %21 {strides = array<i32>} : memref<8x32xf32, #tpu.memory_space<vmem>>, vector<8x32xf32>,
    } else {
    }
    %c0 = arith.constant 0 : index
    %c0_1 = arith.constant 0 : index
    %3 = vector.load %arg1[%c0, %c0_1] : memref<8x8192xf32, #tpu.memory_space<vmem>>, vector<8x8192xf32>
    %cst = arith.constant 0.000000e+00 : f32
    %cst_2 = arith.constant 1.000000e+00 : f32
    %4 = vector.broadcast %cst : f32 to vector<8x8192xf32>
    %5 = arith.maximumf %4, %3 : vector<8x8192xf32>
    %6 = vector.broadcast %cst_2 : f32 to vector<8x8192xf32>
    %7 = arith.minimumf %6, %5 : vector<8x8192xf32>
    %c0_3 = arith.constant 0 : index
    %c0_4 = arith.constant 0 : index
    %8 = vector.load %arg2[%c0_3, %c0_4] : memref<8x8192xf32, #tpu.memory_space<vmem>>, vector<8x8192xf32>
    %9 = arith.cmpf olt, %8, %7 : vector<8x8192xf32>
    %10 = arith.extui %9 : vector<8x8192xi1> to vector<8x8192xi32>
    %11 = arith.sitofp %10 : vector<8x8192xi32> to vector<8x8192xf32>
    %12 = arith.truncf %11 : vector<8x8192xf32> to vector<8x8192xbf16>
    %c0_5 = arith.constant 0 : index
    %c0_6 = arith.constant 0 : index
    %13 = vector.load %arg8[%c0_5, %c0_6] : memref<8x32xf32, #tpu.memory_space<vmem>>, vector<8x32xf32>
    %c0_7 = arith.constant 0 : index
    %c0_8 = arith.constant 0 : index
    %14 = vector.load %arg3[%c0_7, %c0_8] : memref<8192x32xbf16, #tpu.memory_space<vmem>>, vector<8192x32xbf16>
    %cst_9 = arith.constant dense<0.000000e+00> : vector<8x32xf32>
    %15 = tpu.matmul %12, %14, %cst_9 {dimension_numbers = #tpu.dot_dimension_numbers<[1], [0], [0], [1], [0, 0, 1, 1], [], []>} : vector<8x8192xbf16>, vector<8192x32xbf16>, vector<8x32xf32> -> vector<8x32xf32>
    %16 = arith.addf %13, %15 : vector<8x32xf32>
    %c0_10 = arith.constant 0 : index
    %c0_11 = arith.constant 0 : index
    %17 = vector.load %arg8[%c0_10, %c0_11] : memref<8x32xf32, #tpu.memory_space<vmem>>, vector<8x32xf32>
    tpu.vector_store %arg8[%c0_10, %c0_11], %16 {strides = array<i32>} : memref<8x32xf32, #tpu.memory_space<vmem>>, vector<8x32xf32>,
    %c3_i32 = arith.constant 3 : i32
    %18 = arith.cmpi eq, %arg0, %c3_i32 : i32
    %19 = arith.extui %18 : i1 to i32
    %c0_i32_12 = arith.constant 0 : i32
    %20 = arith.cmpi ne, %19, %c0_i32_12 : i32
    scf.if %20 {
      %c0_13 = arith.constant 0 : index
      %c0_14 = arith.constant 0 : index
      %21 = vector.load %arg8[%c0_13, %c0_14] : memref<8x32xf32, #tpu.memory_space<vmem>>, vector<8x32xf32>
      %c0_15 = arith.constant 0 : index
      %c0_16 = arith.constant 0 : index
      %22 = vector.load %arg4[%c0_15, %c0_16] : memref<1x32xf32, #tpu.memory_space<vmem>>, vector<1x32xf32>
      %23 = vector.broadcast %22 : vector<1x32xf32> to vector<8x32xf32>
      %24 = arith.addf %21, %23 : vector<8x32xf32>
      %cst_17 = arith.constant dense<0.000000e+00> : vector<8xf32>
      %25 = vector.multi_reduction <add>, %24, %cst_17 [1] : vector<8x32xf32> to vector<8xf32>
      %26 = vector.shape_cast %25 : vector<8xf32> to vector<8x1xf32>
      %cst_18 = arith.constant 3.200000e+01 : f32
      %27 = vector.broadcast %cst_18 : f32 to vector<8x1xf32>
      %28 = arith.divf %26, %27 : vector<8x1xf32>
      %29 = vector.broadcast %28 : vector<8x1xf32> to vector<8x32xf32>
      %30 = arith.subf %24, %29 : vector<8x32xf32>
      %31 = arith.mulf %30, %30 : vector<8x32xf32>
      %cst_19 = arith.constant dense<0.000000e+00> : vector<8xf32>
      %32 = vector.multi_reduction <add>, %31, %cst_19 [1] : vector<8x32xf32> to vector<8xf32>
      %33 = vector.shape_cast %32 : vector<8xf32> to vector<8x1xf32>
      %cst_20 = arith.constant 3.200000e+01 : f32
      %34 = vector.broadcast %cst_20 : f32 to vector<8x1xf32>
      %35 = arith.divf %33, %34 : vector<8x1xf32>
      %36 = vector.broadcast %28 : vector<8x1xf32> to vector<8x32xf32>
      %37 = arith.subf %24, %36 : vector<8x32xf32>
      %cst_21 = arith.constant 9.99999974E-6 : f32
      %38 = vector.broadcast %cst_21 : f32 to vector<8x1xf32>
      %39 = arith.addf %35, %38 : vector<8x1xf32>
      %40 = math.rsqrt %39 : vector<8x1xf32>
      %41 = vector.broadcast %40 : vector<8x1xf32> to vector<8x32xf32>
      %42 = arith.mulf %37, %41 : vector<8x32xf32>
      %c0_22 = arith.constant 0 : index
      %c0_23 = arith.constant 0 : index
      %43 = vector.load %arg5[%c0_22, %c0_23] : memref<1x32xf32, #tpu.memory_space<vmem>>, vector<1x32xf32>
      %44 = vector.broadcast %43 : vector<1x32xf32> to vector<8x32xf32>
      %45 = arith.mulf %42, %44 : vector<8x32xf32>
      %c0_24 = arith.constant 0 : index
      %c0_25 = arith.constant 0 : index
      %46 = vector.load %arg6[%c0_24, %c0_25] : memref<1x32xf32, #tpu.memory_space<vmem>>, vector<1x32xf32>
      %47 = vector.broadcast %46 : vector<1x32xf32> to vector<8x32xf32>
      %48 = arith.addf %45, %47 : vector<8x32xf32>
      %c0_26 = arith.constant 0 : index
      %c0_27 = arith.constant 0 : index
      %49 = vector.load %arg7[%c0_26, %c0_27] : memref<8x32xf32, #tpu.memory_space<vmem>>, vector<8x32xf32>
      tpu.vector_store %arg7[%c0_26, %c0_27], %48 {strides = array<i32>} : memref<8x32xf32, #tpu.memory_space<vmem>>, vector<8x32xf32>,
    } else {
    }
    return
  }
  func.func @transform_0(%arg0: i32) -> (i32, i32) {
    %c0_i32 = arith.constant 0 : i32
    %c0_i32_0 = arith.constant 0 : i32
    return %c0_i32, %arg0 : i32, i32
  }
  func.func @transform_1(%arg0: i32) -> (i32, i32) {
    %c0_i32 = arith.constant 0 : i32
    %c0_i32_0 = arith.constant 0 : i32
    return %c0_i32, %arg0 : i32, i32
  }
  func.func @transform_2(%arg0: i32) -> (i32, i32) {
    %c0_i32 = arith.constant 0 : i32
    %c0_i32_0 = arith.constant 0 : i32
    return %arg0, %c0_i32 : i32, i32
  }
  func.func @transform_3(%arg0: i32) -> (i32, i32) {
    %c0_i32 = arith.constant 0 : i32
    %c0_i32_0 = arith.constant 0 : i32
    %c0_i32_1 = arith.constant 0 : i32
    return %c0_i32, %c0_i32_0 : i32, i32
  }
  func.func @transform_4(%arg0: i32) -> (i32, i32) {
    %c0_i32 = arith.constant 0 : i32
    %c0_i32_0 = arith.constant 0 : i32
    %c0_i32_1 = arith.constant 0 : i32
    return %c0_i32, %c0_i32_0 : i32, i32
  }
  func.func @transform_5(%arg0: i32) -> (i32, i32) {
    %c0_i32 = arith.constant 0 : i32
    %c0_i32_0 = arith.constant 0 : i32
    %c0_i32_1 = arith.constant 0 : i32
    return %c0_i32, %c0_i32_0 : i32, i32
  }
  func.func @transform_6(%arg0: i32) -> (i32, i32) {
    %c0_i32 = arith.constant 0 : i32
    %c0_i32_0 = arith.constant 0 : i32
    %c0_i32_1 = arith.constant 0 : i32
    return %c0_i32, %c0_i32_0 : i32, i32
  }
}

</mosaic_0001>

<llo_original>
// kernel: tpu_custom_call.1
$region0: #{tpu_custom_call.1}
  #allocation0 [shape = 'u32[]', space=smem, size = 0x4, offset = 0x4, fixed_abs, tag = 'smem constant byte address 0x4 - core index']
  #allocation1 [shape = 'u32[144,128]{1,0:T(1,128)}', space=vmem, size = 0x12000, scoped, tag = 'internal scratch']
  #allocation2 [shape = 'f32[8,32]{1,0:T(8,128)}', space=vmem, size = 0x1000, scoped, tag = 'scratch operand']
  %s0 = inlined_call_operand.vmem [shape: f32[8,32768], index: 0, kind: input, shape index: {}]
  %s1 = inlined_call_operand.vmem [shape: f32[8,32768], index: 1, kind: input, shape index: {}]
  %s2 = inlined_call_operand.vmem [shape: bf16[32768,32], index: 2, kind: input, shape index: {}]
  %s3 = inlined_call_operand.vmem [shape: f32[1,32], index: 3, kind: input, shape index: {}]
  %s4 = inlined_call_operand.vmem [shape: f32[1,32], index: 4, kind: input, shape index: {}]
  %s5 = inlined_call_operand.vmem [shape: f32[1,32], index: 5, kind: input, shape index: {}]
  %s6 = inlined_call_operand.hbm [shape: f32[8,32], index: 6, kind: output, shape index: {}]
  %s7 = sld [smem:[#allocation0]]
  $region65: #{tpu_custom_call.1} parent=0
    _
  %s9 = ssub.s32 1, %s7
  %s10 = scalar_select 0, %s9, %s7
  $region1: #{tpu_custom_call.1} parent=0
    #allocation3 [shape = 'u8[4096]{0}', space=vmem, size = 0x1000, scoped, tag = 'output window, operand 0, single buffered']
    #allocation4 [shape = 's32[2]{0}', space=sflag, size = 0x8, scoped, tag = 'scoped memory for tpu_custom_call.1']
    %11 = vsyncpa [#allocation4], 0
    loop: start=0, step=1, limit=6
    $region2: #{tpu_custom_call.1} parent=1 // loop_pre_header
      _
    $region3: #{tpu_custom_call.1} parent=1 // loop_header
      %s13 = sphi 0, %s17
      %p14 = scmp.ge.s32.totalorder %s13, 6
      %s23 = sphi 0, %s25
      %s26 = sphi 0, %s23
      %s27 = sphi 0, %s26
      %s43 = sphi 0, %s27
      %s49 = sphi 0, %s51
      %s52 = sphi 0, %s49
      %s53 = sphi 0, %s52
      %s69 = sphi 0, %s53
      %s75 = sphi 0, %s77
      %s78 = sphi 0, %s75
      %s79 = sphi 0, %s78
      %s95 = sphi 0, %s79
      %s99 = sphi 0, %s99
      %s101 = sphi 0, %s99
      %s102 = sphi 0, %s101
      %s116 = sphi 0, %s102
      %s120 = sphi 0, %s120
      %s122 = sphi 0, %s120
      %s123 = sphi 0, %s122
      %s137 = sphi 0, %s123
      %s141 = sphi 0, %s141
      %s143 = sphi 0, %s141
      %s144 = sphi 0, %s143
      %s158 = sphi 0, %s144
      %s162 = sphi 0, %s162
      %s164 = sphi 0, %s162
      %s165 = sphi 0, %s164
      %s179 = sphi 0, %s165
    $region4: #{tpu_custom_call.1} parent=1 // loop_header_branch
      %16 = sbr.rel (%p14) target = $region8
    $region5: #{tpu_custom_call.1} parent=1 // loop_body
      %s18 = ssub.s32 %s13, 1
      %s19 = ssub.s32 %s13, 2
      %s20 = sadd.s32 %s13, 1
      %s21 = ssub.s32 %s13, %s20
      %p22 = scmp.eq.s32.totalorder %s21, 0
      %s24 = sadd.s32 %s23, 1
      %s25 = scalar_select %p22, %s23, %s24
      %p28 = pneg %p22
      %p29 = scmp.eq.s32.totalorder %s13, 3
      %p30 = por %p28, %p29
      %p31 = scmp.ne.s32.totalorder %s23, %s26
      %p32 = scmp.eq.s32.totalorder %s13, 0
      %p33 = por %p31, %p32
      %p34 = scmp.ne.s32.totalorder %s23, %s26
      %p35 = scmp.eq.s32.totalorder %s18, 3
      %p36 = por %p34, %p35
      %p37 = scmp.ne.s32.totalorder %s26, %s27
      %p38 = scmp.eq.s32.totalorder %s18, 0
      %p39 = por %p37, %p38
      %p40 = scmp.ne.s32.totalorder %s26, %s27
      %p41 = scmp.eq.s32.totalorder %s19, 3
      %p42 = por %p40, %p41
      %p44 = scmp.ne.s32.totalorder %s27, %s43
      %p45 = scmp.eq.s32.totalorder %s19, 0
      %p46 = por %p44, %p45
      %s47 = ssub.s32 %s13, %s20
      %p48 = scmp.eq.s32.totalorder %s47, 0
      %s50 = sadd.s32 %s49, 1
      %s51 = scalar_select %p48, %s49, %s50
      %p54 = pneg %p48
      %p55 = scmp.eq.s32.totalorder %s13, 3
      %p56 = por %p54, %p55
      %p57 = scmp.ne.s32.totalorder %s49, %s52
      %p58 = scmp.eq.s32.totalorder %s13, 0
      %p59 = por %p57, %p58
      %p60 = scmp.ne.s32.totalorder %s49, %s52
      %p61 = scmp.eq.s32.totalorder %s18, 3
      %p62 = por %p60, %p61
      %p63 = scmp.ne.s32.totalorder %s52, %s53
      %p64 = scmp.eq.s32.totalorder %s18, 0
      %p65 = por %p63, %p64
      %p66 = scmp.ne.s32.totalorder %s52, %s53
      %p67 = scmp.eq.s32.totalorder %s19, 3
      %p68 = por %p66, %p67
      %p70 = scmp.ne.s32.totalorder %s53, %s69
      %p71 = scmp.eq.s32.totalorder %s19, 0
      %p72 = por %p70, %p71
      %s73 = ssub.s32 %s13, %s20
      %p74 = scmp.eq.s32.totalorder %s73, 0
      %s76 = sadd.s32 %s75, 1
      %s77 = scalar_select %p74, %s75, %s76
      %p80 = pneg %p74
      %p81 = scmp.eq.s32.totalorder %s13, 3
      %p82 = por %p80, %p81
      %p83 = scmp.ne.s32.totalorder %s75, %s78
      %p84 = scmp.eq.s32.totalorder %s13, 0
      %p85 = por %p83, %p84
      %p86 = scmp.ne.s32.totalorder %s75, %s78
      %p87 = scmp.eq.s32.totalorder %s18, 3
      %p88 = por %p86, %p87
      %p89 = scmp.ne.s32.totalorder %s78, %s79
      %p90 = scmp.eq.s32.totalorder %s18, 0
      %p91 = por %p89, %p90
      %p92 = scmp.ne.s32.totalorder %s78, %s79
      %p93 = scmp.eq.s32.totalorder %s19, 3
      %p94 = por %p92, %p93
      %p96 = scmp.ne.s32.totalorder %s79, %s95
      %p97 = scmp.eq.s32.totalorder %s19, 0
      %p98 = por %p96, %p97
      %s100 = sadd.s32 %s99, 1
      %p103 = scmp.eq.s32.totalorder %s13, 3
      %p104 = scmp.ne.s32.totalorder %s99, %s101
      %p105 = scmp.eq.s32.totalorder %s13, 0
      %p106 = por %p104, %p105
      %p107 = scmp.ne.s32.totalorder %s99, %s101
      %p108 = scmp.eq.s32.totalorder %s18, 3
      %p109 = por %p107, %p108
      %p110 = scmp.ne.s32.totalorder %s101, %s102
      %p111 = scmp.eq.s32.totalorder %s18, 0
      %p112 = por %p110, %p111
      %p113 = scmp.ne.s32.totalorder %s101, %s102
      %p114 = scmp.eq.s32.totalorder %s19, 3
      %p115 = por %p113, %p114
      %p117 = scmp.ne.s32.totalorder %s102, %s116
      %p118 = scmp.eq.s32.totalorder %s19, 0
      %p119 = por %p117, %p118
      %s121 = sadd.s32 %s120, 1
      %p124 = scmp.eq.s32.totalorder %s13, 3
      %p125 = scmp.ne.s32.totalorder %s120, %s122
      %p126 = scmp.eq.s32.totalorder %s13, 0
      %p127 = por %p125, %p126
      %p128 = scmp.ne.s32.totalorder %s120, %s122
      %p129 = scmp.eq.s32.totalorder %s18, 3
      %p130 = por %p128, %p129
      %p131 = scmp.ne.s32.totalorder %s122, %s123
      %p132 = scmp.eq.s32.totalorder %s18, 0
      %p133 = por %p131, %p132
      %p134 = scmp.ne.s32.totalorder %s122, %s123
      %p135 = scmp.eq.s32.totalorder %s19, 3
      %p136 = por %p134, %p135
      %p138 = scmp.ne.s32.totalorder %s123, %s137
      %p139 = scmp.eq.s32.totalorder %s19, 0
      %p140 = por %p138, %p139
      %s142 = sadd.s32 %s141, 1
      %p145 = scmp.eq.s32.totalorder %s13, 3
      %p146 = scmp.ne.s32.totalorder %s141, %s143
      %p147 = scmp.eq.s32.totalorder %s13, 0
      %p148 = por %p146, %p147
      %p149 = scmp.ne.s32.totalorder %s141, %s143
      %p150 = scmp.eq.s32.totalorder %s18, 3
      %p151 = por %p149, %p150
      %p152 = scmp.ne.s32.totalorder %s143, %s144
      %p153 = scmp.eq.s32.totalorder %s18, 0
      %p154 = por %p152, %p153
      %p155 = scmp.ne.s32.totalorder %s143, %s144
      %p156 = scmp.eq.s32.totalorder %s19, 3
      %p157 = por %p155, %p156
      %p159 = scmp.ne.s32.totalorder %s144, %s158
      %p160 = scmp.eq.s32.totalorder %s19, 0
      %p161 = por %p159, %p160
      %s163 = sadd.s32 %s162, 1
      %p166 = scmp.eq.s32.totalorder %s13, 3
      %p167 = scmp.ne.s32.totalorder %s162, %s164
      %p168 = scmp.eq.s32.totalorder %s13, 0
      %p169 = por %p167, %p168
      %p170 = scmp.ne.s32.totalorder %s162, %s164
      %p171 = scmp.eq.s32.totalorder %s18, 3
      %p172 = por %p170, %p171
      %p173 = scmp.ne.s32.totalorder %s164, %s165
      %p174 = scmp.eq.s32.totalorder %s18, 0
      %p175 = por %p173, %p174
      %p176 = scmp.ne.s32.totalorder %s164, %s165
      %p177 = scmp.eq.s32.totalorder %s19, 3
      %p178 = por %p176, %p177
      %p180 = scmp.ne.s32.totalorder %s165, %s179
      %p181 = scmp.eq.s32.totalorder %s19, 0
      %p182 = por %p180, %p181
      %p183 = scmp.le.s32.totalorder 1, %s13
      %p184 = scmp.lt.s32.totalorder %s13, 5
      %p185 = pnand %p183, %p184
      %p186 = pneg %p185
      // Predicated region
      $region9: #{tpu_custom_call.1} parent=5 // pred_check
        _
      $region10: #{tpu_custom_call.1} parent=5 // pred_check_branch
        %188 = sbr.rel (%p185) target = $region12
      $region11: #{tpu_custom_call.1} parent=5 // pred_region
        %s189 = ssub.s32 %s13, 1
        // Predicated region
        $region13: #{tpu_custom_call.1} parent=11 // pred_check
          %p190 = pneg %p112
        $region14: #{tpu_custom_call.1} parent=11 // pred_check_branch
          %192 = sbr.rel (%p190) target = $region16
        $region15: #{tpu_custom_call.1} parent=11 // pred_region
          _
        $region16: #{tpu_custom_call.1} parent=11 // pred_fallthru
          _
        // Predicated region
        $region17: #{tpu_custom_call.1} parent=11 // pred_check
          %p193 = pneg %p133
        $region18: #{tpu_custom_call.1} parent=11 // pred_check_branch
          %195 = sbr.rel (%p193) target = $region20
        $region19: #{tpu_custom_call.1} parent=11 // pred_region
          _
        $region20: #{tpu_custom_call.1} parent=11 // pred_fallthru
          _
        // Predicated region
        $region21: #{tpu_custom_call.1} parent=11 // pred_check
          %p196 = pneg %p154
        $region22: #{tpu_custom_call.1} parent=11 // pred_check_branch
          %198 = sbr.rel (%p196) target = $region24
        $region23: #{tpu_custom_call.1} parent=11 // pred_region
          _
        $region24: #{tpu_custom_call.1} parent=11 // pred_fallthru
          _
      $region12: #{tpu_custom_call.1} parent=5 // pred_fallthru
        _
      %p199 = scmp.lt.s32.totalorder %s13, 4
      // Predicated region
      $region25: #{tpu_custom_call.1} parent=5 // pred_check
        %p200 = pneg %p199
      $region26: #{tpu_custom_call.1} parent=5 // pred_check_branch
        %202 = sbr.rel (%p200) target = $region28
      $region27: #{tpu_custom_call.1} parent=5 // pred_region
        // Predicated region
        $region29: #{tpu_custom_call.1} parent=27 // pred_check
          %p203 = pneg %p33
        $region30: #{tpu_custom_call.1} parent=27 // pred_check_branch
          %205 = sbr.rel (%p203) target = $region32
        $region31: #{tpu_custom_call.1} parent=27 // pred_region
          %s206 = smul.u32 64, %s13
          %p207 = scmp.lt.s32.totalorder %s206, 255
          %s208 = scalar_select %p207, %s206, 255
          %s209 = smul.addr %s208, 8
          %s210 = scalar_lea.vmem %s0, %s209
          %s211 = smul.u32 64, %s13
        $region32: #{tpu_custom_call.1} parent=27 // pred_fallthru
          _
        // Predicated region
        $region33: #{tpu_custom_call.1} parent=27 // pred_check
          %p212 = pneg %p59
        $region34: #{tpu_custom_call.1} parent=27 // pred_check_branch
          %214 = sbr.rel (%p212) target = $region36
        $region35: #{tpu_custom_call.1} parent=27 // pred_region
          %s215 = smul.u32 64, %s13
          %p216 = scmp.lt.s32.totalorder %s215, 255
          %s217 = scalar_select %p216, %s215, 255
          %s218 = smul.addr %s217, 8
          %s219 = scalar_lea.vmem %s1, %s218
          %s220 = smul.u32 64, %s13
        $region36: #{tpu_custom_call.1} parent=27 // pred_fallthru
          _
        // Predicated region
        $region37: #{tpu_custom_call.1} parent=27 // pred_check
          %p221 = pneg %p85
        $region38: #{tpu_custom_call.1} parent=27 // pred_check_branch
          %223 = sbr.rel (%p221) target = $region40
        $region39: #{tpu_custom_call.1} parent=27 // pred_region
          %s224 = smul.u32 1024, %s13
          %p225 = scmp.lt.s32.totalorder %s224, 4095
          %s226 = scalar_select %p225, %s224, 4095
          %s227 = smul.addr %s226, 4
          %s228 = scalar_lea.vmem %s2, %s227
          %s229 = smul.u32 1024, %s13
        $region40: #{tpu_custom_call.1} parent=27 // pred_fallthru
          _
      $region28: #{tpu_custom_call.1} parent=5 // pred_fallthru
        _
      %p230 = scmp.le.s32.totalorder 1, %s13
      %p231 = scmp.lt.s32.totalorder %s13, 5
      %p232 = pnand %p230, %p231
      %p233 = pneg %p232
      // Predicated region
      $region41: #{tpu_custom_call.1} parent=5 // pred_check
        _
      $region42: #{tpu_custom_call.1} parent=5 // pred_check_branch
        %235 = sbr.rel (%p232) target = $region44
      $region43: #{tpu_custom_call.1} parent=5 // pred_region
        %s236 = ssub.s32 %s13, 1
        %s237 = smul.u32 64, %s18
        %p238 = scmp.lt.s32.totalorder %s237, 255
        %s239 = scalar_select %p238, %s237, 255
        %s240 = smul.addr %s239, 8
        %s241 = scalar_lea.vmem %s0, %s240
        %p242 = pneg %p39
        %p243 = pneg %p36
        %s244 = smul.u32 64, %s18
        %p245 = scmp.lt.s32.totalorder %s244, 255
        %s246 = scalar_select %p245, %s244, 255
        %s247 = smul.addr %s246, 8
        %s248 = scalar_lea.vmem %s1, %s247
        %p249 = pneg %p65
        %p250 = pneg %p62
        %s251 = smul.u32 1024, %s18
        %p252 = scmp.lt.s32.totalorder %s251, 4095
        %s253 = scalar_select %p252, %s251, 4095
        %s254 = smul.addr %s253, 4
        %s255 = scalar_lea.vmem %s2, %s254
        %p256 = pneg %p91
        %p257 = pneg %p88
        %p258 = pneg %p112
        %p259 = pneg %p109
        %p260 = pneg %p133
        %p261 = pneg %p130
        %p262 = pneg %p154
        %p263 = pneg %p151
        %p264 = pneg %p175
        %p265 = pneg %p172
        %s266 = smul.u32 64, %s18
        %p267 = scmp.lt.s32.totalorder %s266, 255
        %s268 = scalar_select %p267, %s266, 255
        %s269 = smul.addr %s268, 8
        %s270 = scalar_lea.vmem %s0, %s269
        %s271 = smul.u32 64, %s18
        %s272 = smul.u32 64, %s18
        %p273 = scmp.lt.s32.totalorder %s272, 255
        %s274 = scalar_select %p273, %s272, 255
        %s275 = smul.addr %s274, 8
        %s276 = scalar_lea.vmem %s1, %s275
        %s277 = smul.u32 64, %s18
        %s278 = smul.u32 1024, %s18
        %p279 = scmp.lt.s32.totalorder %s278, 4095
        %s280 = scalar_select %p279, %s278, 4095
        %s281 = smul.addr %s280, 4
        %s282 = scalar_lea.vmem %s2, %s281
        %s283 = smul.u32 1024, %s18
        %p285 = scmp.eq.s32.totalorder %s18, 0
        // Predicated region
        $region45: #{tpu_custom_call.1} parent=43 // pred_check
          %p286 = pneg %p285
        $region46: #{tpu_custom_call.1} parent=43 // pred_check_branch
          %288 = sbr.rel (%p286) target = $region48
        $region47: #{tpu_custom_call.1} parent=43 // pred_region
          %vm289 = vcmask 261120
          %290 = vst.msk [vmem:[#allocation2] sm:$0xff] %vm289, 0.0
        $region48: #{tpu_custom_call.1} parent=43 // pred_fallthru
          _
        %v291 = vld [vmem:[%s270] sm:$0xff]
        %v292 = vld [vmem:[%s270 + $0x8] sm:$0xff]
        %v293 = vld [vmem:[%s270 + $0x10] sm:$0xff]
        %v294 = vld [vmem:[%s270 + $0x18] sm:$0xff]
        %v295 = vld [vmem:[%s270 + $0x20] sm:$0xff]
        %v296 = vld [vmem:[%s270 + $0x28] sm:$0xff]
        %v297 = vld [vmem:[%s270 + $0x30] sm:$0xff]
        %v298 = vld [vmem:[%s270 + $0x38] sm:$0xff]
        %v299 = vld [vmem:[%s270 + $0x40] sm:$0xff]
        %v300 = vld [vmem:[%s270 + $0x48] sm:$0xff]
        %v301 = vld [vmem:[%s270 + $0x50] sm:$0xff]
        %v302 = vld [vmem:[%s270 + $0x58] sm:$0xff]
        %v303 = vld [vmem:[%s270 + $0x60] sm:$0xff]
        %v304 = vld [vmem:[%s270 + $0x68] sm:$0xff]
        %v305 = vld [vmem:[%s270 + $0x70] sm:$0xff]
        %v306 = vld [vmem:[%s270 + $0x78] sm:$0xff]
        %v307 = vld [vmem:[%s270 + $0x80] sm:$0xff]
        %v308 = vld [vmem:[%s270 + $0x88] sm:$0xff]
        %v309 = vld [vmem:[%s270 + $0x90] sm:$0xff]
        %v310 = vld [vmem:[%s270 + $0x98] sm:$0xff]
        %v311 = vld [vmem:[%s270 + $0xa0] sm:$0xff]
        %v312 = vld [vmem:[%s270 + $0xa8] sm:$0xff]
        %v313 = vld [vmem:[%s270 + $0xb0] sm:$0xff]
        %v314 = vld [vmem:[%s270 + $0xb8] sm:$0xff]
        %v315 = vld [vmem:[%s270 + $0xc0] sm:$0xff]
        %v316 = vld [vmem:[%s270 + $0xc8] sm:$0xff]
        %v317 = vld [vmem:[%s270 + $0xd0] sm:$0xff]
        %v318 = vld [vmem:[%s270 + $0xd8] sm:$0xff]
        %v319 = vld [vmem:[%s270 + $0xe0] sm:$0xff]
        %v320 = vld [vmem:[%s270 + $0xe8] sm:$0xff]
        %v321 = vld [vmem:[%s270 + $0xf0] sm:$0xff]
        %v322 = vld [vmem:[%s270 + $0xf8] sm:$0xff]
        %v323 = vld [vmem:[%s270 + $0x100] sm:$0xff]
        %v324 = vld [vmem:[%s270 + $0x108] sm:$0xff]
        %v325 = vld [vmem:[%s270 + $0x110] sm:$0xff]
        %v326 = vld [vmem:[%s270 + $0x118] sm:$0xff]
        %v327 = vld [vmem:[%s270 + $0x120] sm:$0xff]
        %v328 = vld [vmem:[%s270 + $0x128] sm:$0xff]
        %v329 = vld [vmem:[%s270 + $0x130] sm:$0xff]
        %v330 = vld [vmem:[%s270 + $0x138] sm:$0xff]
        %v331 = vld [vmem:[%s270 + $0x140] sm:$0xff]
        %v332 = vld [vmem:[%s270 + $0x148] sm:$0xff]
        %v333 = vld [vmem:[%s270 + $0x150] sm:$0xff]
        %v334 = vld [vmem:[%s270 + $0x158] sm:$0xff]
        %v335 = vld [vmem:[%s270 + $0x160] sm:$0xff]
        %v336 = vld [vmem:[%s270 + $0x168] sm:$0xff]
        %v337 = vld [vmem:[%s270 + $0x170] sm:$0xff]
        %v338 = vld [vmem:[%s270 + $0x178] sm:$0xff]
        %v339 = vld [vmem:[%s270 + $0x180] sm:$0xff]
        %v340 = vld [vmem:[%s270 + $0x188] sm:$0xff]
        %v341 = vld [vmem:[%s270 + $0x190] sm:$0xff]
        %v342 = vld [vmem:[%s270 + $0x198] sm:$0xff]
        %v343 = vld [vmem:[%s270 + $0x1a0] sm:$0xff]
        %v344 = vld [vmem:[%s270 + $0x1a8] sm:$0xff]
        %v345 = vld [vmem:[%s270 + $0x1b0] sm:$0xff]
        %v346 = vld [vmem:[%s270 + $0x1b8] sm:$0xff]
        %v347 = vld [vmem:[%s270 + $0x1c0] sm:$0xff]
        %v348 = vld [vmem:[%s270 + $0x1c8] sm:$0xff]
        %v349 = vld [vmem:[%s270 + $0x1d0] sm:$0xff]
        %v350 = vld [vmem:[%s270 + $0x1d8] sm:$0xff]
        %v351 = vld [vmem:[%s270 + $0x1e0] sm:$0xff]
        %v352 = vld [vmem:[%s270 + $0x1e8] sm:$0xff]
        %v353 = vld [vmem:[%s270 + $0x1f0] sm:$0xff]
        %v354 = vld [vmem:[%s270 + $0x1f8] sm:$0xff]
        %v355 = vmax.f32 %v291, 0.0
        %v356 = vmax.f32 %v292, 0.0
        %v357 = vmax.f32 %v293, 0.0
        %v358 = vmax.f32 %v294, 0.0
        %v359 = vmax.f32 %v295, 0.0
        %v360 = vmax.f32 %v296, 0.0
        %v361 = vmax.f32 %v297, 0.0
        %v362 = vmax.f32 %v298, 0.0
        %v363 = vmax.f32 %v299, 0.0
        %v364 = vmax.f32 %v300, 0.0
        %v365 = vmax.f32 %v301, 0.0
        %v366 = vmax.f32 %v302, 0.0
        %v367 = vmax.f32 %v303, 0.0
        %v368 = vmax.f32 %v304, 0.0
        %v369 = vmax.f32 %v305, 0.0
        %v370 = vmax.f32 %v306, 0.0
        %v371 = vmax.f32 %v307, 0.0
        %v372 = vmax.f32 %v308, 0.0
        %v373 = vmax.f32 %v309, 0.0
        %v374 = vmax.f32 %v310, 0.0
        %v375 = vmax.f32 %v311, 0.0
        %v376 = vmax.f32 %v312, 0.0
        %v377 = vmax.f32 %v313, 0.0
        %v378 = vmax.f32 %v314, 0.0
        %v379 = vmax.f32 %v315, 0.0
        %v380 = vmax.f32 %v316, 0.0
        %v381 = vmax.f32 %v317, 0.0
        %v382 = vmax.f32 %v318, 0.0
        %v383 = vmax.f32 %v319, 0.0
        %v384 = vmax.f32 %v320, 0.0
        %v385 = vmax.f32 %v321, 0.0
        %v386 = vmax.f32 %v322, 0.0
        %v387 = vmax.f32 %v323, 0.0
        %v388 = vmax.f32 %v324, 0.0
        %v389 = vmax.f32 %v325, 0.0
        %v390 = vmax.f32 %v326, 0.0
        %v391 = vmax.f32 %v327, 0.0
        %v392 = vmax.f32 %v328, 0.0
        %v393 = vmax.f32 %v329, 0.0
        %v394 = vmax.f32 %v330, 0.0
        %v395 = vmax.f32 %v331, 0.0
        %v396 = vmax.f32 %v332, 0.0
        %v397 = vmax.f32 %v333, 0.0
        %v398 = vmax.f32 %v334, 0.0
        %v399 = vmax.f32 %v335, 0.0
        %v400 = vmax.f32 %v336, 0.0
        %v401 = vmax.f32 %v337, 0.0
        %v402 = vmax.f32 %v338, 0.0
        %v403 = vmax.f32 %v339, 0.0
        %v404 = vmax.f32 %v340, 0.0
        %v405 = vmax.f32 %v341, 0.0
        %v406 = vmax.f32 %v342, 0.0
        %v407 = vmax.f32 %v343, 0.0
        %v408 = vmax.f32 %v344, 0.0
        %v409 = vmax.f32 %v345, 0.0
        %v410 = vmax.f32 %v346, 0.0
        %v411 = vmax.f32 %v347, 0.0
        %v412 = vmax.f32 %v348, 0.0
        %v413 = vmax.f32 %v349, 0.0
        %v414 = vmax.f32 %v350, 0.0
        %v415 = vmax.f32 %v351, 0.0
        %v416 = vmax.f32 %v352, 0.0
        %v417 = vmax.f32 %v353, 0.0
        %v418 = vmax.f32 %v354, 0.0
        %v419 = vmin.f32 %v355, 1.0
        %v420 = vmin.f32 %v356, 1.0
        %v421 = vmin.f32 %v357, 1.0
        %v422 = vmin.f32 %v358, 1.0
        %v423 = vmin.f32 %v359, 1.0
        %v424 = vmin.f32 %v360, 1.0
        %v425 = vmin.f32 %v361, 1.0
        %v426 = vmin.f32 %v362, 1.0
        %v427 = vmin.f32 %v363, 1.0
        %v428 = vmin.f32 %v364, 1.0
        %v429 = vmin.f32 %v365, 1.0
        %v430 = vmin.f32 %v366, 1.0
        %v431 = vmin.f32 %v367, 1.0
        %v432 = vmin.f32 %v368, 1.0
        %v433 = vmin.f32 %v369, 1.0
        %v434 = vmin.f32 %v370, 1.0
        %v435 = vmin.f32 %v371, 1.0
        %v436 = vmin.f32 %v372, 1.0
        %v437 = vmin.f32 %v373, 1.0
        %v438 = vmin.f32 %v374, 1.0
        %v439 = vmin.f32 %v375, 1.0
        %v440 = vmin.f32 %v376, 1.0
        %v441 = vmin.f32 %v377, 1.0
        %v442 = vmin.f32 %v378, 1.0
        %v443 = vmin.f32 %v379, 1.0
        %v444 = vmin.f32 %v380, 1.0
        %v445 = vmin.f32 %v381, 1.0
        %v446 = vmin.f32 %v382, 1.0
        %v447 = vmin.f32 %v383, 1.0
        %v448 = vmin.f32 %v384, 1.0
        %v449 = vmin.f32 %v385, 1.0
        %v450 = vmin.f32 %v386, 1.0
        %v451 = vmin.f32 %v387, 1.0
        %v452 = vmin.f32 %v388, 1.0
        %v453 = vmin.f32 %v389, 1.0
        %v454 = vmin.f32 %v390, 1.0
        %v455 = vmin.f32 %v391, 1.0
        %v456 = vmin.f32 %v392, 1.0
        %v457 = vmin.f32 %v393, 1.0
        %v458 = vmin.f32 %v394, 1.0
        %v459 = vmin.f32 %v395, 1.0
        %v460 = vmin.f32 %v396, 1.0
        %v461 = vmin.f32 %v397, 1.0
        %v462 = vmin.f32 %v398, 1.0
        %v463 = vmin.f32 %v399, 1.0
        %v464 = vmin.f32 %v400, 1.0
        %v465 = vmin.f32 %v401, 1.0
        %v466 = vmin.f32 %v402, 1.0
        %v467 = vmin.f32 %v403, 1.0
        %v468 = vmin.f32 %v404, 1.0
        %v469 = vmin.f32 %v405, 1.0
        %v470 = vmin.f32 %v406, 1.0
        %v471 = vmin.f32 %v407, 1.0
        %v472 = vmin.f32 %v408, 1.0
        %v473 = vmin.f32 %v409, 1.0
        %v474 = vmin.f32 %v410, 1.0
        %v475 = vmin.f32 %v411, 1.0
        %v476 = vmin.f32 %v412, 1.0
        %v477 = vmin.f32 %v413, 1.0
        %v478 = vmin.f32 %v414, 1.0
        %v479 = vmin.f32 %v415, 1.0
        %v480 = vmin.f32 %v416, 1.0
        %v481 = vmin.f32 %v417, 1.0
        %v482 = vmin.f32 %v418, 1.0
        %v483 = vld [vmem:[%s276] sm:$0xff]
        %v484 = vld [vmem:[%s276 + $0x8] sm:$0xff]
        %v485 = vld [vmem:[%s276 + $0x10] sm:$0xff]
        %v486 = vld [vmem:[%s276 + $0x18] sm:$0xff]
        %v487 = vld [vmem:[%s276 + $0x20] sm:$0xff]
        %v488 = vld [vmem:[%s276 + $0x28] sm:$0xff]
        %v489 = vld [vmem:[%s276 + $0x30] sm:$0xff]
        %v490 = vld [vmem:[%s276 + $0x38] sm:$0xff]
        %v491 = vld [vmem:[%s276 + $0x40] sm:$0xff]
        %v492 = vld [vmem:[%s276 + $0x48] sm:$0xff]
        %v493 = vld [vmem:[%s276 + $0x50] sm:$0xff]
        %v494 = vld [vmem:[%s276 + $0x58] sm:$0xff]
        %v495 = vld [vmem:[%s276 + $0x60] sm:$0xff]
        %v496 = vld [vmem:[%s276 + $0x68] sm:$0xff]
        %v497 = vld [vmem:[%s276 + $0x70] sm:$0xff]
        %v498 = vld [vmem:[%s276 + $0x78] sm:$0xff]
        %v499 = vld [vmem:[%s276 + $0x80] sm:$0xff]
        %v500 = vld [vmem:[%s276 + $0x88] sm:$0xff]
        %v501 = vld [vmem:[%s276 + $0x90] sm:$0xff]
        %v502 = vld [vmem:[%s276 + $0x98] sm:$0xff]
        %v503 = vld [vmem:[%s276 + $0xa0] sm:$0xff]
        %v504 = vld [vmem:[%s276 + $0xa8] sm:$0xff]
        %v505 = vld [vmem:[%s276 + $0xb0] sm:$0xff]
        %v506 = vld [vmem:[%s276 + $0xb8] sm:$0xff]
        %v507 = vld [vmem:[%s276 + $0xc0] sm:$0xff]
        %v508 = vld [vmem:[%s276 + $0xc8] sm:$0xff]
        %v509 = vld [vmem:[%s276 + $0xd0] sm:$0xff]
        %v510 = vld [vmem:[%s276 + $0xd8] sm:$0xff]
        %v511 = vld [vmem:[%s276 + $0xe0] sm:$0xff]
        %v512 = vld [vmem:[%s276 + $0xe8] sm:$0xff]
        %v513 = vld [vmem:[%s276 + $0xf0] sm:$0xff]
        %v514 = vld [vmem:[%s276 + $0xf8] sm:$0xff]
        %v515 = vld [vmem:[%s276 + $0x100] sm:$0xff]
        %v516 = vld [vmem:[%s276 + $0x108] sm:$0xff]
        %v517 = vld [vmem:[%s276 + $0x110] sm:$0xff]
        %v518 = vld [vmem:[%s276 + $0x118] sm:$0xff]
        %v519 = vld [vmem:[%s276 + $0x120] sm:$0xff]
        %v520 = vld [vmem:[%s276 + $0x128] sm:$0xff]
        %v521 = vld [vmem:[%s276 + $0x130] sm:$0xff]
        %v522 = vld [vmem:[%s276 + $0x138] sm:$0xff]
        %v523 = vld [vmem:[%s276 + $0x140] sm:$0xff]
        %v524 = vld [vmem:[%s276 + $0x148] sm:$0xff]
        %v525 = vld [vmem:[%s276 + $0x150] sm:$0xff]
        %v526 = vld [vmem:[%s276 + $0x158] sm:$0xff]
        %v527 = vld [vmem:[%s276 + $0x160] sm:$0xff]
        %v528 = vld [vmem:[%s276 + $0x168] sm:$0xff]
        %v529 = vld [vmem:[%s276 + $0x170] sm:$0xff]
        %v530 = vld [vmem:[%s276 + $0x178] sm:$0xff]
        %v531 = vld [vmem:[%s276 + $0x180] sm:$0xff]
        %v532 = vld [vmem:[%s276 + $0x188] sm:$0xff]
        %v533 = vld [vmem:[%s276 + $0x190] sm:$0xff]
        %v534 = vld [vmem:[%s276 + $0x198] sm:$0xff]
        %v535 = vld [vmem:[%s276 + $0x1a0] sm:$0xff]
        %v536 = vld [vmem:[%s276 + $0x1a8] sm:$0xff]
        %v537 = vld [vmem:[%s276 + $0x1b0] sm:$0xff]
        %v538 = vld [vmem:[%s276 + $0x1b8] sm:$0xff]
        %v539 = vld [vmem:[%s276 + $0x1c0] sm:$0xff]
        %v540 = vld [vmem:[%s276 + $0x1c8] sm:$0xff]
        %v541 = vld [vmem:[%s276 + $0x1d0] sm:$0xff]
        %v542 = vld [vmem:[%s276 + $0x1d8] sm:$0xff]
        %v543 = vld [vmem:[%s276 + $0x1e0] sm:$0xff]
        %v544 = vld [vmem:[%s276 + $0x1e8] sm:$0xff]
        %v545 = vld [vmem:[%s276 + $0x1f0] sm:$0xff]
        %v546 = vld [vmem:[%s276 + $0x1f8] sm:$0xff]
        %vm547 = vcmp.lt.f32.partialorder %v483, %v419
        %vm548 = vcmp.lt.f32.partialorder %v484, %v420
        %vm549 = vcmp.lt.f32.partialorder %v485, %v421
        %vm550 = vcmp.lt.f32.partialorder %v486, %v422
        %vm551 = vcmp.lt.f32.partialorder %v487, %v423
        %vm552 = vcmp.lt.f32.partialorder %v488, %v424
        %vm553 = vcmp.lt.f32.partialorder %v489, %v425
        %vm554 = vcmp.lt.f32.partialorder %v490, %v426
        %vm555 = vcmp.lt.f32.partialorder %v491, %v427
        %vm556 = vcmp.lt.f32.partialorder %v492, %v428
        %vm557 = vcmp.lt.f32.partialorder %v493, %v429
        %vm558 = vcmp.lt.f32.partialorder %v494, %v430
        %vm559 = vcmp.lt.f32.partialorder %v495, %v431
        %vm560 = vcmp.lt.f32.partialorder %v496, %v432
        %vm561 = vcmp.lt.f32.partialorder %v497, %v433
        %vm562 = vcmp.lt.f32.partialorder %v498, %v434
        %vm563 = vcmp.lt.f32.partialorder %v499, %v435
        %vm564 = vcmp.lt.f32.partialorder %v500, %v436
        %vm565 = vcmp.lt.f32.partialorder %v501, %v437
        %vm566 = vcmp.lt.f32.partialorder %v502, %v438
        %vm567 = vcmp.lt.f32.partialorder %v503, %v439
        %vm568 = vcmp.lt.f32.partialorder %v504, %v440
        %vm569 = vcmp.lt.f32.partialorder %v505, %v441
        %vm570 = vcmp.lt.f32.partialorder %v506, %v442
        %vm571 = vcmp.lt.f32.partialorder %v507, %v443
        %vm572 = vcmp.lt.f32.partialorder %v508, %v444
        %vm573 = vcmp.lt.f32.partialorder %v509, %v445
        %vm574 = vcmp.lt.f32.partialorder %v510, %v446
        %vm575 = vcmp.lt.f32.partialorder %v511, %v447
        %vm576 = vcmp.lt.f32.partialorder %v512, %v448
        %vm577 = vcmp.lt.f32.partialorder %v513, %v449
        %vm578 = vcmp.lt.f32.partialorder %v514, %v450
        %vm579 = vcmp.lt.f32.partialorder %v515, %v451
        %vm580 = vcmp.lt.f32.partialorder %v516, %v452
        %vm581 = vcmp.lt.f32.partialorder %v517, %v453
        %vm582 = vcmp.lt.f32.partialorder %v518, %v454
        %vm583 = vcmp.lt.f32.partialorder %v519, %v455
        %vm584 = vcmp.lt.f32.partialorder %v520, %v456
        %vm585 = vcmp.lt.f32.partialorder %v521, %v457
        %vm586 = vcmp.lt.f32.partialorder %v522, %v458
        %vm587 = vcmp.lt.f32.partialorder %v523, %v459
        %vm588 = vcmp.lt.f32.partialorder %v524, %v460
        %vm589 = vcmp.lt.f32.partialorder %v525, %v461
        %vm590 = vcmp.lt.f32.partialorder %v526, %v462
        %vm591 = vcmp.lt.f32.partialorder %v527, %v463
        %vm592 = vcmp.lt.f32.partialorder %v528, %v464
        %vm593 = vcmp.lt.f32.partialorder %v529, %v465
        %vm594 = vcmp.lt.f32.partialorder %v530, %v466
        %vm595 = vcmp.lt.f32.partialorder %v531, %v467
        %vm596 = vcmp.lt.f32.partialorder %v532, %v468
        %vm597 = vcmp.lt.f32.partialorder %v533, %v469
        %vm598 = vcmp.lt.f32.partialorder %v534, %v470
        %vm599 = vcmp.lt.f32.partialorder %v535, %v471
        %vm600 = vcmp.lt.f32.partialorder %v536, %v472
        %vm601 = vcmp.lt.f32.partialorder %v537, %v473
        %vm602 = vcmp.lt.f32.partialorder %v538, %v474
        %vm603 = vcmp.lt.f32.partialorder %v539, %v475
        %vm604 = vcmp.lt.f32.partialorder %v540, %v476
        %vm605 = vcmp.lt.f32.partialorder %v541, %v477
        %vm606 = vcmp.lt.f32.partialorder %v542, %v478
        %vm607 = vcmp.lt.f32.partialorder %v543, %v479
        %vm608 = vcmp.lt.f32.partialorder %v544, %v480
        %vm609 = vcmp.lt.f32.partialorder %v545, %v481
        %vm610 = vcmp.lt.f32.partialorder %v546, %v482
        %v611 = vsel %vm547, 1, 0
        %v612 = vsel %vm548, 1, 0
        %v613 = vsel %vm549, 1, 0
        %v614 = vsel %vm550, 1, 0
        %v615 = vsel %vm551, 1, 0
        %v616 = vsel %vm552, 1, 0
        %v617 = vsel %vm553, 1, 0
        %v618 = vsel %vm554, 1, 0
        %v619 = vsel %vm555, 1, 0
        %v620 = vsel %vm556, 1, 0
        %v621 = vsel %vm557, 1, 0
        %v622 = vsel %vm558, 1, 0
        %v623 = vsel %vm559, 1, 0
        %v624 = vsel %vm560, 1, 0
        %v625 = vsel %vm561, 1, 0
        %v626 = vsel %vm562, 1, 0
        %v627 = vsel %vm563, 1, 0
        %v628 = vsel %vm564, 1, 0
        %v629 = vsel %vm565, 1, 0
        %v630 = vsel %vm566, 1, 0
        %v631 = vsel %vm567, 1, 0
        %v632 = vsel %vm568, 1, 0
        %v633 = vsel %vm569, 1, 0
        %v634 = vsel %vm570, 1, 0
        %v635 = vsel %vm571, 1, 0
        %v636 = vsel %vm572, 1, 0
        %v637 = vsel %vm573, 1, 0
        %v638 = vsel %vm574, 1, 0
        %v639 = vsel %vm575, 1, 0
        %v640 = vsel %vm576, 1, 0
        %v641 = vsel %vm577, 1, 0
        %v642 = vsel %vm578, 1, 0
        %v643 = vsel %vm579, 1, 0
        %v644 = vsel %vm580, 1, 0
        %v645 = vsel %vm581, 1, 0
        %v646 = vsel %vm582, 1, 0
        %v647 = vsel %vm583, 1, 0
        %v648 = vsel %vm584, 1, 0
        %v649 = vsel %vm585, 1, 0
        %v650 = vsel %vm586, 1, 0
        %v651 = vsel %vm587, 1, 0
        %v652 = vsel %vm588, 1, 0
        %v653 = vsel %vm589, 1, 0
        %v654 = vsel %vm590, 1, 0
        %v655 = vsel %vm591, 1, 0
        %v656 = vsel %vm592, 1, 0
        %v657 = vsel %vm593, 1, 0
        %v658 = vsel %vm594, 1, 0
        %v659 = vsel %vm595, 1, 0
        %v660 = vsel %vm596, 1, 0
        %v661 = vsel %vm597, 1, 0
        %v662 = vsel %vm598, 1, 0
        %v663 = vsel %vm599, 1, 0
        %v664 = vsel %vm600, 1, 0
        %v665 = vsel %vm601, 1, 0
        %v666 = vsel %vm602, 1, 0
        %v667 = vsel %vm603, 1, 0
        %v668 = vsel %vm604, 1, 0
        %v669 = vsel %vm605, 1, 0
        %v670 = vsel %vm606, 1, 0
        %v671 = vsel %vm607, 1, 0
        %v672 = vsel %vm608, 1, 0
        %v673 = vsel %vm609, 1, 0
        %v674 = vsel %vm610, 1, 0
        %v675 = vcvt.s32.f32 %v611
        %v676 = vcvt.s32.f32 %v612
        %v677 = vcvt.s32.f32 %v613
        %v678 = vcvt.s32.f32 %v614
        %v679 = vcvt.s32.f32 %v615
        %v680 = vcvt.s32.f32 %v616
        %v681 = vcvt.s32.f32 %v617
        %v682 = vcvt.s32.f32 %v618
        %v683 = vcvt.s32.f32 %v619
        %v684 = vcvt.s32.f32 %v620
        %v685 = vcvt.s32.f32 %v621
        %v686 = vcvt.s32.f32 %v622
        %v687 = vcvt.s32.f32 %v623
        %v688 = vcvt.s32.f32 %v624
        %v689 = vcvt.s32.f32 %v625
        %v690 = vcvt.s32.f32 %v626
        %v691 = vcvt.s32.f32 %v627
        %v692 = vcvt.s32.f32 %v628
        %v693 = vcvt.s32.f32 %v629
        %v694 = vcvt.s32.f32 %v630
        %v695 = vcvt.s32.f32 %v631
        %v696 = vcvt.s32.f32 %v632
        %v697 = vcvt.s32.f32 %v633
        %v698 = vcvt.s32.f32 %v634
        %v699 = vcvt.s32.f32 %v635
        %v700 = vcvt.s32.f32 %v636
        %v701 = vcvt.s32.f32 %v637
        %v702 = vcvt.s32.f32 %v638
        %v703 = vcvt.s32.f32 %v639
        %v704 = vcvt.s32.f32 %v640
        %v705 = vcvt.s32.f32 %v641
        %v706 = vcvt.s32.f32 %v642
        %v707 = vcvt.s32.f32 %v643
        %v708 = vcvt.s32.f32 %v644
        %v709 = vcvt.s32.f32 %v645
        %v710 = vcvt.s32.f32 %v646
        %v711 = vcvt.s32.f32 %v647
        %v712 = vcvt.s32.f32 %v648
        %v713 = vcvt.s32.f32 %v649
        %v714 = vcvt.s32.f32 %v650
        %v715 = vcvt.s32.f32 %v651
        %v716 = vcvt.s32.f32 %v652
        %v717 = vcvt.s32.f32 %v653
        %v718 = vcvt.s32.f32 %v654
        %v719 = vcvt.s32.f32 %v655
        %v720 = vcvt.s32.f32 %v656
        %v721 = vcvt.s32.f32 %v657
        %v722 = vcvt.s32.f32 %v658
        %v723 = vcvt.s32.f32 %v659
        %v724 = vcvt.s32.f32 %v660
        %v725 = vcvt.s32.f32 %v661
        %v726 = vcvt.s32.f32 %v662
        %v727 = vcvt.s32.f32 %v663
        %v728 = vcvt.s32.f32 %v664
        %v729 = vcvt.s32.f32 %v665
        %v730 = vcvt.s32.f32 %v666
        %v731 = vcvt.s32.f32 %v667
        %v732 = vcvt.s32.f32 %v668
        %v733 = vcvt.s32.f32 %v669
        %v734 = vcvt.s32.f32 %v670
        %v735 = vcvt.s32.f32 %v671
        %v736 = vcvt.s32.f32 %v672
        %v737 = vcvt.s32.f32 %v673
        %v738 = vcvt.s32.f32 %v674
        %v739 = vpack.c.bf16 %v675, %v675
        %v740 = vpack.c.bf16 %v676, %v676
        %v741 = vpack.c.bf16 %v677, %v677
        %v742 = vpack.c.bf16 %v678, %v678
        %v743 = vpack.c.bf16 %v679, %v679
        %v744 = vpack.c.bf16 %v680, %v680
        %v745 = vpack.c.bf16 %v681, %v681
        %v746 = vpack.c.bf16 %v682, %v682
        %v747 = vpack.c.bf16 %v683, %v683
        %v748 = vpack.c.bf16 %v684, %v684
        %v749 = vpack.c.bf16 %v685, %v685
        %v750 = vpack.c.bf16 %v686, %v686
        %v751 = vpack.c.bf16 %v687, %v687
        %v752 = vpack.c.bf16 %v688, %v688
        %v753 = vpack.c.bf16 %v689, %v689
        %v754 = vpack.c.bf16 %v690, %v690
        %v755 = vpack.c.bf16 %v691, %v691
        %v756 = vpack.c.bf16 %v692, %v692
        %v757 = vpack.c.bf16 %v693, %v693
        %v758 = vpack.c.bf16 %v694, %v694
        %v759 = vpack.c.bf16 %v695, %v695
        %v760 = vpack.c.bf16 %v696, %v696
        %v761 = vpack.c.bf16 %v697, %v697
        %v762 = vpack.c.bf16 %v698, %v698
        %v763 = vpack.c.bf16 %v699, %v699
        %v764 = vpack.c.bf16 %v700, %v700
        %v765 = vpack.c.bf16 %v701, %v701
        %v766 = vpack.c.bf16 %v702, %v702
        %v767 = vpack.c.bf16 %v703, %v703
        %v768 = vpack.c.bf16 %v704, %v704
        %v769 = vpack.c.bf16 %v705, %v705
        %v770 = vpack.c.bf16 %v706, %v706
        %v771 = vpack.c.bf16 %v707, %v707
        %v772 = vpack.c.bf16 %v708, %v708
        %v773 = vpack.c.bf16 %v709, %v709
        %v774 = vpack.c.bf16 %v710, %v710
        %v775 = vpack.c.bf16 %v711, %v711
        %v776 = vpack.c.bf16 %v712, %v712
        %v777 = vpack.c.bf16 %v713, %v713
        %v778 = vpack.c.bf16 %v714, %v714
        %v779 = vpack.c.bf16 %v715, %v715
        %v780 = vpack.c.bf16 %v716, %v716
        %v781 = vpack.c.bf16 %v717, %v717
        %v782 = vpack.c.bf16 %v718, %v718
        %v783 = vpack.c.bf16 %v719, %v719
        %v784 = vpack.c.bf16 %v720, %v720
        %v785 = vpack.c.bf16 %v721, %v721
        %v786 = vpack.c.bf16 %v722, %v722
        %v787 = vpack.c.bf16 %v723, %v723
        %v788 = vpack.c.bf16 %v724, %v724
        %v789 = vpack.c.bf16 %v725, %v725
        %v790 = vpack.c.bf16 %v726, %v726
        %v791 = vpack.c.bf16 %v727, %v727
        %v792 = vpack.c.bf16 %v728, %v728
        %v793 = vpack.c.bf16 %v729, %v729
        %v794 = vpack.c.bf16 %v730, %v730
        %v795 = vpack.c.bf16 %v731, %v731
        %v796 = vpack.c.bf16 %v732, %v732
        %v797 = vpack.c.bf16 %v733, %v733
        %v798 = vpack.c.bf16 %v734, %v734
        %v799 = vpack.c.bf16 %v735, %v735
        %v800 = vpack.c.bf16 %v736, %v736
        %v801 = vpack.c.bf16 %v737, %v737
        %v802 = vpack.c.bf16 %v738, %v738
        %v803 = vld [vmem:[#allocation2] sm:$0xff]
        %v804 = vld [vmem:[%s282] sm:$0xf]
        %v805 = vld [vmem:[%s282 + $0x4] sm:$0xf]
        %v806 = vld [vmem:[%s282 + $0x8] sm:$0xf]
        %v807 = vld [vmem:[%s282 + $0xc] sm:$0xf]
        %v808 = vld [vmem:[%s282 + $0x10] sm:$0xf]
        %v809 = vld [vmem:[%s282 + $0x14] sm:$0xf]
        %v810 = vld [vmem:[%s282 + $0x18] sm:$0xf]
        %v811 = vld [vmem:[%s282 + $0x1c] sm:$0xf]
        %v812 = vld [vmem:[%s282 + $0x20] sm:$0xf]
        %v813 = vld [vmem:[%s282 + $0x24] sm:$0xf]
        %v814 = vld [vmem:[%s282 + $0x28] sm:$0xf]
        %v815 = vld [vmem:[%s282 + $0x2c] sm:$0xf]
        %v816 = vld [vmem:[%s282 + $0x30] sm:$0xf]
        %v817 = vld [vmem:[%s282 + $0x34] sm:$0xf]
        %v818 = vld [vmem:[%s282 + $0x38] sm:$0xf]
        %v819 = vld [vmem:[%s282 + $0x3c] sm:$0xf]
        %v820 = vld [vmem:[%s282 + $0x40] sm:$0xf]
        %v821 = vld [vmem:[%s282 + $0x44] sm:$0xf]
        %v822 = vld [vmem:[%s282 + $0x48] sm:$0xf]
        %v823 = vld [vmem:[%s282 + $0x4c] sm:$0xf]
        %v824 = vld [vmem:[%s282 + $0x50] sm:$0xf]
        %v825 = vld [vmem:[%s282 + $0x54] sm:$0xf]
        %v826 = vld [vmem:[%s282 + $0x58] sm:$0xf]
        %v827 = vld [vmem:[%s282 + $0x5c] sm:$0xf]
        %v828 = vld [vmem:[%s282 + $0x60] sm:$0xf]
        %v829 = vld [vmem:[%s282 + $0x64] sm:$0xf]
        %v830 = vld [vmem:[%s282 + $0x68] sm:$0xf]
        %v831 = vld [vmem:[%s282 + $0x6c] sm:$0xf]
        %v832 = vld [vmem:[%s282 + $0x70] sm:$0xf]
        %v833 = vld [vmem:[%s282 + $0x74] sm:$0xf]
        %v834 = vld [vmem:[%s282 + $0x78] sm:$0xf]
        %v835 = vld [vmem:[%s282 + $0x7c] sm:$0xf]
        %v836 = vld [vmem:[%s282 + $0x80] sm:$0xf]
        %v837 = vld [vmem:[%s282 + $0x84] sm:$0xf]
        %v838 = vld [vmem:[%s282 + $0x88] sm:$0xf]
        %v839 = vld [vmem:[%s282 + $0x8c] sm:$0xf]
        %v840 = vld [vmem:[%s282 + $0x90] sm:$0xf]
        %v841 = vld [vmem:[%s282 + $0x94] sm:$0xf]
        %v842 = vld [vmem:[%s282 + $0x98] sm:$0xf]
        %v843 = vld [vmem:[%s282 + $0x9c] sm:$0xf]
        %v844 = vld [vmem:[%s282 + $0xa0] sm:$0xf]
        %v845 = vld [vmem:[%s282 + $0xa4] sm:$0xf]
        %v846 = vld [vmem:[%s282 + $0xa8] sm:$0xf]
        %v847 = vld [vmem:[%s282 + $0xac] sm:$0xf]
        %v848 = vld [vmem:[%s282 + $0xb0] sm:$0xf]
        %v849 = vld [vmem:[%s282 + $0xb4] sm:$0xf]
        %v850 = vld [vmem:[%s282 + $0xb8] sm:$0xf]
        %v851 = vld [vmem:[%s282 + $0xbc] sm:$0xf]
        %v852 = vld [vmem:[%s282 + $0xc0] sm:$0xf]
        %v853 = vld [vmem:[%s282 + $0xc4] sm:$0xf]
        %v854 = vld [vmem:[%s282 + $0xc8] sm:$0xf]
        %v855 = vld [vmem:[%s282 + $0xcc] sm:$0xf]
        %v856 = vld [vmem:[%s282 + $0xd0] sm:$0xf]
        %v857 = vld [vmem:[%s282 + $0xd4] sm:$0xf]
        %v858 = vld [vmem:[%s282 + $0xd8] sm:$0xf]
        %v859 = vld [vmem:[%s282 + $0xdc] sm:$0xf]
        %v860 = vld [vmem:[%s282 + $0xe0] sm:$0xf]
        %v861 = vld [vmem:[%s282 + $0xe4] sm:$0xf]
        %v862 = vld [vmem:[%s282 + $0xe8] sm:$0xf]
        %v863 = vld [vmem:[%s282 + $0xec] sm:$0xf]
        %v864 = vld [vmem:[%s282 + $0xf0] sm:$0xf]
        %v865 = vld [vmem:[%s282 + $0xf4] sm:$0xf]
        %v866 = vld [vmem:[%s282 + $0xf8] sm:$0xf]
        %v867 = vld [vmem:[%s282 + $0xfc] sm:$0xf]
        %v868 = vld [vmem:[%s282 + $0x100] sm:$0xf]
        %v869 = vld [vmem:[%s282 + $0x104] sm:$0xf]
        %v870 = vld [vmem:[%s282 + $0x108] sm:$0xf]
        %v871 = vld [vmem:[%s282 + $0x10c] sm:$0xf]
        %v872 = vld [vmem:[%s282 + $0x110] sm:$0xf]
        %v873 = vld [vmem:[%s282 + $0x114] sm:$0xf]
        %v874 = vld [vmem:[%s282 + $0x118] sm:$0xf]
        %v875 = vld [vmem:[%s282 + $0x11c] sm:$0xf]
        %v876 = vld [vmem:[%s282 + $0x120] sm:$0xf]
        %v877 = vld [vmem:[%s282 + $0x124] sm:$0xf]
        %v878 = vld [vmem:[%s282 + $0x128] sm:$0xf]
        %v879 = vld [vmem:[%s282 + $0x12c] sm:$0xf]
        %v880 = vld [vmem:[%s282 + $0x130] sm:$0xf]
        %v881 = vld [vmem:[%s282 + $0x134] sm:$0xf]
        %v882 = vld [vmem:[%s282 + $0x138] sm:$0xf]
        %v883 = vld [vmem:[%s282 + $0x13c] sm:$0xf]
        %v884 = vld [vmem:[%s282 + $0x140] sm:$0xf]
        %v885 = vld [vmem:[%s282 + $0x144] sm:$0xf]
        %v886 = vld [vmem:[%s282 + $0x148] sm:$0xf]
        %v887 = vld [vmem:[%s282 + $0x14c] sm:$0xf]
        %v888 = vld [vmem:[%s282 + $0x150] sm:$0xf]
        %v889 = vld [vmem:[%s282 + $0x154] sm:$0xf]
        %v890 = vld [vmem:[%s282 + $0x158] sm:$0xf]
        %v891 = vld [vmem:[%s282 + $0x15c] sm:$0xf]
        %v892 = vld [vmem:[%s282 + $0x160] sm:$0xf]
        %v893 = vld [vmem:[%s282 + $0x164] sm:$0xf]
        %v894 = vld [vmem:[%s282 + $0x168] sm:$0xf]
        %v895 = vld [vmem:[%s282 + $0x16c] sm:$0xf]
        %v896 = vld [vmem:[%s282 + $0x170] sm:$0xf]
        %v897 = vld [vmem:[%s282 + $0x174] sm:$0xf]
        %v898 = vld [vmem:[%s282 + $0x178] sm:$0xf]
        %v899 = vld [vmem:[%s282 + $0x17c] sm:$0xf]
        %v900 = vld [vmem:[%s282 + $0x180] sm:$0xf]
        %v901 = vld [vmem:[%s282 + $0x184] sm:$0xf]
        %v902 = vld [vmem:[%s282 + $0x188] sm:$0xf]
        %v903 = vld [vmem:[%s282 + $0x18c] sm:$0xf]
        %v904 = vld [vmem:[%s282 + $0x190] sm:$0xf]
        %v905 = vld [vmem:[%s282 + $0x194] sm:$0xf]
        %v906 = vld [vmem:[%s282 + $0x198] sm:$0xf]
        %v907 = vld [vmem:[%s282 + $0x19c] sm:$0xf]
        %v908 = vld [vmem:[%s282 + $0x1a0] sm:$0xf]
        %v909 = vld [vmem:[%s282 + $0x1a4] sm:$0xf]
        %v910 = vld [vmem:[%s282 + $0x1a8] sm:$0xf]
        %v911 = vld [vmem:[%s282 + $0x1ac] sm:$0xf]
        %v912 = vld [vmem:[%s282 + $0x1b0] sm:$0xf]
        %v913 = vld [vmem:[%s282 + $0x1b4] sm:$0xf]
        %v914 = vld [vmem:[%s282 + $0x1b8] sm:$0xf]
        %v915 = vld [vmem:[%s282 + $0x1bc] sm:$0xf]
        %v916 = vld [vmem:[%s282 + $0x1c0] sm:$0xf]
        %v917 = vld [vmem:[%s282 + $0x1c4] sm:$0xf]
        %v918 = vld [vmem:[%s282 + $0x1c8] sm:$0xf]
        %v919 = vld [vmem:[%s282 + $0x1cc] sm:$0xf]
        %v920 = vld [vmem:[%s282 + $0x1d0] sm:$0xf]
        %v921 = vld [vmem:[%s282 + $0x1d4] sm:$0xf]
        %v922 = vld [vmem:[%s282 + $0x1d8] sm:$0xf]
        %v923 = vld [vmem:[%s282 + $0x1dc] sm:$0xf]
        %v924 = vld [vmem:[%s282 + $0x1e0] sm:$0xf]
        %v925 = vld [vmem:[%s282 + $0x1e4] sm:$0xf]
        %v926 = vld [vmem:[%s282 + $0x1e8] sm:$0xf]
        %v927 = vld [vmem:[%s282 + $0x1ec] sm:$0xf]
        %v928 = vld [vmem:[%s282 + $0x1f0] sm:$0xf]
        %v929 = vld [vmem:[%s282 + $0x1f4] sm:$0xf]
        %v930 = vld [vmem:[%s282 + $0x1f8] sm:$0xf]
        %v931 = vld [vmem:[%s282 + $0x1fc] sm:$0xf]
        %v932 = vld [vmem:[%s282 + $0x200] sm:$0xf]
        %v933 = vld [vmem:[%s282 + $0x204] sm:$0xf]
        %v934 = vld [vmem:[%s282 + $0x208] sm:$0xf]
        %v935 = vld [vmem:[%s282 + $0x20c] sm:$0xf]
        %v936 = vld [vmem:[%s282 + $0x210] sm:$0xf]
        %v937 = vld [vmem:[%s282 + $0x214] sm:$0xf]
        %v938 = vld [vmem:[%s282 + $0x218] sm:$0xf]
        %v939 = vld [vmem:[%s282 + $0x21c] sm:$0xf]
        %v940 = vld [vmem:[%s282 + $0x220] sm:$0xf]
        %v941 = vld [vmem:[%s282 + $0x224] sm:$0xf]
        %v942 = vld [vmem:[%s282 + $0x228] sm:$0xf]
        %v943 = vld [vmem:[%s282 + $0x22c] sm:$0xf]
        %v944 = vld [vmem:[%s282 + $0x230] sm:$0xf]
        %v945 = vld [vmem:[%s282 + $0x234] sm:$0xf]
        %v946 = vld [vmem:[%s282 + $0x238] sm:$0xf]
        %v947 = vld [vmem:[%s282 + $0x23c] sm:$0xf]
        %v948 = vld [vmem:[%s282 + $0x240] sm:$0xf]
        %v949 = vld [vmem:[%s282 + $0x244] sm:$0xf]
        %v950 = vld [vmem:[%s282 + $0x248] sm:$0xf]
        %v951 = vld [vmem:[%s282 + $0x24c] sm:$0xf]
        %v952 = vld [vmem:[%s282 + $0x250] sm:$0xf]
        %v953 = vld [vmem:[%s282 + $0x254] sm:$0xf]
        %v954 = vld [vmem:[%s282 + $0x258] sm:$0xf]
        %v955 = vld [vmem:[%s282 + $0x25c] sm:$0xf]
        %v956 = vld [vmem:[%s282 + $0x260] sm:$0xf]
        %v957 = vld [vmem:[%s282 + $0x264] sm:$0xf]
        %v958 = vld [vmem:[%s282 + $0x268] sm:$0xf]
        %v959 = vld [vmem:[%s282 + $0x26c] sm:$0xf]
        %v960 = vld [vmem:[%s282 + $0x270] sm:$0xf]
        %v961 = vld [vmem:[%s282 + $0x274] sm:$0xf]
        %v962 = vld [vmem:[%s282 + $0x278] sm:$0xf]
        %v963 = vld [vmem:[%s282 + $0x27c] sm:$0xf]
        %v964 = vld [vmem:[%s282 + $0x280] sm:$0xf]
        %v965 = vld [vmem:[%s282 + $0x284] sm:$0xf]
        %v966 = vld [vmem:[%s282 + $0x288] sm:$0xf]
        %v967 = vld [vmem:[%s282 + $0x28c] sm:$0xf]
        %v968 = vld [vmem:[%s282 + $0x290] sm:$0xf]
        %v969 = vld [vmem:[%s282 + $0x294] sm:$0xf]
        %v970 = vld [vmem:[%s282 + $0x298] sm:$0xf]
        %v971 = vld [vmem:[%s282 + $0x29c] sm:$0xf]
        %v972 = vld [vmem:[%s282 + $0x2a0] sm:$0xf]
        %v973 = vld [vmem:[%s282 + $0x2a4] sm:$0xf]
        %v974 = vld [vmem:[%s282 + $0x2a8] sm:$0xf]
        %v975 = vld [vmem:[%s282 + $0x2ac] sm:$0xf]
        %v976 = vld [vmem:[%s282 + $0x2b0] sm:$0xf]
        %v977 = vld [vmem:[%s282 + $0x2b4] sm:$0xf]
        %v978 = vld [vmem:[%s282 + $0x2b8] sm:$0xf]
        %v979 = vld [vmem:[%s282 + $0x2bc] sm:$0xf]
        %v980 = vld [vmem:[%s282 + $0x2c0] sm:$0xf]
        %v981 = vld [vmem:[%s282 + $0x2c4] sm:$0xf]
        %v982 = vld [vmem:[%s282 + $0x2c8] sm:$0xf]
        %v983 = vld [vmem:[%s282 + $0x2cc] sm:$0xf]
        %v984 = vld [vmem:[%s282 + $0x2d0] sm:$0xf]
        %v985 = vld [vmem:[%s282 + $0x2d4] sm:$0xf]
        %v986 = vld [vmem:[%s282 + $0x2d8] sm:$0xf]
        %v987 = vld [vmem:[%s282 + $0x2dc] sm:$0xf]
        %v988 = vld [vmem:[%s282 + $0x2e0] sm:$0xf]
        %v989 = vld [vmem:[%s282 + $0x2e4] sm:$0xf]
        %v990 = vld [vmem:[%s282 + $0x2e8] sm:$0xf]
        %v991 = vld [vmem:[%s282 + $0x2ec] sm:$0xf]
        %v992 = vld [vmem:[%s282 + $0x2f0] sm:$0xf]
        %v993 = vld [vmem:[%s282 + $0x2f4] sm:$0xf]
        %v994 = vld [vmem:[%s282 + $0x2f8] sm:$0xf]
        %v995 = vld [vmem:[%s282 + $0x2fc] sm:$0xf]
        %v996 = vld [vmem:[%s282 + $0x300] sm:$0xf]
        %v997 = vld [vmem:[%s282 + $0x304] sm:$0xf]
        %v998 = vld [vmem:[%s282 + $0x308] sm:$0xf]
        %v999 = vld [vmem:[%s282 + $0x30c] sm:$0xf]
        %v1000 = vld [vmem:[%s282 + $0x310] sm:$0xf]
        %v1001 = vld [vmem:[%s282 + $0x314] sm:$0xf]
        %v1002 = vld [vmem:[%s282 + $0x318] sm:$0xf]
        %v1003 = vld [vmem:[%s282 + $0x31c] sm:$0xf]
        %v1004 = vld [vmem:[%s282 + $0x320] sm:$0xf]
        %v1005 = vld [vmem:[%s282 + $0x324] sm:$0xf]
        %v1006 = vld [vmem:[%s282 + $0x328] sm:$0xf]
        %v1007 = vld [vmem:[%s282 + $0x32c] sm:$0xf]
        %v1008 = vld [vmem:[%s282 + $0x330] sm:$0xf]
        %v1009 = vld [vmem:[%s282 + $0x334] sm:$0xf]
        %v1010 = vld [vmem:[%s282 + $0x338] sm:$0xf]
        %v1011 = vld [vmem:[%s282 + $0x33c] sm:$0xf]
        %v1012 = vld [vmem:[%s282 + $0x340] sm:$0xf]
        %v1013 = vld [vmem:[%s282 + $0x344] sm:$0xf]
        %v1014 = vld [vmem:[%s282 + $0x348] sm:$0xf]
        %v1015 = vld [vmem:[%s282 + $0x34c] sm:$0xf]
        %v1016 = vld [vmem:[%s282 + $0x350] sm:$0xf]
        %v1017 = vld [vmem:[%s282 + $0x354] sm:$0xf]
        %v1018 = vld [vmem:[%s282 + $0x358] sm:$0xf]
        %v1019 = vld [vmem:[%s282 + $0x35c] sm:$0xf]
        %v1020 = vld [vmem:[%s282 + $0x360] sm:$0xf]
        %v1021 = vld [vmem:[%s282 + $0x364] sm:$0xf]
        %v1022 = vld [vmem:[%s282 + $0x368] sm:$0xf]
        %v1023 = vld [vmem:[%s282 + $0x36c] sm:$0xf]
        %v1024 = vld [vmem:[%s282 + $0x370] sm:$0xf]
        %v1025 = vld [vmem:[%s282 + $0x374] sm:$0xf]
        %v1026 = vld [vmem:[%s282 + $0x378] sm:$0xf]
        %v1027 = vld [vmem:[%s282 + $0x37c] sm:$0xf]
        %v1028 = vld [vmem:[%s282 + $0x380] sm:$0xf]
        %v1029 = vld [vmem:[%s282 + $0x384] sm:$0xf]
        %v1030 = vld [vmem:[%s282 + $0x388] sm:$0xf]
        %v1031 = vld [vmem:[%s282 + $0x38c] sm:$0xf]
        %v1032 = vld [vmem:[%s282 + $0x390] sm:$0xf]
        %v1033 = vld [vmem:[%s282 + $0x394] sm:$0xf]
        %v1034 = vld [vmem:[%s282 + $0x398] sm:$0xf]
        %v1035 = vld [vmem:[%s282 + $0x39c] sm:$0xf]
        %v1036 = vld [vmem:[%s282 + $0x3a0] sm:$0xf]
        %v1037 = vld [vmem:[%s282 + $0x3a4] sm:$0xf]
        %v1038 = vld [vmem:[%s282 + $0x3a8] sm:$0xf]
        %v1039 = vld [vmem:[%s282 + $0x3ac] sm:$0xf]
        %v1040 = vld [vmem:[%s282 + $0x3b0] sm:$0xf]
        %v1041 = vld [vmem:[%s282 + $0x3b4] sm:$0xf]
        %v1042 = vld [vmem:[%s282 + $0x3b8] sm:$0xf]
        %v1043 = vld [vmem:[%s282 + $0x3bc] sm:$0xf]
        %v1044 = vld [vmem:[%s282 + $0x3c0] sm:$0xf]
        %v1045 = vld [vmem:[%s282 + $0x3c4] sm:$0xf]
        %v1046 = vld [vmem:[%s282 + $0x3c8] sm:$0xf]
        %v1047 = vld [vmem:[%s282 + $0x3cc] sm:$0xf]
        %v1048 = vld [vmem:[%s282 + $0x3d0] sm:$0xf]
        %v1049 = vld [vmem:[%s282 + $0x3d4] sm:$0xf]
        %v1050 = vld [vmem:[%s282 + $0x3d8] sm:$0xf]
        %v1051 = vld [vmem:[%s282 + $0x3dc] sm:$0xf]
        %v1052 = vld [vmem:[%s282 + $0x3e0] sm:$0xf]
        %v1053 = vld [vmem:[%s282 + $0x3e4] sm:$0xf]
        %v1054 = vld [vmem:[%s282 + $0x3e8] sm:$0xf]
        %v1055 = vld [vmem:[%s282 + $0x3ec] sm:$0xf]
        %v1056 = vld [vmem:[%s282 + $0x3f0] sm:$0xf]
        %v1057 = vld [vmem:[%s282 + $0x3f4] sm:$0xf]
        %v1058 = vld [vmem:[%s282 + $0x3f8] sm:$0xf]
        %v1059 = vld [vmem:[%s282 + $0x3fc] sm:$0xf]
        %v1060 = vld [vmem:[%s282 + $0x400] sm:$0xf]
        %v1061 = vld [vmem:[%s282 + $0x404] sm:$0xf]
        %v1062 = vld [vmem:[%s282 + $0x408] sm:$0xf]
        %v1063 = vld [vmem:[%s282 + $0x40c] sm:$0xf]
        %v1064 = vld [vmem:[%s282 + $0x410] sm:$0xf]
        %v1065 = vld [vmem:[%s282 + $0x414] sm:$0xf]
        %v1066 = vld [vmem:[%s282 + $0x418] sm:$0xf]
        %v1067 = vld [vmem:[%s282 + $0x41c] sm:$0xf]
        %v1068 = vld [vmem:[%s282 + $0x420] sm:$0xf]
        %v1069 = vld [vmem:[%s282 + $0x424] sm:$0xf]
        %v1070 = vld [vmem:[%s282 + $0x428] sm:$0xf]
        %v1071 = vld [vmem:[%s282 + $0x42c] sm:$0xf]
        %v1072 = vld [vmem:[%s282 + $0x430] sm:$0xf]
        %v1073 = vld [vmem:[%s282 + $0x434] sm:$0xf]
        %v1074 = vld [vmem:[%s282 + $0x438] sm:$0xf]
        %v1075 = vld [vmem:[%s282 + $0x43c] sm:$0xf]
        %v1076 = vld [vmem:[%s282 + $0x440] sm:$0xf]
        %v1077 = vld [vmem:[%s282 + $0x444] sm:$0xf]
        %v1078 = vld [vmem:[%s282 + $0x448] sm:$0xf]
        %v1079 = vld [vmem:[%s282 + $0x44c] sm:$0xf]
        %v1080 = vld [vmem:[%s282 + $0x450] sm:$0xf]
        %v1081 = vld [vmem:[%s282 + $0x454] sm:$0xf]
        %v1082 = vld [vmem:[%s282 + $0x458] sm:$0xf]
        %v1083 = vld [vmem:[%s282 + $0x45c] sm:$0xf]
        %v1084 = vld [vmem:[%s282 + $0x460] sm:$0xf]
        %v1085 = vld [vmem:[%s282 + $0x464] sm:$0xf]
        %v1086 = vld [vmem:[%s282 + $0x468] sm:$0xf]
        %v1087 = vld [vmem:[%s282 + $0x46c] sm:$0xf]
        %v1088 = vld [vmem:[%s282 + $0x470] sm:$0xf]
        %v1089 = vld [vmem:[%s282 + $0x474] sm:$0xf]
        %v1090 = vld [vmem:[%s282 + $0x478] sm:$0xf]
        %v1091 = vld [vmem:[%s282 + $0x47c] sm:$0xf]
        %v1092 = vld [vmem:[%s282 + $0x480] sm:$0xf]
        %v1093 = vld [vmem:[%s282 + $0x484] sm:$0xf]
        %v1094 = vld [vmem:[%s282 + $0x488] sm:$0xf]
        %v1095 = vld [vmem:[%s282 + $0x48c] sm:$0xf]
        %v1096 = vld [vmem:[%s282 + $0x490] sm:$0xf]
        %v1097 = vld [vmem:[%s282 + $0x494] sm:$0xf]
        %v1098 = vld [vmem:[%s282 + $0x498] sm:$0xf]
        %v1099 = vld [vmem:[%s282 + $0x49c] sm:$0xf]
        %v1100 = vld [vmem:[%s282 + $0x4a0] sm:$0xf]
        %v1101 = vld [vmem:[%s282 + $0x4a4] sm:$0xf]
        %v1102 = vld [vmem:[%s282 + $0x4a8] sm:$0xf]
        %v1103 = vld [vmem:[%s282 + $0x4ac] sm:$0xf]
        %v1104 = vld [vmem:[%s282 + $0x4b0] sm:$0xf]
        %v1105 = vld [vmem:[%s282 + $0x4b4] sm:$0xf]
        %v1106 = vld [vmem:[%s282 + $0x4b8] sm:$0xf]
        %v1107 = vld [vmem:[%s282 + $0x4bc] sm:$0xf]
        %v1108 = vld [vmem:[%s282 + $0x4c0] sm:$0xf]
        %v1109 = vld [vmem:[%s282 + $0x4c4] sm:$0xf]
        %v1110 = vld [vmem:[%s282 + $0x4c8] sm:$0xf]
        %v1111 = vld [vmem:[%s282 + $0x4cc] sm:$0xf]
        %v1112 = vld [vmem:[%s282 + $0x4d0] sm:$0xf]
        %v1113 = vld [vmem:[%s282 + $0x4d4] sm:$0xf]
        %v1114 = vld [vmem:[%s282 + $0x4d8] sm:$0xf]
        %v1115 = vld [vmem:[%s282 + $0x4dc] sm:$0xf]
        %v1116 = vld [vmem:[%s282 + $0x4e0] sm:$0xf]
        %v1117 = vld [vmem:[%s282 + $0x4e4] sm:$0xf]
        %v1118 = vld [vmem:[%s282 + $0x4e8] sm:$0xf]
        %v1119 = vld [vmem:[%s282 + $0x4ec] sm:$0xf]
        %v1120 = vld [vmem:[%s282 + $0x4f0] sm:$0xf]
        %v1121 = vld [vmem:[%s282 + $0x4f4] sm:$0xf]
        %v1122 = vld [vmem:[%s282 + $0x4f8] sm:$0xf]
        %v1123 = vld [vmem:[%s282 + $0x4fc] sm:$0xf]
        %v1124 = vld [vmem:[%s282 + $0x500] sm:$0xf]
        %v1125 = vld [vmem:[%s282 + $0x504] sm:$0xf]
        %v1126 = vld [vmem:[%s282 + $0x508] sm:$0xf]
        %v1127 = vld [vmem:[%s282 + $0x50c] sm:$0xf]
        %v1128 = vld [vmem:[%s282 + $0x510] sm:$0xf]
        %v1129 = vld [vmem:[%s282 + $0x514] sm:$0xf]
        %v1130 = vld [vmem:[%s282 + $0x518] sm:$0xf]
        %v1131 = vld [vmem:[%s282 + $0x51c] sm:$0xf]
        %v1132 = vld [vmem:[%s282 + $0x520] sm:$0xf]
        %v1133 = vld [vmem:[%s282 + $0x524] sm:$0xf]
        %v1134 = vld [vmem:[%s282 + $0x528] sm:$0xf]
        %v1135 = vld [vmem:[%s282 + $0x52c] sm:$0xf]
        %v1136 = vld [vmem:[%s282 + $0x530] sm:$0xf]
        %v1137 = vld [vmem:[%s282 + $0x534] sm:$0xf]
        %v1138 = vld [vmem:[%s282 + $0x538] sm:$0xf]
        %v1139 = vld [vmem:[%s282 + $0x53c] sm:$0xf]
        %v1140 = vld [vmem:[%s282 + $0x540] sm:$0xf]
        %v1141 = vld [vmem:[%s282 + $0x544] sm:$0xf]
        %v1142 = vld [vmem:[%s282 + $0x548] sm:$0xf]
        %v1143 = vld [vmem:[%s282 + $0x54c] sm:$0xf]
        %v1144 = vld [vmem:[%s282 + $0x550] sm:$0xf]
        %v1145 = vld [vmem:[%s282 + $0x554] sm:$0xf]
        %v1146 = vld [vmem:[%s282 + $0x558] sm:$0xf]
        %v1147 = vld [vmem:[%s282 + $0x55c] sm:$0xf]
        %v1148 = vld [vmem:[%s282 + $0x560] sm:$0xf]
        %v1149 = vld [vmem:[%s282 + $0x564] sm:$0xf]
        %v1150 = vld [vmem:[%s282 + $0x568] sm:$0xf]
        %v1151 = vld [vmem:[%s282 + $0x56c] sm:$0xf]
        %v1152 = vld [vmem:[%s282 + $0x570] sm:$0xf]
        %v1153 = vld [vmem:[%s282 + $0x574] sm:$0xf]
        %v1154 = vld [vmem:[%s282 + $0x578] sm:$0xf]
        %v1155 = vld [vmem:[%s282 + $0x57c] sm:$0xf]
        %v1156 = vld [vmem:[%s282 + $0x580] sm:$0xf]
        %v1157 = vld [vmem:[%s282 + $0x584] sm:$0xf]
        %v1158 = vld [vmem:[%s282 + $0x588] sm:$0xf]
        %v1159 = vld [vmem:[%s282 + $0x58c] sm:$0xf]
        %v1160 = vld [vmem:[%s282 + $0x590] sm:$0xf]
        %v1161 = vld [vmem:[%s282 + $0x594] sm:$0xf]
        %v1162 = vld [vmem:[%s282 + $0x598] sm:$0xf]
        %v1163 = vld [vmem:[%s282 + $0x59c] sm:$0xf]
        %v1164 = vld [vmem:[%s282 + $0x5a0] sm:$0xf]
        %v1165 = vld [vmem:[%s282 + $0x5a4] sm:$0xf]
        %v1166 = vld [vmem:[%s282 + $0x5a8] sm:$0xf]
        %v1167 = vld [vmem:[%s282 + $0x5ac] sm:$0xf]
        %v1168 = vld [vmem:[%s282 + $0x5b0] sm:$0xf]
        %v1169 = vld [vmem:[%s282 + $0x5b4] sm:$0xf]
        %v1170 = vld [vmem:[%s282 + $0x5b8] sm:$0xf]
        %v1171 = vld [vmem:[%s282 + $0x5bc] sm:$0xf]
        %v1172 = vld [vmem:[%s282 + $0x5c0] sm:$0xf]
        %v1173 = vld [vmem:[%s282 + $0x5c4] sm:$0xf]
        %v1174 = vld [vmem:[%s282 + $0x5c8] sm:$0xf]
        %v1175 = vld [vmem:[%s282 + $0x5cc] sm:$0xf]
        %v1176 = vld [vmem:[%s282 + $0x5d0] sm:$0xf]
        %v1177 = vld [vmem:[%s282 + $0x5d4] sm:$0xf]
        %v1178 = vld [vmem:[%s282 + $0x5d8] sm:$0xf]
        %v1179 = vld [vmem:[%s282 + $0x5dc] sm:$0xf]
        %v1180 = vld [vmem:[%s282 + $0x5e0] sm:$0xf]
        %v1181 = vld [vmem:[%s282 + $0x5e4] sm:$0xf]
        %v1182 = vld [vmem:[%s282 + $0x5e8] sm:$0xf]
        %v1183 = vld [vmem:[%s282 + $0x5ec] sm:$0xf]
        %v1184 = vld [vmem:[%s282 + $0x5f0] sm:$0xf]
        %v1185 = vld [vmem:[%s282 + $0x5f4] sm:$0xf]
        %v1186 = vld [vmem:[%s282 + $0x5f8] sm:$0xf]
        %v1187 = vld [vmem:[%s282 + $0x5fc] sm:$0xf]
        %v1188 = vld [vmem:[%s282 + $0x600] sm:$0xf]
        %v1189 = vld [vmem:[%s282 + $0x604] sm:$0xf]
        %v1190 = vld [vmem:[%s282 + $0x608] sm:$0xf]
        %v1191 = vld [vmem:[%s282 + $0x60c] sm:$0xf]
        %v1192 = vld [vmem:[%s282 + $0x610] sm:$0xf]
        %v1193 = vld [vmem:[%s282 + $0x614] sm:$0xf]
        %v1194 = vld [vmem:[%s282 + $0x618] sm:$0xf]
        %v1195 = vld [vmem:[%s282 + $0x61c] sm:$0xf]
        %v1196 = vld [vmem:[%s282 + $0x620] sm:$0xf]
        %v1197 = vld [vmem:[%s282 + $0x624] sm:$0xf]
        %v1198 = vld [vmem:[%s282 + $0x628] sm:$0xf]
        %v1199 = vld [vmem:[%s282 + $0x62c] sm:$0xf]
        %v1200 = vld [vmem:[%s282 + $0x630] sm:$0xf]
        %v1201 = vld [vmem:[%s282 + $0x634] sm:$0xf]
        %v1202 = vld [vmem:[%s282 + $0x638] sm:$0xf]
        %v1203 = vld [vmem:[%s282 + $0x63c] sm:$0xf]
        %v1204 = vld [vmem:[%s282 + $0x640] sm:$0xf]
        %v1205 = vld [vmem:[%s282 + $0x644] sm:$0xf]
        %v1206 = vld [vmem:[%s282 + $0x648] sm:$0xf]
        %v1207 = vld [vmem:[%s282 + $0x64c] sm:$0xf]
        %v1208 = vld [vmem:[%s282 + $0x650] sm:$0xf]
        %v1209 = vld [vmem:[%s282 + $0x654] sm:$0xf]
        %v1210 = vld [vmem:[%s282 + $0x658] sm:$0xf]
        %v1211 = vld [vmem:[%s282 + $0x65c] sm:$0xf]
        %v1212 = vld [vmem:[%s282 + $0x660] sm:$0xf]
        %v1213 = vld [vmem:[%s282 + $0x664] sm:$0xf]
        %v1214 = vld [vmem:[%s282 + $0x668] sm:$0xf]
        %v1215 = vld [vmem:[%s282 + $0x66c] sm:$0xf]
        %v1216 = vld [vmem:[%s282 + $0x670] sm:$0xf]
        %v1217 = vld [vmem:[%s282 + $0x674] sm:$0xf]
        %v1218 = vld [vmem:[%s282 + $0x678] sm:$0xf]
        %v1219 = vld [vmem:[%s282 + $0x67c] sm:$0xf]
        %v1220 = vld [vmem:[%s282 + $0x680] sm:$0xf]
        %v1221 = vld [vmem:[%s282 + $0x684] sm:$0xf]
        %v1222 = vld [vmem:[%s282 + $0x688] sm:$0xf]
        %v1223 = vld [vmem:[%s282 + $0x68c] sm:$0xf]
        %v1224 = vld [vmem:[%s282 + $0x690] sm:$0xf]
        %v1225 = vld [vmem:[%s282 + $0x694] sm:$0xf]
        %v1226 = vld [vmem:[%s282 + $0x698] sm:$0xf]
        %v1227 = vld [vmem:[%s282 + $0x69c] sm:$0xf]
        %v1228 = vld [vmem:[%s282 + $0x6a0] sm:$0xf]
        %v1229 = vld [vmem:[%s282 + $0x6a4] sm:$0xf]
        %v1230 = vld [vmem:[%s282 + $0x6a8] sm:$0xf]
        %v1231 = vld [vmem:[%s282 + $0x6ac] sm:$0xf]
        %v1232 = vld [vmem:[%s282 + $0x6b0] sm:$0xf]
        %v1233 = vld [vmem:[%s282 + $0x6b4] sm:$0xf]
        %v1234 = vld [vmem:[%s282 + $0x6b8] sm:$0xf]
        %v1235 = vld [vmem:[%s282 + $0x6bc] sm:$0xf]
        %v1236 = vld [vmem:[%s282 + $0x6c0] sm:$0xf]
        %v1237 = vld [vmem:[%s282 + $0x6c4] sm:$0xf]
        %v1238 = vld [vmem:[%s282 + $0x6c8] sm:$0xf]
        %v1239 = vld [vmem:[%s282 + $0x6cc] sm:$0xf]
        %v1240 = vld [vmem:[%s282 + $0x6d0] sm:$0xf]
        %v1241 = vld [vmem:[%s282 + $0x6d4] sm:$0xf]
        %v1242 = vld [vmem:[%s282 + $0x6d8] sm:$0xf]
        %v1243 = vld [vmem:[%s282 + $0x6dc] sm:$0xf]
        %v1244 = vld [vmem:[%s282 + $0x6e0] sm:$0xf]
        %v1245 = vld [vmem:[%s282 + $0x6e4] sm:$0xf]
        %v1246 = vld [vmem:[%s282 + $0x6e8] sm:$0xf]
        %v1247 = vld [vmem:[%s282 + $0x6ec] sm:$0xf]
        %v1248 = vld [vmem:[%s282 + $0x6f0] sm:$0xf]
        %v1249 = vld [vmem:[%s282 + $0x6f4] sm:$0xf]
        %v1250 = vld [vmem:[%s282 + $0x6f8] sm:$0xf]
        %v1251 = vld [vmem:[%s282 + $0x6fc] sm:$0xf]
        %v1252 = vld [vmem:[%s282 + $0x700] sm:$0xf]
        %v1253 = vld [vmem:[%s282 + $0x704] sm:$0xf]
        %v1254 = vld [vmem:[%s282 + $0x708] sm:$0xf]
        %v1255 = vld [vmem:[%s282 + $0x70c] sm:$0xf]
        %v1256 = vld [vmem:[%s282 + $0x710] sm:$0xf]
        %v1257 = vld [vmem:[%s282 + $0x714] sm:$0xf]
        %v1258 = vld [vmem:[%s282 + $0x718] sm:$0xf]
        %v1259 = vld [vmem:[%s282 + $0x71c] sm:$0xf]
        %v1260 = vld [vmem:[%s282 + $0x720] sm:$0xf]
        %v1261 = vld [vmem:[%s282 + $0x724] sm:$0xf]
        %v1262 = vld [vmem:[%s282 + $0x728] sm:$0xf]
        %v1263 = vld [vmem:[%s282 + $0x72c] sm:$0xf]
        %v1264 = vld [vmem:[%s282 + $0x730] sm:$0xf]
        %v1265 = vld [vmem:[%s282 + $0x734] sm:$0xf]
        %v1266 = vld [vmem:[%s282 + $0x738] sm:$0xf]
        %v1267 = vld [vmem:[%s282 + $0x73c] sm:$0xf]
        %v1268 = vld [vmem:[%s282 + $0x740] sm:$0xf]
        %v1269 = vld [vmem:[%s282 + $0x744] sm:$0xf]
        %v1270 = vld [vmem:[%s282 + $0x748] sm:$0xf]
        %v1271 = vld [vmem:[%s282 + $0x74c] sm:$0xf]
        %v1272 = vld [vmem:[%s282 + $0x750] sm:$0xf]
        %v1273 = vld [vmem:[%s282 + $0x754] sm:$0xf]
        %v1274 = vld [vmem:[%s282 + $0x758] sm:$0xf]
        %v1275 = vld [vmem:[%s282 + $0x75c] sm:$0xf]
        %v1276 = vld [vmem:[%s282 + $0x760] sm:$0xf]
        %v1277 = vld [vmem:[%s282 + $0x764] sm:$0xf]
        %v1278 = vld [vmem:[%s282 + $0x768] sm:$0xf]
        %v1279 = vld [vmem:[%s282 + $0x76c] sm:$0xf]
        %v1280 = vld [vmem:[%s282 + $0x770] sm:$0xf]
        %v1281 = vld [vmem:[%s282 + $0x774] sm:$0xf]
        %v1282 = vld [vmem:[%s282 + $0x778] sm:$0xf]
        %v1283 = vld [vmem:[%s282 + $0x77c] sm:$0xf]
        %v1284 = vld [vmem:[%s282 + $0x780] sm:$0xf]
        %v1285 = vld [vmem:[%s282 + $0x784] sm:$0xf]
        %v1286 = vld [vmem:[%s282 + $0x788] sm:$0xf]
        %v1287 = vld [vmem:[%s282 + $0x78c] sm:$0xf]
        %v1288 = vld [vmem:[%s282 + $0x790] sm:$0xf]
        %v1289 = vld [vmem:[%s282 + $0x794] sm:$0xf]
        %v1290 = vld [vmem:[%s282 + $0x798] sm:$0xf]
        %v1291 = vld [vmem:[%s282 + $0x79c] sm:$0xf]
        %v1292 = vld [vmem:[%s282 + $0x7a0] sm:$0xf]
        %v1293 = vld [vmem:[%s282 + $0x7a4] sm:$0xf]
        %v1294 = vld [vmem:[%s282 + $0x7a8] sm:$0xf]
        %v1295 = vld [vmem:[%s282 + $0x7ac] sm:$0xf]
        %v1296 = vld [vmem:[%s282 + $0x7b0] sm:$0xf]
        %v1297 = vld [vmem:[%s282 + $0x7b4] sm:$0xf]
        %v1298 = vld [vmem:[%s282 + $0x7b8] sm:$0xf]
        %v1299 = vld [vmem:[%s282 + $0x7bc] sm:$0xf]
        %v1300 = vld [vmem:[%s282 + $0x7c0] sm:$0xf]
        %v1301 = vld [vmem:[%s282 + $0x7c4] sm:$0xf]
        %v1302 = vld [vmem:[%s282 + $0x7c8] sm:$0xf]
        %v1303 = vld [vmem:[%s282 + $0x7cc] sm:$0xf]
        %v1304 = vld [vmem:[%s282 + $0x7d0] sm:$0xf]
        %v1305 = vld [vmem:[%s282 + $0x7d4] sm:$0xf]
        %v1306 = vld [vmem:[%s282 + $0x7d8] sm:$0xf]
        %v1307 = vld [vmem:[%s282 + $0x7dc] sm:$0xf]
        %v1308 = vld [vmem:[%s282 + $0x7e0] sm:$0xf]
        %v1309 = vld [vmem:[%s282 + $0x7e4] sm:$0xf]
        %v1310 = vld [vmem:[%s282 + $0x7e8] sm:$0xf]
        %v1311 = vld [vmem:[%s282 + $0x7ec] sm:$0xf]
        %v1312 = vld [vmem:[%s282 + $0x7f0] sm:$0xf]
        %v1313 = vld [vmem:[%s282 + $0x7f4] sm:$0xf]
        %v1314 = vld [vmem:[%s282 + $0x7f8] sm:$0xf]
        %v1315 = vld [vmem:[%s282 + $0x7fc] sm:$0xf]
        %v1316 = vld [vmem:[%s282 + $0x800] sm:$0xf]
        %v1317 = vld [vmem:[%s282 + $0x804] sm:$0xf]
        %v1318 = vld [vmem:[%s282 + $0x808] sm:$0xf]
        %v1319 = vld [vmem:[%s282 + $0x80c] sm:$0xf]
        %v1320 = vld [vmem:[%s282 + $0x810] sm:$0xf]
        %v1321 = vld [vmem:[%s282 + $0x814] sm:$0xf]
        %v1322 = vld [vmem:[%s282 + $0x818] sm:$0xf]
        %v1323 = vld [vmem:[%s282 + $0x81c] sm:$0xf]
        %v1324 = vld [vmem:[%s282 + $0x820] sm:$0xf]
        %v1325 = vld [vmem:[%s282 + $0x824] sm:$0xf]
        %v1326 = vld [vmem:[%s282 + $0x828] sm:$0xf]
        %v1327 = vld [vmem:[%s282 + $0x82c] sm:$0xf]
        %v1328 = vld [vmem:[%s282 + $0x830] sm:$0xf]
        %v1329 = vld [vmem:[%s282 + $0x834] sm:$0xf]
        %v1330 = vld [vmem:[%s282 + $0x838] sm:$0xf]
        %v1331 = vld [vmem:[%s282 + $0x83c] sm:$0xf]
        %v1332 = vld [vmem:[%s282 + $0x840] sm:$0xf]
        %v1333 = vld [vmem:[%s282 + $0x844] sm:$0xf]
        %v1334 = vld [vmem:[%s282 + $0x848] sm:$0xf]
        %v1335 = vld [vmem:[%s282 + $0x84c] sm:$0xf]
        %v1336 = vld [vmem:[%s282 + $0x850] sm:$0xf]
        %v1337 = vld [vmem:[%s282 + $0x854] sm:$0xf]
        %v1338 = vld [vmem:[%s282 + $0x858] sm:$0xf]
        %v1339 = vld [vmem:[%s282 + $0x85c] sm:$0xf]
        %v1340 = vld [vmem:[%s282 + $0x860] sm:$0xf]
        %v1341 = vld [vmem:[%s282 + $0x864] sm:$0xf]
        %v1342 = vld [vmem:[%s282 + $0x868] sm:$0xf]
        %v1343 = vld [vmem:[%s282 + $0x86c] sm:$0xf]
        %v1344 = vld [vmem:[%s282 + $0x870] sm:$0xf]
        %v1345 = vld [vmem:[%s282 + $0x874] sm:$0xf]
        %v1346 = vld [vmem:[%s282 + $0x878] sm:$0xf]
        %v1347 = vld [vmem:[%s282 + $0x87c] sm:$0xf]
        %v1348 = vld [vmem:[%s282 + $0x880] sm:$0xf]
        %v1349 = vld [vmem:[%s282 + $0x884] sm:$0xf]
        %v1350 = vld [vmem:[%s282 + $0x888] sm:$0xf]
        %v1351 = vld [vmem:[%s282 + $0x88c] sm:$0xf]
        %v1352 = vld [vmem:[%s282 + $0x890] sm:$0xf]
        %v1353 = vld [vmem:[%s282 + $0x894] sm:$0xf]
        %v1354 = vld [vmem:[%s282 + $0x898] sm:$0xf]
        %v1355 = vld [vmem:[%s282 + $0x89c] sm:$0xf]
        %v1356 = vld [vmem:[%s282 + $0x8a0] sm:$0xf]
        %v1357 = vld [vmem:[%s282 + $0x8a4] sm:$0xf]
        %v1358 = vld [vmem:[%s282 + $0x8a8] sm:$0xf]
        %v1359 = vld [vmem:[%s282 + $0x8ac] sm:$0xf]
        %v1360 = vld [vmem:[%s282 + $0x8b0] sm:$0xf]
        %v1361 = vld [vmem:[%s282 + $0x8b4] sm:$0xf]
        %v1362 = vld [vmem:[%s282 + $0x8b8] sm:$0xf]
        %v1363 = vld [vmem:[%s282 + $0x8bc] sm:$0xf]
        %v1364 = vld [vmem:[%s282 + $0x8c0] sm:$0xf]
        %v1365 = vld [vmem:[%s282 + $0x8c4] sm:$0xf]
        %v1366 = vld [vmem:[%s282 + $0x8c8] sm:$0xf]
        %v1367 = vld [vmem:[%s282 + $0x8cc] sm:$0xf]
        %v1368 = vld [vmem:[%s282 + $0x8d0] sm:$0xf]
        %v1369 = vld [vmem:[%s282 + $0x8d4] sm:$0xf]
        %v1370 = vld [vmem:[%s282 + $0x8d8] sm:$0xf]
        %v1371 = vld [vmem:[%s282 + $0x8dc] sm:$0xf]
        %v1372 = vld [vmem:[%s282 + $0x8e0] sm:$0xf]
        %v1373 = vld [vmem:[%s282 + $0x8e4] sm:$0xf]
        %v1374 = vld [vmem:[%s282 + $0x8e8] sm:$0xf]
        %v1375 = vld [vmem:[%s282 + $0x8ec] sm:$0xf]
        %v1376 = vld [vmem:[%s282 + $0x8f0] sm:$0xf]
        %v1377 = vld [vmem:[%s282 + $0x8f4] sm:$0xf]
        %v1378 = vld [vmem:[%s282 + $0x8f8] sm:$0xf]
        %v1379 = vld [vmem:[%s282 + $0x8fc] sm:$0xf]
        %v1380 = vld [vmem:[%s282 + $0x900] sm:$0xf]
        %v1381 = vld [vmem:[%s282 + $0x904] sm:$0xf]
        %v1382 = vld [vmem:[%s282 + $0x908] sm:$0xf]
        %v1383 = vld [vmem:[%s282 + $0x90c] sm:$0xf]
        %v1384 = vld [vmem:[%s282 + $0x910] sm:$0xf]
        %v1385 = vld [vmem:[%s282 + $0x914] sm:$0xf]
        %v1386 = vld [vmem:[%s282 + $0x918] sm:$0xf]
        %v1387 = vld [vmem:[%s282 + $0x91c] sm:$0xf]
        %v1388 = vld [vmem:[%s282 + $0x920] sm:$0xf]
        %v1389 = vld [vmem:[%s282 + $0x924] sm:$0xf]
        %v1390 = vld [vmem:[%s282 + $0x928] sm:$0xf]
        %v1391 = vld [vmem:[%s282 + $0x92c] sm:$0xf]
        %v1392 = vld [vmem:[%s282 + $0x930] sm:$0xf]
        %v1393 = vld [vmem:[%s282 + $0x934] sm:$0xf]
        %v1394 = vld [vmem:[%s282 + $0x938] sm:$0xf]
        %v1395 = vld [vmem:[%s282 + $0x93c] sm:$0xf]
        %v1396 = vld [vmem:[%s282 + $0x940] sm:$0xf]
        %v1397 = vld [vmem:[%s282 + $0x944] sm:$0xf]
        %v1398 = vld [vmem:[%s282 + $0x948] sm:$0xf]
        %v1399 = vld [vmem:[%s282 + $0x94c] sm:$0xf]
        %v1400 = vld [vmem:[%s282 + $0x950] sm:$0xf]
        %v1401 = vld [vmem:[%s282 + $0x954] sm:$0xf]
        %v1402 = vld [vmem:[%s282 + $0x958] sm:$0xf]
        %v1403 = vld [vmem:[%s282 + $0x95c] sm:$0xf]
        %v1404 = vld [vmem:[%s282 + $0x960] sm:$0xf]
        %v1405 = vld [vmem:[%s282 + $0x964] sm:$0xf]
        %v1406 = vld [vmem:[%s282 + $0x968] sm:$0xf]
        %v1407 = vld [vmem:[%s282 + $0x96c] sm:$0xf]
        %v1408 = vld [vmem:[%s282 + $0x970] sm:$0xf]
        %v1409 = vld [vmem:[%s282 + $0x974] sm:$0xf]
        %v1410 = vld [vmem:[%s282 + $0x978] sm:$0xf]
        %v1411 = vld [vmem:[%s282 + $0x97c] sm:$0xf]
        %v1412 = vld [vmem:[%s282 + $0x980] sm:$0xf]
        %v1413 = vld [vmem:[%s282 + $0x984] sm:$0xf]
        %v1414 = vld [vmem:[%s282 + $0x988] sm:$0xf]
        %v1415 = vld [vmem:[%s282 + $0x98c] sm:$0xf]
        %v1416 = vld [vmem:[%s282 + $0x990] sm:$0xf]
        %v1417 = vld [vmem:[%s282 + $0x994] sm:$0xf]
        %v1418 = vld [vmem:[%s282 + $0x998] sm:$0xf]
        %v1419 = vld [vmem:[%s282 + $0x99c] sm:$0xf]
        %v1420 = vld [vmem:[%s282 + $0x9a0] sm:$0xf]
        %v1421 = vld [vmem:[%s282 + $0x9a4] sm:$0xf]
        %v1422 = vld [vmem:[%s282 + $0x9a8] sm:$0xf]
        %v1423 = vld [vmem:[%s282 + $0x9ac] sm:$0xf]
        %v1424 = vld [vmem:[%s282 + $0x9b0] sm:$0xf]
        %v1425 = vld [vmem:[%s282 + $0x9b4] sm:$0xf]
        %v1426 = vld [vmem:[%s282 + $0x9b8] sm:$0xf]
        %v1427 = vld [vmem:[%s282 + $0x9bc] sm:$0xf]
        %v1428 = vld [vmem:[%s282 + $0x9c0] sm:$0xf]
        %v1429 = vld [vmem:[%s282 + $0x9c4] sm:$0xf]
        %v1430 = vld [vmem:[%s282 + $0x9c8] sm:$0xf]
        %v1431 = vld [vmem:[%s282 + $0x9cc] sm:$0xf]
        %v1432 = vld [vmem:[%s282 + $0x9d0] sm:$0xf]
        %v1433 = vld [vmem:[%s282 + $0x9d4] sm:$0xf]
        %v1434 = vld [vmem:[%s282 + $0x9d8] sm:$0xf]
        %v1435 = vld [vmem:[%s282 + $0x9dc] sm:$0xf]
        %v1436 = vld [vmem:[%s282 + $0x9e0] sm:$0xf]
        %v1437 = vld [vmem:[%s282 + $0x9e4] sm:$0xf]
        %v1438 = vld [vmem:[%s282 + $0x9e8] sm:$0xf]
        %v1439 = vld [vmem:[%s282 + $0x9ec] sm:$0xf]
        %v1440 = vld [vmem:[%s282 + $0x9f0] sm:$0xf]
        %v1441 = vld [vmem:[%s282 + $0x9f4] sm:$0xf]
        %v1442 = vld [vmem:[%s282 + $0x9f8] sm:$0xf]
        %v1443 = vld [vmem:[%s282 + $0x9fc] sm:$0xf]
        %v1444 = vld [vmem:[%s282 + $0xa00] sm:$0xf]
        %v1445 = vld [vmem:[%s282 + $0xa04] sm:$0xf]
        %v1446 = vld [vmem:[%s282 + $0xa08] sm:$0xf]
        %v1447 = vld [vmem:[%s282 + $0xa0c] sm:$0xf]
        %v1448 = vld [vmem:[%s282 + $0xa10] sm:$0xf]
        %v1449 = vld [vmem:[%s282 + $0xa14] sm:$0xf]
        %v1450 = vld [vmem:[%s282 + $0xa18] sm:$0xf]
        %v1451 = vld [vmem:[%s282 + $0xa1c] sm:$0xf]
        %v1452 = vld [vmem:[%s282 + $0xa20] sm:$0xf]
        %v1453 = vld [vmem:[%s282 + $0xa24] sm:$0xf]
        %v1454 = vld [vmem:[%s282 + $0xa28] sm:$0xf]
        %v1455 = vld [vmem:[%s282 + $0xa2c] sm:$0xf]
        %v1456 = vld [vmem:[%s282 + $0xa30] sm:$0xf]
        %v1457 = vld [vmem:[%s282 + $0xa34] sm:$0xf]
        %v1458 = vld [vmem:[%s282 + $0xa38] sm:$0xf]
        %v1459 = vld [vmem:[%s282 + $0xa3c] sm:$0xf]
        %v1460 = vld [vmem:[%s282 + $0xa40] sm:$0xf]
        %v1461 = vld [vmem:[%s282 + $0xa44] sm:$0xf]
        %v1462 = vld [vmem:[%s282 + $0xa48] sm:$0xf]
        %v1463 = vld [vmem:[%s282 + $0xa4c] sm:$0xf]
        %v1464 = vld [vmem:[%s282 + $0xa50] sm:$0xf]
        %v1465 = vld [vmem:[%s282 + $0xa54] sm:$0xf]
        %v1466 = vld [vmem:[%s282 + $0xa58] sm:$0xf]
        %v1467 = vld [vmem:[%s282 + $0xa5c] sm:$0xf]
        %v1468 = vld [vmem:[%s282 + $0xa60] sm:$0xf]
        %v1469 = vld [vmem:[%s282 + $0xa64] sm:$0xf]
        %v1470 = vld [vmem:[%s282 + $0xa68] sm:$0xf]
        %v1471 = vld [vmem:[%s282 + $0xa6c] sm:$0xf]
        %v1472 = vld [vmem:[%s282 + $0xa70] sm:$0xf]
        %v1473 = vld [vmem:[%s282 + $0xa74] sm:$0xf]
        %v1474 = vld [vmem:[%s282 + $0xa78] sm:$0xf]
        %v1475 = vld [vmem:[%s282 + $0xa7c] sm:$0xf]
        %v1476 = vld [vmem:[%s282 + $0xa80] sm:$0xf]
        %v1477 = vld [vmem:[%s282 + $0xa84] sm:$0xf]
        %v1478 = vld [vmem:[%s282 + $0xa88] sm:$0xf]
        %v1479 = vld [vmem:[%s282 + $0xa8c] sm:$0xf]
        %v1480 = vld [vmem:[%s282 + $0xa90] sm:$0xf]
        %v1481 = vld [vmem:[%s282 + $0xa94] sm:$0xf]
        %v1482 = vld [vmem:[%s282 + $0xa98] sm:$0xf]
        %v1483 = vld [vmem:[%s282 + $0xa9c] sm:$0xf]
        %v1484 = vld [vmem:[%s282 + $0xaa0] sm:$0xf]
        %v1485 = vld [vmem:[%s282 + $0xaa4] sm:$0xf]
        %v1486 = vld [vmem:[%s282 + $0xaa8] sm:$0xf]
        %v1487 = vld [vmem:[%s282 + $0xaac] sm:$0xf]
        %v1488 = vld [vmem:[%s282 + $0xab0] sm:$0xf]
        %v1489 = vld [vmem:[%s282 + $0xab4] sm:$0xf]
        %v1490 = vld [vmem:[%s282 + $0xab8] sm:$0xf]
        %v1491 = vld [vmem:[%s282 + $0xabc] sm:$0xf]
        %v1492 = vld [vmem:[%s282 + $0xac0] sm:$0xf]
        %v1493 = vld [vmem:[%s282 + $0xac4] sm:$0xf]
        %v1494 = vld [vmem:[%s282 + $0xac8] sm:$0xf]
        %v1495 = vld [vmem:[%s282 + $0xacc] sm:$0xf]
        %v1496 = vld [vmem:[%s282 + $0xad0] sm:$0xf]
        %v1497 = vld [vmem:[%s282 + $0xad4] sm:$0xf]
        %v1498 = vld [vmem:[%s282 + $0xad8] sm:$0xf]
        %v1499 = vld [vmem:[%s282 + $0xadc] sm:$0xf]
        %v1500 = vld [vmem:[%s282 + $0xae0] sm:$0xf]
        %v1501 = vld [vmem:[%s282 + $0xae4] sm:$0xf]
        %v1502 = vld [vmem:[%s282 + $0xae8] sm:$0xf]
        %v1503 = vld [vmem:[%s282 + $0xaec] sm:$0xf]
        %v1504 = vld [vmem:[%s282 + $0xaf0] sm:$0xf]
        %v1505 = vld [vmem:[%s282 + $0xaf4] sm:$0xf]
        %v1506 = vld [vmem:[%s282 + $0xaf8] sm:$0xf]
        %v1507 = vld [vmem:[%s282 + $0xafc] sm:$0xf]
        %v1508 = vld [vmem:[%s282 + $0xb00] sm:$0xf]
        %v1509 = vld [vmem:[%s282 + $0xb04] sm:$0xf]
        %v1510 = vld [vmem:[%s282 + $0xb08] sm:$0xf]
        %v1511 = vld [vmem:[%s282 + $0xb0c] sm:$0xf]
        %v1512 = vld [vmem:[%s282 + $0xb10] sm:$0xf]
        %v1513 = vld [vmem:[%s282 + $0xb14] sm:$0xf]
        %v1514 = vld [vmem:[%s282 + $0xb18] sm:$0xf]
        %v1515 = vld [vmem:[%s282 + $0xb1c] sm:$0xf]
        %v1516 = vld [vmem:[%s282 + $0xb20] sm:$0xf]
        %v1517 = vld [vmem:[%s282 + $0xb24] sm:$0xf]
        %v1518 = vld [vmem:[%s282 + $0xb28] sm:$0xf]
        %v1519 = vld [vmem:[%s282 + $0xb2c] sm:$0xf]
        %v1520 = vld [vmem:[%s282 + $0xb30] sm:$0xf]
        %v1521 = vld [vmem:[%s282 + $0xb34] sm:$0xf]
        %v1522 = vld [vmem:[%s282 + $0xb38] sm:$0xf]
        %v1523 = vld [vmem:[%s282 + $0xb3c] sm:$0xf]
        %v1524 = vld [vmem:[%s282 + $0xb40] sm:$0xf]
        %v1525 = vld [vmem:[%s282 + $0xb44] sm:$0xf]
        %v1526 = vld [vmem:[%s282 + $0xb48] sm:$0xf]
        %v1527 = vld [vmem:[%s282 + $0xb4c] sm:$0xf]
        %v1528 = vld [vmem:[%s282 + $0xb50] sm:$0xf]
        %v1529 = vld [vmem:[%s282 + $0xb54] sm:$0xf]
        %v1530 = vld [vmem:[%s282 + $0xb58] sm:$0xf]
        %v1531 = vld [vmem:[%s282 + $0xb5c] sm:$0xf]
        %v1532 = vld [vmem:[%s282 + $0xb60] sm:$0xf]
        %v1533 = vld [vmem:[%s282 + $0xb64] sm:$0xf]
        %v1534 = vld [vmem:[%s282 + $0xb68] sm:$0xf]
        %v1535 = vld [vmem:[%s282 + $0xb6c] sm:$0xf]
        %v1536 = vld [vmem:[%s282 + $0xb70] sm:$0xf]
        %v1537 = vld [vmem:[%s282 + $0xb74] sm:$0xf]
        %v1538 = vld [vmem:[%s282 + $0xb78] sm:$0xf]
        %v1539 = vld [vmem:[%s282 + $0xb7c] sm:$0xf]
        %v1540 = vld [vmem:[%s282 + $0xb80] sm:$0xf]
        %v1541 = vld [vmem:[%s282 + $0xb84] sm:$0xf]
        %v1542 = vld [vmem:[%s282 + $0xb88] sm:$0xf]
        %v1543 = vld [vmem:[%s282 + $0xb8c] sm:$0xf]
        %v1544 = vld [vmem:[%s282 + $0xb90] sm:$0xf]
        %v1545 = vld [vmem:[%s282 + $0xb94] sm:$0xf]
        %v1546 = vld [vmem:[%s282 + $0xb98] sm:$0xf]
        %v1547 = vld [vmem:[%s282 + $0xb9c] sm:$0xf]
        %v1548 = vld [vmem:[%s282 + $0xba0] sm:$0xf]
        %v1549 = vld [vmem:[%s282 + $0xba4] sm:$0xf]
        %v1550 = vld [vmem:[%s282 + $0xba8] sm:$0xf]
        %v1551 = vld [vmem:[%s282 + $0xbac] sm:$0xf]
        %v1552 = vld [vmem:[%s282 + $0xbb0] sm:$0xf]
        %v1553 = vld [vmem:[%s282 + $0xbb4] sm:$0xf]
        %v1554 = vld [vmem:[%s282 + $0xbb8] sm:$0xf]
        %v1555 = vld [vmem:[%s282 + $0xbbc] sm:$0xf]
        %v1556 = vld [vmem:[%s282 + $0xbc0] sm:$0xf]
        %v1557 = vld [vmem:[%s282 + $0xbc4] sm:$0xf]
        %v1558 = vld [vmem:[%s282 + $0xbc8] sm:$0xf]
        %v1559 = vld [vmem:[%s282 + $0xbcc] sm:$0xf]
        %v1560 = vld [vmem:[%s282 + $0xbd0] sm:$0xf]
        %v1561 = vld [vmem:[%s282 + $0xbd4] sm:$0xf]
        %v1562 = vld [vmem:[%s282 + $0xbd8] sm:$0xf]
        %v1563 = vld [vmem:[%s282 + $0xbdc] sm:$0xf]
        %v1564 = vld [vmem:[%s282 + $0xbe0] sm:$0xf]
        %v1565 = vld [vmem:[%s282 + $0xbe4] sm:$0xf]
        %v1566 = vld [vmem:[%s282 + $0xbe8] sm:$0xf]
        %v1567 = vld [vmem:[%s282 + $0xbec] sm:$0xf]
        %v1568 = vld [vmem:[%s282 + $0xbf0] sm:$0xf]
        %v1569 = vld [vmem:[%s282 + $0xbf4] sm:$0xf]
        %v1570 = vld [vmem:[%s282 + $0xbf8] sm:$0xf]
        %v1571 = vld [vmem:[%s282 + $0xbfc] sm:$0xf]
        %v1572 = vld [vmem:[%s282 + $0xc00] sm:$0xf]
        %v1573 = vld [vmem:[%s282 + $0xc04] sm:$0xf]
        %v1574 = vld [vmem:[%s282 + $0xc08] sm:$0xf]
        %v1575 = vld [vmem:[%s282 + $0xc0c] sm:$0xf]
        %v1576 = vld [vmem:[%s282 + $0xc10] sm:$0xf]
        %v1577 = vld [vmem:[%s282 + $0xc14] sm:$0xf]
        %v1578 = vld [vmem:[%s282 + $0xc18] sm:$0xf]
        %v1579 = vld [vmem:[%s282 + $0xc1c] sm:$0xf]
        %v1580 = vld [vmem:[%s282 + $0xc20] sm:$0xf]
        %v1581 = vld [vmem:[%s282 + $0xc24] sm:$0xf]
        %v1582 = vld [vmem:[%s282 + $0xc28] sm:$0xf]
        %v1583 = vld [vmem:[%s282 + $0xc2c] sm:$0xf]
        %v1584 = vld [vmem:[%s282 + $0xc30] sm:$0xf]
        %v1585 = vld [vmem:[%s282 + $0xc34] sm:$0xf]
        %v1586 = vld [vmem:[%s282 + $0xc38] sm:$0xf]
        %v1587 = vld [vmem:[%s282 + $0xc3c] sm:$0xf]
        %v1588 = vld [vmem:[%s282 + $0xc40] sm:$0xf]
        %v1589 = vld [vmem:[%s282 + $0xc44] sm:$0xf]
        %v1590 = vld [vmem:[%s282 + $0xc48] sm:$0xf]
        %v1591 = vld [vmem:[%s282 + $0xc4c] sm:$0xf]
        %v1592 = vld [vmem:[%s282 + $0xc50] sm:$0xf]
        %v1593 = vld [vmem:[%s282 + $0xc54] sm:$0xf]
        %v1594 = vld [vmem:[%s282 + $0xc58] sm:$0xf]
        %v1595 = vld [vmem:[%s282 + $0xc5c] sm:$0xf]
        %v1596 = vld [vmem:[%s282 + $0xc60] sm:$0xf]
        %v1597 = vld [vmem:[%s282 + $0xc64] sm:$0xf]
        %v1598 = vld [vmem:[%s282 + $0xc68] sm:$0xf]
        %v1599 = vld [vmem:[%s282 + $0xc6c] sm:$0xf]
        %v1600 = vld [vmem:[%s282 + $0xc70] sm:$0xf]
        %v1601 = vld [vmem:[%s282 + $0xc74] sm:$0xf]
        %v1602 = vld [vmem:[%s282 + $0xc78] sm:$0xf]
        %v1603 = vld [vmem:[%s282 + $0xc7c] sm:$0xf]
        %v1604 = vld [vmem:[%s282 + $0xc80] sm:$0xf]
        %v1605 = vld [vmem:[%s282 + $0xc84] sm:$0xf]
        %v1606 = vld [vmem:[%s282 + $0xc88] sm:$0xf]
        %v1607 = vld [vmem:[%s282 + $0xc8c] sm:$0xf]
        %v1608 = vld [vmem:[%s282 + $0xc90] sm:$0xf]
        %v1609 = vld [vmem:[%s282 + $0xc94] sm:$0xf]
        %v1610 = vld [vmem:[%s282 + $0xc98] sm:$0xf]
        %v1611 = vld [vmem:[%s282 + $0xc9c] sm:$0xf]
        %v1612 = vld [vmem:[%s282 + $0xca0] sm:$0xf]
        %v1613 = vld [vmem:[%s282 + $0xca4] sm:$0xf]
        %v1614 = vld [vmem:[%s282 + $0xca8] sm:$0xf]
        %v1615 = vld [vmem:[%s282 + $0xcac] sm:$0xf]
        %v1616 = vld [vmem:[%s282 + $0xcb0] sm:$0xf]
        %v1617 = vld [vmem:[%s282 + $0xcb4] sm:$0xf]
        %v1618 = vld [vmem:[%s282 + $0xcb8] sm:$0xf]
        %v1619 = vld [vmem:[%s282 + $0xcbc] sm:$0xf]
        %v1620 = vld [vmem:[%s282 + $0xcc0] sm:$0xf]
        %v1621 = vld [vmem:[%s282 + $0xcc4] sm:$0xf]
        %v1622 = vld [vmem:[%s282 + $0xcc8] sm:$0xf]
        %v1623 = vld [vmem:[%s282 + $0xccc] sm:$0xf]
        %v1624 = vld [vmem:[%s282 + $0xcd0] sm:$0xf]
        %v1625 = vld [vmem:[%s282 + $0xcd4] sm:$0xf]
        %v1626 = vld [vmem:[%s282 + $0xcd8] sm:$0xf]
        %v1627 = vld [vmem:[%s282 + $0xcdc] sm:$0xf]
        %v1628 = vld [vmem:[%s282 + $0xce0] sm:$0xf]
        %v1629 = vld [vmem:[%s282 + $0xce4] sm:$0xf]
        %v1630 = vld [vmem:[%s282 + $0xce8] sm:$0xf]
        %v1631 = vld [vmem:[%s282 + $0xcec] sm:$0xf]
        %v1632 = vld [vmem:[%s282 + $0xcf0] sm:$0xf]
        %v1633 = vld [vmem:[%s282 + $0xcf4] sm:$0xf]
        %v1634 = vld [vmem:[%s282 + $0xcf8] sm:$0xf]
        %v1635 = vld [vmem:[%s282 + $0xcfc] sm:$0xf]
        %v1636 = vld [vmem:[%s282 + $0xd00] sm:$0xf]
        %v1637 = vld [vmem:[%s282 + $0xd04] sm:$0xf]
        %v1638 = vld [vmem:[%s282 + $0xd08] sm:$0xf]
        %v1639 = vld [vmem:[%s282 + $0xd0c] sm:$0xf]
        %v1640 = vld [vmem:[%s282 + $0xd10] sm:$0xf]
        %v1641 = vld [vmem:[%s282 + $0xd14] sm:$0xf]
        %v1642 = vld [vmem:[%s282 + $0xd18] sm:$0xf]
        %v1643 = vld [vmem:[%s282 + $0xd1c] sm:$0xf]
        %v1644 = vld [vmem:[%s282 + $0xd20] sm:$0xf]
        %v1645 = vld [vmem:[%s282 + $0xd24] sm:$0xf]
        %v1646 = vld [vmem:[%s282 + $0xd28] sm:$0xf]
        %v1647 = vld [vmem:[%s282 + $0xd2c] sm:$0xf]
        %v1648 = vld [vmem:[%s282 + $0xd30] sm:$0xf]
        %v1649 = vld [vmem:[%s282 + $0xd34] sm:$0xf]
        %v1650 = vld [vmem:[%s282 + $0xd38] sm:$0xf]
        %v1651 = vld [vmem:[%s282 + $0xd3c] sm:$0xf]
        %v1652 = vld [vmem:[%s282 + $0xd40] sm:$0xf]
        %v1653 = vld [vmem:[%s282 + $0xd44] sm:$0xf]
        %v1654 = vld [vmem:[%s282 + $0xd48] sm:$0xf]
        %v1655 = vld [vmem:[%s282 + $0xd4c] sm:$0xf]
        %v1656 = vld [vmem:[%s282 + $0xd50] sm:$0xf]
        %v1657 = vld [vmem:[%s282 + $0xd54] sm:$0xf]
        %v1658 = vld [vmem:[%s282 + $0xd58] sm:$0xf]
        %v1659 = vld [vmem:[%s282 + $0xd5c] sm:$0xf]
        %v1660 = vld [vmem:[%s282 + $0xd60] sm:$0xf]
        %v1661 = vld [vmem:[%s282 + $0xd64] sm:$0xf]
        %v1662 = vld [vmem:[%s282 + $0xd68] sm:$0xf]
        %v1663 = vld [vmem:[%s282 + $0xd6c] sm:$0xf]
        %v1664 = vld [vmem:[%s282 + $0xd70] sm:$0xf]
        %v1665 = vld [vmem:[%s282 + $0xd74] sm:$0xf]
        %v1666 = vld [vmem:[%s282 + $0xd78] sm:$0xf]
        %v1667 = vld [vmem:[%s282 + $0xd7c] sm:$0xf]
        %v1668 = vld [vmem:[%s282 + $0xd80] sm:$0xf]
        %v1669 = vld [vmem:[%s282 + $0xd84] sm:$0xf]
        %v1670 = vld [vmem:[%s282 + $0xd88] sm:$0xf]
        %v1671 = vld [vmem:[%s282 + $0xd8c] sm:$0xf]
        %v1672 = vld [vmem:[%s282 + $0xd90] sm:$0xf]
        %v1673 = vld [vmem:[%s282 + $0xd94] sm:$0xf]
        %v1674 = vld [vmem:[%s282 + $0xd98] sm:$0xf]
        %v1675 = vld [vmem:[%s282 + $0xd9c] sm:$0xf]
        %v1676 = vld [vmem:[%s282 + $0xda0] sm:$0xf]
        %v1677 = vld [vmem:[%s282 + $0xda4] sm:$0xf]
        %v1678 = vld [vmem:[%s282 + $0xda8] sm:$0xf]
        %v1679 = vld [vmem:[%s282 + $0xdac] sm:$0xf]
        %v1680 = vld [vmem:[%s282 + $0xdb0] sm:$0xf]
        %v1681 = vld [vmem:[%s282 + $0xdb4] sm:$0xf]
        %v1682 = vld [vmem:[%s282 + $0xdb8] sm:$0xf]
        %v1683 = vld [vmem:[%s282 + $0xdbc] sm:$0xf]
        %v1684 = vld [vmem:[%s282 + $0xdc0] sm:$0xf]
        %v1685 = vld [vmem:[%s282 + $0xdc4] sm:$0xf]
        %v1686 = vld [vmem:[%s282 + $0xdc8] sm:$0xf]
        %v1687 = vld [vmem:[%s282 + $0xdcc] sm:$0xf]
        %v1688 = vld [vmem:[%s282 + $0xdd0] sm:$0xf]
        %v1689 = vld [vmem:[%s282 + $0xdd4] sm:$0xf]
        %v1690 = vld [vmem:[%s282 + $0xdd8] sm:$0xf]
        %v1691 = vld [vmem:[%s282 + $0xddc] sm:$0xf]
        %v1692 = vld [vmem:[%s282 + $0xde0] sm:$0xf]
        %v1693 = vld [vmem:[%s282 + $0xde4] sm:$0xf]
        %v1694 = vld [vmem:[%s282 + $0xde8] sm:$0xf]
        %v1695 = vld [vmem:[%s282 + $0xdec] sm:$0xf]
        %v1696 = vld [vmem:[%s282 + $0xdf0] sm:$0xf]
        %v1697 = vld [vmem:[%s282 + $0xdf4] sm:$0xf]
        %v1698 = vld [vmem:[%s282 + $0xdf8] sm:$0xf]
        %v1699 = vld [vmem:[%s282 + $0xdfc] sm:$0xf]
        %v1700 = vld [vmem:[%s282 + $0xe00] sm:$0xf]
        %v1701 = vld [vmem:[%s282 + $0xe04] sm:$0xf]
        %v1702 = vld [vmem:[%s282 + $0xe08] sm:$0xf]
        %v1703 = vld [vmem:[%s282 + $0xe0c] sm:$0xf]
        %v1704 = vld [vmem:[%s282 + $0xe10] sm:$0xf]
        %v1705 = vld [vmem:[%s282 + $0xe14] sm:$0xf]
        %v1706 = vld [vmem:[%s282 + $0xe18] sm:$0xf]
        %v1707 = vld [vmem:[%s282 + $0xe1c] sm:$0xf]
        %v1708 = vld [vmem:[%s282 + $0xe20] sm:$0xf]
        %v1709 = vld [vmem:[%s282 + $0xe24] sm:$0xf]
        %v1710 = vld [vmem:[%s282 + $0xe28] sm:$0xf]
        %v1711 = vld [vmem:[%s282 + $0xe2c] sm:$0xf]
        %v1712 = vld [vmem:[%s282 + $0xe30] sm:$0xf]
        %v1713 = vld [vmem:[%s282 + $0xe34] sm:$0xf]
        %v1714 = vld [vmem:[%s282 + $0xe38] sm:$0xf]
        %v1715 = vld [vmem:[%s282 + $0xe3c] sm:$0xf]
        %v1716 = vld [vmem:[%s282 + $0xe40] sm:$0xf]
        %v1717 = vld [vmem:[%s282 + $0xe44] sm:$0xf]
        %v1718 = vld [vmem:[%s282 + $0xe48] sm:$0xf]
        %v1719 = vld [vmem:[%s282 + $0xe4c] sm:$0xf]
        %v1720 = vld [vmem:[%s282 + $0xe50] sm:$0xf]
        %v1721 = vld [vmem:[%s282 + $0xe54] sm:$0xf]
        %v1722 = vld [vmem:[%s282 + $0xe58] sm:$0xf]
        %v1723 = vld [vmem:[%s282 + $0xe5c] sm:$0xf]
        %v1724 = vld [vmem:[%s282 + $0xe60] sm:$0xf]
        %v1725 = vld [vmem:[%s282 + $0xe64] sm:$0xf]
        %v1726 = vld [vmem:[%s282 + $0xe68] sm:$0xf]
        %v1727 = vld [vmem:[%s282 + $0xe6c] sm:$0xf]
        %v1728 = vld [vmem:[%s282 + $0xe70] sm:$0xf]
        %v1729 = vld [vmem:[%s282 + $0xe74] sm:$0xf]
        %v1730 = vld [vmem:[%s282 + $0xe78] sm:$0xf]
        %v1731 = vld [vmem:[%s282 + $0xe7c] sm:$0xf]
        %v1732 = vld [vmem:[%s282 + $0xe80] sm:$0xf]
        %v1733 = vld [vmem:[%s282 + $0xe84] sm:$0xf]
        %v1734 = vld [vmem:[%s282 + $0xe88] sm:$0xf]
        %v1735 = vld [vmem:[%s282 + $0xe8c] sm:$0xf]
        %v1736 = vld [vmem:[%s282 + $0xe90] sm:$0xf]
        %v1737 = vld [vmem:[%s282 + $0xe94] sm:$0xf]
        %v1738 = vld [vmem:[%s282 + $0xe98] sm:$0xf]
        %v1739 = vld [vmem:[%s282 + $0xe9c] sm:$0xf]
        %v1740 = vld [vmem:[%s282 + $0xea0] sm:$0xf]
        %v1741 = vld [vmem:[%s282 + $0xea4] sm:$0xf]
        %v1742 = vld [vmem:[%s282 + $0xea8] sm:$0xf]
        %v1743 = vld [vmem:[%s282 + $0xeac] sm:$0xf]
        %v1744 = vld [vmem:[%s282 + $0xeb0] sm:$0xf]
        %v1745 = vld [vmem:[%s282 + $0xeb4] sm:$0xf]
        %v1746 = vld [vmem:[%s282 + $0xeb8] sm:$0xf]
        %v1747 = vld [vmem:[%s282 + $0xebc] sm:$0xf]
        %v1748 = vld [vmem:[%s282 + $0xec0] sm:$0xf]
        %v1749 = vld [vmem:[%s282 + $0xec4] sm:$0xf]
        %v1750 = vld [vmem:[%s282 + $0xec8] sm:$0xf]
        %v1751 = vld [vmem:[%s282 + $0xecc] sm:$0xf]
        %v1752 = vld [vmem:[%s282 + $0xed0] sm:$0xf]
        %v1753 = vld [vmem:[%s282 + $0xed4] sm:$0xf]
        %v1754 = vld [vmem:[%s282 + $0xed8] sm:$0xf]
        %v1755 = vld [vmem:[%s282 + $0xedc] sm:$0xf]
        %v1756 = vld [vmem:[%s282 + $0xee0] sm:$0xf]
        %v1757 = vld [vmem:[%s282 + $0xee4] sm:$0xf]
        %v1758 = vld [vmem:[%s282 + $0xee8] sm:$0xf]
        %v1759 = vld [vmem:[%s282 + $0xeec] sm:$0xf]
        %v1760 = vld [vmem:[%s282 + $0xef0] sm:$0xf]
        %v1761 = vld [vmem:[%s282 + $0xef4] sm:$0xf]
        %v1762 = vld [vmem:[%s282 + $0xef8] sm:$0xf]
        %v1763 = vld [vmem:[%s282 + $0xefc] sm:$0xf]
        %v1764 = vld [vmem:[%s282 + $0xf00] sm:$0xf]
        %v1765 = vld [vmem:[%s282 + $0xf04] sm:$0xf]
        %v1766 = vld [vmem:[%s282 + $0xf08] sm:$0xf]
        %v1767 = vld [vmem:[%s282 + $0xf0c] sm:$0xf]
        %v1768 = vld [vmem:[%s282 + $0xf10] sm:$0xf]
        %v1769 = vld [vmem:[%s282 + $0xf14] sm:$0xf]
        %v1770 = vld [vmem:[%s282 + $0xf18] sm:$0xf]
        %v1771 = vld [vmem:[%s282 + $0xf1c] sm:$0xf]
        %v1772 = vld [vmem:[%s282 + $0xf20] sm:$0xf]
        %v1773 = vld [vmem:[%s282 + $0xf24] sm:$0xf]
        %v1774 = vld [vmem:[%s282 + $0xf28] sm:$0xf]
        %v1775 = vld [vmem:[%s282 + $0xf2c] sm:$0xf]
        %v1776 = vld [vmem:[%s282 + $0xf30] sm:$0xf]
        %v1777 = vld [vmem:[%s282 + $0xf34] sm:$0xf]
        %v1778 = vld [vmem:[%s282 + $0xf38] sm:$0xf]
        %v1779 = vld [vmem:[%s282 + $0xf3c] sm:$0xf]
        %v1780 = vld [vmem:[%s282 + $0xf40] sm:$0xf]
        %v1781 = vld [vmem:[%s282 + $0xf44] sm:$0xf]
        %v1782 = vld [vmem:[%s282 + $0xf48] sm:$0xf]
        %v1783 = vld [vmem:[%s282 + $0xf4c] sm:$0xf]
        %v1784 = vld [vmem:[%s282 + $0xf50] sm:$0xf]
        %v1785 = vld [vmem:[%s282 + $0xf54] sm:$0xf]
        %v1786 = vld [vmem:[%s282 + $0xf58] sm:$0xf]
        %v1787 = vld [vmem:[%s282 + $0xf5c] sm:$0xf]
        %v1788 = vld [vmem:[%s282 + $0xf60] sm:$0xf]
        %v1789 = vld [vmem:[%s282 + $0xf64] sm:$0xf]
        %v1790 = vld [vmem:[%s282 + $0xf68] sm:$0xf]
        %v1791 = vld [vmem:[%s282 + $0xf6c] sm:$0xf]
        %v1792 = vld [vmem:[%s282 + $0xf70] sm:$0xf]
        %v1793 = vld [vmem:[%s282 + $0xf74] sm:$0xf]
        %v1794 = vld [vmem:[%s282 + $0xf78] sm:$0xf]
        %v1795 = vld [vmem:[%s282 + $0xf7c] sm:$0xf]
        %v1796 = vld [vmem:[%s282 + $0xf80] sm:$0xf]
        %v1797 = vld [vmem:[%s282 + $0xf84] sm:$0xf]
        %v1798 = vld [vmem:[%s282 + $0xf88] sm:$0xf]
        %v1799 = vld [vmem:[%s282 + $0xf8c] sm:$0xf]
        %v1800 = vld [vmem:[%s282 + $0xf90] sm:$0xf]
        %v1801 = vld [vmem:[%s282 + $0xf94] sm:$0xf]
        %v1802 = vld [vmem:[%s282 + $0xf98] sm:$0xf]
        %v1803 = vld [vmem:[%s282 + $0xf9c] sm:$0xf]
        %v1804 = vld [vmem:[%s282 + $0xfa0] sm:$0xf]
        %v1805 = vld [vmem:[%s282 + $0xfa4] sm:$0xf]
        %v1806 = vld [vmem:[%s282 + $0xfa8] sm:$0xf]
        %v1807 = vld [vmem:[%s282 + $0xfac] sm:$0xf]
        %v1808 = vld [vmem:[%s282 + $0xfb0] sm:$0xf]
        %v1809 = vld [vmem:[%s282 + $0xfb4] sm:$0xf]
        %v1810 = vld [vmem:[%s282 + $0xfb8] sm:$0xf]
        %v1811 = vld [vmem:[%s282 + $0xfbc] sm:$0xf]
        %v1812 = vld [vmem:[%s282 + $0xfc0] sm:$0xf]
        %v1813 = vld [vmem:[%s282 + $0xfc4] sm:$0xf]
        %v1814 = vld [vmem:[%s282 + $0xfc8] sm:$0xf]
        %v1815 = vld [vmem:[%s282 + $0xfcc] sm:$0xf]
        %v1816 = vld [vmem:[%s282 + $0xfd0] sm:$0xf]
        %v1817 = vld [vmem:[%s282 + $0xfd4] sm:$0xf]
        %v1818 = vld [vmem:[%s282 + $0xfd8] sm:$0xf]
        %v1819 = vld [vmem:[%s282 + $0xfdc] sm:$0xf]
        %v1820 = vld [vmem:[%s282 + $0xfe0] sm:$0xf]
        %v1821 = vld [vmem:[%s282 + $0xfe4] sm:$0xf]
        %v1822 = vld [vmem:[%s282 + $0xfe8] sm:$0xf]
        %v1823 = vld [vmem:[%s282 + $0xfec] sm:$0xf]
        %v1824 = vld [vmem:[%s282 + $0xff0] sm:$0xf]
        %v1825 = vld [vmem:[%s282 + $0xff4] sm:$0xf]
        %v1826 = vld [vmem:[%s282 + $0xff8] sm:$0xf]
        %v1827 = vld [vmem:[%s282 + $0xffc] sm:$0xf]
        %v2852 = vunpack.c.l.b16 %v804
        %v2853 = vunpack.c.l.b16 %v805
        %v2854 = vunpack.c.l.b16 %v806
        %v2855 = vunpack.c.l.b16 %v807
        %v2856 = vunpack.c.l.b16 %v808
        %v2857 = vunpack.c.l.b16 %v809
        %v2858 = vunpack.c.l.b16 %v810
        %v2859 = vunpack.c.l.b16 %v811
        %v2860 = vunpack.c.l.b16 %v812
        %v2861 = vunpack.c.l.b16 %v813
        %v2862 = vunpack.c.l.b16 %v814
        %v2863 = vunpack.c.l.b16 %v815
        %v2864 = vunpack.c.l.b16 %v816
        %v2865 = vunpack.c.l.b16 %v817
        %v2866 = vunpack.c.l.b16 %v818
        %v2867 = vunpack.c.l.b16 %v819
        %v2868 = vunpack.c.l.b16 %v820
        %v2869 = vunpack.c.l.b16 %v821
        %v2870 = vunpack.c.l.b16 %v822
        %v2871 = vunpack.c.l.b16 %v823
        %v2872 = vunpack.c.l.b16 %v824
        %v2873 = vunpack.c.l.b16 %v825
        %v2874 = vunpack.c.l.b16 %v826
        %v2875 = vunpack.c.l.b16 %v827
        %v2876 = vunpack.c.l.b16 %v828
        %v2877 = vunpack.c.l.b16 %v829
        %v2878 = vunpack.c.l.b16 %v830
        %v2879 = vunpack.c.l.b16 %v831
        %v2880 = vunpack.c.l.b16 %v832
        %v2881 = vunpack.c.l.b16 %v833
        %v2882 = vunpack.c.l.b16 %v834
        %v2883 = vunpack.c.l.b16 %v835
        %v2884 = vunpack.c.l.b16 %v836
        %v2885 = vunpack.c.l.b16 %v837
        %v2886 = vunpack.c.l.b16 %v838
        %v2887 = vunpack.c.l.b16 %v839
        %v2888 = vunpack.c.l.b16 %v840
        %v2889 = vunpack.c.l.b16 %v841
        %v2890 = vunpack.c.l.b16 %v842
        %v2891 = vunpack.c.l.b16 %v843
        %v2892 = vunpack.c.l.b16 %v844
        %v2893 = vunpack.c.l.b16 %v845
        %v2894 = vunpack.c.l.b16 %v846
        %v2895 = vunpack.c.l.b16 %v847
        %v2896 = vunpack.c.l.b16 %v848
        %v2897 = vunpack.c.l.b16 %v849
        %v2898 = vunpack.c.l.b16 %v850
        %v2899 = vunpack.c.l.b16 %v851
        %v2900 = vunpack.c.l.b16 %v852
        %v2901 = vunpack.c.l.b16 %v853
        %v2902 = vunpack.c.l.b16 %v854
        %v2903 = vunpack.c.l.b16 %v855
        %v2904 = vunpack.c.l.b16 %v856
        %v2905 = vunpack.c.l.b16 %v857
        %v2906 = vunpack.c.l.b16 %v858
        %v2907 = vunpack.c.l.b16 %v859
        %v2908 = vunpack.c.l.b16 %v860
        %v2909 = vunpack.c.l.b16 %v861
        %v2910 = vunpack.c.l.b16 %v862
        %v2911 = vunpack.c.l.b16 %v863
        %v2912 = vunpack.c.l.b16 %v864
        %v2913 = vunpack.c.l.b16 %v865
        %v2914 = vunpack.c.l.b16 %v866
        %v2915 = vunpack.c.l.b16 %v867
        %v2916 = vunpack.c.l.b16 %v868
        %v2917 = vunpack.c.l.b16 %v869
        %v2918 = vunpack.c.l.b16 %v870
        %v2919 = vunpack.c.l.b16 %v871
        %v2920 = vunpack.c.l.b16 %v872
        %v2921 = vunpack.c.l.b16 %v873
        %v2922 = vunpack.c.l.b16 %v874
        %v2923 = vunpack.c.l.b16 %v875
        %v2924 = vunpack.c.l.b16 %v876
        %v2925 = vunpack.c.l.b16 %v877
        %v2926 = vunpack.c.l.b16 %v878
        %v2927 = vunpack.c.l.b16 %v879
        %v2928 = vunpack.c.l.b16 %v880
        %v2929 = vunpack.c.l.b16 %v881
        %v2930 = vunpack.c.l.b16 %v882
        %v2931 = vunpack.c.l.b16 %v883
        %v2932 = vunpack.c.l.b16 %v884
        %v2933 = vunpack.c.l.b16 %v885
        %v2934 = vunpack.c.l.b16 %v886
        %v2935 = vunpack.c.l.b16 %v887
        %v2936 = vunpack.c.l.b16 %v888
        %v2937 = vunpack.c.l.b16 %v889
        %v2938 = vunpack.c.l.b16 %v890
        %v2939 = vunpack.c.l.b16 %v891
        %v2940 = vunpack.c.l.b16 %v892
        %v2941 = vunpack.c.l.b16 %v893
        %v2942 = vunpack.c.l.b16 %v894
        %v2943 = vunpack.c.l.b16 %v895
        %v2944 = vunpack.c.l.b16 %v896
        %v2945 = vunpack.c.l.b16 %v897
        %v2946 = vunpack.c.l.b16 %v898
        %v2947 = vunpack.c.l.b16 %v899
        %v2948 = vunpack.c.l.b16 %v900
        %v2949 = vunpack.c.l.b16 %v901
        %v2950 = vunpack.c.l.b16 %v902
        %v2951 = vunpack.c.l.b16 %v903
        %v2952 = vunpack.c.l.b16 %v904
        %v2953 = vunpack.c.l.b16 %v905
        %v2954 = vunpack.c.l.b16 %v906
        %v2955 = vunpack.c.l.b16 %v907
        %v2956 = vunpack.c.l.b16 %v908
        %v2957 = vunpack.c.l.b16 %v909
        %v2958 = vunpack.c.l.b16 %v910
        %v2959 = vunpack.c.l.b16 %v911
        %v2960 = vunpack.c.l.b16 %v912
        %v2961 = vunpack.c.l.b16 %v913
        %v2962 = vunpack.c.l.b16 %v914
        %v2963 = vunpack.c.l.b16 %v915
        %v2964 = vunpack.c.l.b16 %v916
        %v2965 = vunpack.c.l.b16 %v917
        %v2966 = vunpack.c.l.b16 %v918
        %v2967 = vunpack.c.l.b16 %v919
        %v2968 = vunpack.c.l.b16 %v920
        %v2969 = vunpack.c.l.b16 %v921
        %v2970 = vunpack.c.l.b16 %v922
        %v2971 = vunpack.c.l.b16 %v923
        %v2972 = vunpack.c.l.b16 %v924
        %v2973 = vunpack.c.l.b16 %v925
        %v2974 = vunpack.c.l.b16 %v926
        %v2975 = vunpack.c.l.b16 %v927
        %v2976 = vunpack.c.l.b16 %v928
        %v2977 = vunpack.c.l.b16 %v929
        %v2978 = vunpack.c.l.b16 %v930
        %v2979 = vunpack.c.l.b16 %v931
        %v2980 = vunpack.c.l.b16 %v932
        %v2981 = vunpack.c.l.b16 %v933
        %v2982 = vunpack.c.l.b16 %v934
        %v2983 = vunpack.c.l.b16 %v935
        %v2984 = vunpack.c.l.b16 %v936
        %v2985 = vunpack.c.l.b16 %v937
        %v2986 = vunpack.c.l.b16 %v938
        %v2987 = vunpack.c.l.b16 %v939
        %v2988 = vunpack.c.l.b16 %v940
        %v2989 = vunpack.c.l.b16 %v941
        %v2990 = vunpack.c.l.b16 %v942
        %v2991 = vunpack.c.l.b16 %v943
        %v2992 = vunpack.c.l.b16 %v944
        %v2993 = vunpack.c.l.b16 %v945
        %v2994 = vunpack.c.l.b16 %v946
        %v2995 = vunpack.c.l.b16 %v947
        %v2996 = vunpack.c.l.b16 %v948
        %v2997 = vunpack.c.l.b16 %v949
        %v2998 = vunpack.c.l.b16 %v950
        %v2999 = vunpack.c.l.b16 %v951
        %v3000 = vunpack.c.l.b16 %v952
        %v3001 = vunpack.c.l.b16 %v953
        %v3002 = vunpack.c.l.b16 %v954
        %v3003 = vunpack.c.l.b16 %v955
        %v3004 = vunpack.c.l.b16 %v956
        %v3005 = vunpack.c.l.b16 %v957
        %v3006 = vunpack.c.l.b16 %v958
        %v3007 = vunpack.c.l.b16 %v959
        %v3008 = vunpack.c.l.b16 %v960
        %v3009 = vunpack.c.l.b16 %v961
        %v3010 = vunpack.c.l.b16 %v962
        %v3011 = vunpack.c.l.b16 %v963
        %v3012 = vunpack.c.l.b16 %v964
        %v3013 = vunpack.c.l.b16 %v965
        %v3014 = vunpack.c.l.b16 %v966
        %v3015 = vunpack.c.l.b16 %v967
        %v3016 = vunpack.c.l.b16 %v968
        %v3017 = vunpack.c.l.b16 %v969
        %v3018 = vunpack.c.l.b16 %v970
        %v3019 = vunpack.c.l.b16 %v971
        %v3020 = vunpack.c.l.b16 %v972
        %v3021 = vunpack.c.l.b16 %v973
        %v3022 = vunpack.c.l.b16 %v974
        %v3023 = vunpack.c.l.b16 %v975
        %v3024 = vunpack.c.l.b16 %v976
        %v3025 = vunpack.c.l.b16 %v977
        %v3026 = vunpack.c.l.b16 %v978
        %v3027 = vunpack.c.l.b16 %v979
        %v3028 = vunpack.c.l.b16 %v980
        %v3029 = vunpack.c.l.b16 %v981
        %v3030 = vunpack.c.l.b16 %v982
        %v3031 = vunpack.c.l.b16 %v983
        %v3032 = vunpack.c.l.b16 %v984
        %v3033 = vunpack.c.l.b16 %v985
        %v3034 = vunpack.c.l.b16 %v986
        %v3035 = vunpack.c.l.b16 %v987
        %v3036 = vunpack.c.l.b16 %v988
        %v3037 = vunpack.c.l.b16 %v989
        %v3038 = vunpack.c.l.b16 %v990
        %v3039 = vunpack.c.l.b16 %v991
        %v3040 = vunpack.c.l.b16 %v992
        %v3041 = vunpack.c.l.b16 %v993
        %v3042 = vunpack.c.l.b16 %v994
        %v3043 = vunpack.c.l.b16 %v995
        %v3044 = vunpack.c.l.b16 %v996
        %v3045 = vunpack.c.l.b16 %v997
        %v3046 = vunpack.c.l.b16 %v998
        %v3047 = vunpack.c.l.b16 %v999
        %v3048 = vunpack.c.l.b16 %v1000
        %v3049 = vunpack.c.l.b16 %v1001
        %v3050 = vunpack.c.l.b16 %v1002
        %v3051 = vunpack.c.l.b16 %v1003
        %v3052 = vunpack.c.l.b16 %v1004
        %v3053 = vunpack.c.l.b16 %v1005
        %v3054 = vunpack.c.l.b16 %v1006
        %v3055 = vunpack.c.l.b16 %v1007
        %v3056 = vunpack.c.l.b16 %v1008
        %v3057 = vunpack.c.l.b16 %v1009
        %v3058 = vunpack.c.l.b16 %v1010
        %v3059 = vunpack.c.l.b16 %v1011
        %v3060 = vunpack.c.l.b16 %v1012
        %v3061 = vunpack.c.l.b16 %v1013
        %v3062 = vunpack.c.l.b16 %v1014
        %v3063 = vunpack.c.l.b16 %v1015
        %v3064 = vunpack.c.l.b16 %v1016
        %v3065 = vunpack.c.l.b16 %v1017
        %v3066 = vunpack.c.l.b16 %v1018
        %v3067 = vunpack.c.l.b16 %v1019
        %v3068 = vunpack.c.l.b16 %v1020
        %v3069 = vunpack.c.l.b16 %v1021
        %v3070 = vunpack.c.l.b16 %v1022
        %v3071 = vunpack.c.l.b16 %v1023
        %v3072 = vunpack.c.l.b16 %v1024
        %v3073 = vunpack.c.l.b16 %v1025
        %v3074 = vunpack.c.l.b16 %v1026
        %v3075 = vunpack.c.l.b16 %v1027
        %v3076 = vunpack.c.l.b16 %v1028
        %v3077 = vunpack.c.l.b16 %v1029
        %v3078 = vunpack.c.l.b16 %v1030
        %v3079 = vunpack.c.l.b16 %v1031
        %v3080 = vunpack.c.l.b16 %v1032
        %v3081 = vunpack.c.l.b16 %v1033
        %v3082 = vunpack.c.l.b16 %v1034
        %v3083 = vunpack.c.l.b16 %v1035
        %v3084 = vunpack.c.l.b16 %v1036
        %v3085 = vunpack.c.l.b16 %v1037
        %v3086 = vunpack.c.l.b16 %v1038
        %v3087 = vunpack.c.l.b16 %v1039
        %v3088 = vunpack.c.l.b16 %v1040
        %v3089 = vunpack.c.l.b16 %v1041
        %v3090 = vunpack.c.l.b16 %v1042
        %v3091 = vunpack.c.l.b16 %v1043
        %v3092 = vunpack.c.l.b16 %v1044
        %v3093 = vunpack.c.l.b16 %v1045
        %v3094 = vunpack.c.l.b16 %v1046
        %v3095 = vunpack.c.l.b16 %v1047
        %v3096 = vunpack.c.l.b16 %v1048
        %v3097 = vunpack.c.l.b16 %v1049
        %v3098 = vunpack.c.l.b16 %v1050
        %v3099 = vunpack.c.l.b16 %v1051
        %v3100 = vunpack.c.l.b16 %v1052
        %v3101 = vunpack.c.l.b16 %v1053
        %v3102 = vunpack.c.l.b16 %v1054
        %v3103 = vunpack.c.l.b16 %v1055
        %v3104 = vunpack.c.l.b16 %v1056
        %v3105 = vunpack.c.l.b16 %v1057
        %v3106 = vunpack.c.l.b16 %v1058
        %v3107 = vunpack.c.l.b16 %v1059
        %v3108 = vunpack.c.l.b16 %v1060
        %v3109 = vunpack.c.l.b16 %v1061
        %v3110 = vunpack.c.l.b16 %v1062
        %v3111 = vunpack.c.l.b16 %v1063
        %v3112 = vunpack.c.l.b16 %v1064
        %v3113 = vunpack.c.l.b16 %v1065
        %v3114 = vunpack.c.l.b16 %v1066
        %v3115 = vunpack.c.l.b16 %v1067
        %v3116 = vunpack.c.l.b16 %v1068
        %v3117 = vunpack.c.l.b16 %v1069
        %v3118 = vunpack.c.l.b16 %v1070
        %v3119 = vunpack.c.l.b16 %v1071
        %v3120 = vunpack.c.l.b16 %v1072
        %v3121 = vunpack.c.l.b16 %v1073
        %v3122 = vunpack.c.l.b16 %v1074
        %v3123 = vunpack.c.l.b16 %v1075
        %v3124 = vunpack.c.l.b16 %v1076
        %v3125 = vunpack.c.l.b16 %v1077
        %v3126 = vunpack.c.l.b16 %v1078
        %v3127 = vunpack.c.l.b16 %v1079
        %v3128 = vunpack.c.l.b16 %v1080
        %v3129 = vunpack.c.l.b16 %v1081
        %v3130 = vunpack.c.l.b16 %v1082
        %v3131 = vunpack.c.l.b16 %v1083
        %v3132 = vunpack.c.l.b16 %v1084
        %v3133 = vunpack.c.l.b16 %v1085
        %v3134 = vunpack.c.l.b16 %v1086
        %v3135 = vunpack.c.l.b16 %v1087
        %v3136 = vunpack.c.l.b16 %v1088
        %v3137 = vunpack.c.l.b16 %v1089
        %v3138 = vunpack.c.l.b16 %v1090
        %v3139 = vunpack.c.l.b16 %v1091
        %v3140 = vunpack.c.l.b16 %v1092
        %v3141 = vunpack.c.l.b16 %v1093
        %v3142 = vunpack.c.l.b16 %v1094
        %v3143 = vunpack.c.l.b16 %v1095
        %v3144 = vunpack.c.l.b16 %v1096
        %v3145 = vunpack.c.l.b16 %v1097
        %v3146 = vunpack.c.l.b16 %v1098
        %v3147 = vunpack.c.l.b16 %v1099
        %v3148 = vunpack.c.l.b16 %v1100
        %v3149 = vunpack.c.l.b16 %v1101
        %v3150 = vunpack.c.l.b16 %v1102
        %v3151 = vunpack.c.l.b16 %v1103
        %v3152 = vunpack.c.l.b16 %v1104
        %v3153 = vunpack.c.l.b16 %v1105
        %v3154 = vunpack.c.l.b16 %v1106
        %v3155 = vunpack.c.l.b16 %v1107
        %v3156 = vunpack.c.l.b16 %v1108
        %v3157 = vunpack.c.l.b16 %v1109
        %v3158 = vunpack.c.l.b16 %v1110
        %v3159 = vunpack.c.l.b16 %v1111
        %v3160 = vunpack.c.l.b16 %v1112
        %v3161 = vunpack.c.l.b16 %v1113
        %v3162 = vunpack.c.l.b16 %v1114
        %v3163 = vunpack.c.l.b16 %v1115
        %v3164 = vunpack.c.l.b16 %v1116
        %v3165 = vunpack.c.l.b16 %v1117
        %v3166 = vunpack.c.l.b16 %v1118
        %v3167 = vunpack.c.l.b16 %v1119
        %v3168 = vunpack.c.l.b16 %v1120
        %v3169 = vunpack.c.l.b16 %v1121
        %v3170 = vunpack.c.l.b16 %v1122
        %v3171 = vunpack.c.l.b16 %v1123
        %v3172 = vunpack.c.l.b16 %v1124
        %v3173 = vunpack.c.l.b16 %v1125
        %v3174 = vunpack.c.l.b16 %v1126
        %v3175 = vunpack.c.l.b16 %v1127
        %v3176 = vunpack.c.l.b16 %v1128
        %v3177 = vunpack.c.l.b16 %v1129
        %v3178 = vunpack.c.l.b16 %v1130
        %v3179 = vunpack.c.l.b16 %v1131
        %v3180 = vunpack.c.l.b16 %v1132
        %v3181 = vunpack.c.l.b16 %v1133
        %v3182 = vunpack.c.l.b16 %v1134
        %v3183 = vunpack.c.l.b16 %v1135
        %v3184 = vunpack.c.l.b16 %v1136
        %v3185 = vunpack.c.l.b16 %v1137
        %v3186 = vunpack.c.l.b16 %v1138
        %v3187 = vunpack.c.l.b16 %v1139
        %v3188 = vunpack.c.l.b16 %v1140
        %v3189 = vunpack.c.l.b16 %v1141
        %v3190 = vunpack.c.l.b16 %v1142
        %v3191 = vunpack.c.l.b16 %v1143
        %v3192 = vunpack.c.l.b16 %v1144
        %v3193 = vunpack.c.l.b16 %v1145
        %v3194 = vunpack.c.l.b16 %v1146
        %v3195 = vunpack.c.l.b16 %v1147
        %v3196 = vunpack.c.l.b16 %v1148
        %v3197 = vunpack.c.l.b16 %v1149
        %v3198 = vunpack.c.l.b16 %v1150
        %v3199 = vunpack.c.l.b16 %v1151
        %v3200 = vunpack.c.l.b16 %v1152
        %v3201 = vunpack.c.l.b16 %v1153
        %v3202 = vunpack.c.l.b16 %v1154
        %v3203 = vunpack.c.l.b16 %v1155
        %v3204 = vunpack.c.l.b16 %v1156
        %v3205 = vunpack.c.l.b16 %v1157
        %v3206 = vunpack.c.l.b16 %v1158
        %v3207 = vunpack.c.l.b16 %v1159
        %v3208 = vunpack.c.l.b16 %v1160
        %v3209 = vunpack.c.l.b16 %v1161
        %v3210 = vunpack.c.l.b16 %v1162
        %v3211 = vunpack.c.l.b16 %v1163
        %v3212 = vunpack.c.l.b16 %v1164
        %v3213 = vunpack.c.l.b16 %v1165
        %v3214 = vunpack.c.l.b16 %v1166
        %v3215 = vunpack.c.l.b16 %v1167
        %v3216 = vunpack.c.l.b16 %v1168
        %v3217 = vunpack.c.l.b16 %v1169
        %v3218 = vunpack.c.l.b16 %v1170
        %v3219 = vunpack.c.l.b16 %v1171
        %v3220 = vunpack.c.l.b16 %v1172
        %v3221 = vunpack.c.l.b16 %v1173
        %v3222 = vunpack.c.l.b16 %v1174
        %v3223 = vunpack.c.l.b16 %v1175
        %v3224 = vunpack.c.l.b16 %v1176
        %v3225 = vunpack.c.l.b16 %v1177
        %v3226 = vunpack.c.l.b16 %v1178
        %v3227 = vunpack.c.l.b16 %v1179
        %v3228 = vunpack.c.l.b16 %v1180
        %v3229 = vunpack.c.l.b16 %v1181
        %v3230 = vunpack.c.l.b16 %v1182
        %v3231 = vunpack.c.l.b16 %v1183
        %v3232 = vunpack.c.l.b16 %v1184
        %v3233 = vunpack.c.l.b16 %v1185
        %v3234 = vunpack.c.l.b16 %v1186
        %v3235 = vunpack.c.l.b16 %v1187
        %v3236 = vunpack.c.l.b16 %v1188
        %v3237 = vunpack.c.l.b16 %v1189
        %v3238 = vunpack.c.l.b16 %v1190
        %v3239 = vunpack.c.l.b16 %v1191
        %v3240 = vunpack.c.l.b16 %v1192
        %v3241 = vunpack.c.l.b16 %v1193
        %v3242 = vunpack.c.l.b16 %v1194
        %v3243 = vunpack.c.l.b16 %v1195
        %v3244 = vunpack.c.l.b16 %v1196
        %v3245 = vunpack.c.l.b16 %v1197
        %v3246 = vunpack.c.l.b16 %v1198
        %v3247 = vunpack.c.l.b16 %v1199
        %v3248 = vunpack.c.l.b16 %v1200
        %v3249 = vunpack.c.l.b16 %v1201
        %v3250 = vunpack.c.l.b16 %v1202
        %v3251 = vunpack.c.l.b16 %v1203
        %v3252 = vunpack.c.l.b16 %v1204
        %v3253 = vunpack.c.l.b16 %v1205
        %v3254 = vunpack.c.l.b16 %v1206
        %v3255 = vunpack.c.l.b16 %v1207
        %v3256 = vunpack.c.l.b16 %v1208
        %v3257 = vunpack.c.l.b16 %v1209
        %v3258 = vunpack.c.l.b16 %v1210
        %v3259 = vunpack.c.l.b16 %v1211
        %v3260 = vunpack.c.l.b16 %v1212
        %v3261 = vunpack.c.l.b16 %v1213
        %v3262 = vunpack.c.l.b16 %v1214
        %v3263 = vunpack.c.l.b16 %v1215
        %v3264 = vunpack.c.l.b16 %v1216
        %v3265 = vunpack.c.l.b16 %v1217
        %v3266 = vunpack.c.l.b16 %v1218
        %v3267 = vunpack.c.l.b16 %v1219
        %v3268 = vunpack.c.l.b16 %v1220
        %v3269 = vunpack.c.l.b16 %v1221
        %v3270 = vunpack.c.l.b16 %v1222
        %v3271 = vunpack.c.l.b16 %v1223
        %v3272 = vunpack.c.l.b16 %v1224
        %v3273 = vunpack.c.l.b16 %v1225
        %v3274 = vunpack.c.l.b16 %v1226
        %v3275 = vunpack.c.l.b16 %v1227
        %v3276 = vunpack.c.l.b16 %v1228
        %v3277 = vunpack.c.l.b16 %v1229
        %v3278 = vunpack.c.l.b16 %v1230
        %v3279 = vunpack.c.l.b16 %v1231
        %v3280 = vunpack.c.l.b16 %v1232
        %v3281 = vunpack.c.l.b16 %v1233
        %v3282 = vunpack.c.l.b16 %v1234
        %v3283 = vunpack.c.l.b16 %v1235
        %v3284 = vunpack.c.l.b16 %v1236
        %v3285 = vunpack.c.l.b16 %v1237
        %v3286 = vunpack.c.l.b16 %v1238
        %v3287 = vunpack.c.l.b16 %v1239
        %v3288 = vunpack.c.l.b16 %v1240
        %v3289 = vunpack.c.l.b16 %v1241
        %v3290 = vunpack.c.l.b16 %v1242
        %v3291 = vunpack.c.l.b16 %v1243
        %v3292 = vunpack.c.l.b16 %v1244
        %v3293 = vunpack.c.l.b16 %v1245
        %v3294 = vunpack.c.l.b16 %v1246
        %v3295 = vunpack.c.l.b16 %v1247
        %v3296 = vunpack.c.l.b16 %v1248
        %v3297 = vunpack.c.l.b16 %v1249
        %v3298 = vunpack.c.l.b16 %v1250
        %v3299 = vunpack.c.l.b16 %v1251
        %v3300 = vunpack.c.l.b16 %v1252
        %v3301 = vunpack.c.l.b16 %v1253
        %v3302 = vunpack.c.l.b16 %v1254
        %v3303 = vunpack.c.l.b16 %v1255
        %v3304 = vunpack.c.l.b16 %v1256
        %v3305 = vunpack.c.l.b16 %v1257
        %v3306 = vunpack.c.l.b16 %v1258
        %v3307 = vunpack.c.l.b16 %v1259
        %v3308 = vunpack.c.l.b16 %v1260
        %v3309 = vunpack.c.l.b16 %v1261
        %v3310 = vunpack.c.l.b16 %v1262
        %v3311 = vunpack.c.l.b16 %v1263
        %v3312 = vunpack.c.l.b16 %v1264
        %v3313 = vunpack.c.l.b16 %v1265
        %v3314 = vunpack.c.l.b16 %v1266
        %v3315 = vunpack.c.l.b16 %v1267
        %v3316 = vunpack.c.l.b16 %v1268
        %v3317 = vunpack.c.l.b16 %v1269
        %v3318 = vunpack.c.l.b16 %v1270
        %v3319 = vunpack.c.l.b16 %v1271
        %v3320 = vunpack.c.l.b16 %v1272
        %v3321 = vunpack.c.l.b16 %v1273
        %v3322 = vunpack.c.l.b16 %v1274
        %v3323 = vunpack.c.l.b16 %v1275
        %v3324 = vunpack.c.l.b16 %v1276
        %v3325 = vunpack.c.l.b16 %v1277
        %v3326 = vunpack.c.l.b16 %v1278
        %v3327 = vunpack.c.l.b16 %v1279
        %v3328 = vunpack.c.l.b16 %v1280
        %v3329 = vunpack.c.l.b16 %v1281
        %v3330 = vunpack.c.l.b16 %v1282
        %v3331 = vunpack.c.l.b16 %v1283
        %v3332 = vunpack.c.l.b16 %v1284
        %v3333 = vunpack.c.l.b16 %v1285
        %v3334 = vunpack.c.l.b16 %v1286
        %v3335 = vunpack.c.l.b16 %v1287
        %v3336 = vunpack.c.l.b16 %v1288
        %v3337 = vunpack.c.l.b16 %v1289
        %v3338 = vunpack.c.l.b16 %v1290
        %v3339 = vunpack.c.l.b16 %v1291
        %v3340 = vunpack.c.l.b16 %v1292
        %v3341 = vunpack.c.l.b16 %v1293
        %v3342 = vunpack.c.l.b16 %v1294
        %v3343 = vunpack.c.l.b16 %v1295
        %v3344 = vunpack.c.l.b16 %v1296
        %v3345 = vunpack.c.l.b16 %v1297
        %v3346 = vunpack.c.l.b16 %v1298
        %v3347 = vunpack.c.l.b16 %v1299
        %v3348 = vunpack.c.l.b16 %v1300
        %v3349 = vunpack.c.l.b16 %v1301
        %v3350 = vunpack.c.l.b16 %v1302
        %v3351 = vunpack.c.l.b16 %v1303
        %v3352 = vunpack.c.l.b16 %v1304
        %v3353 = vunpack.c.l.b16 %v1305
        %v3354 = vunpack.c.l.b16 %v1306
        %v3355 = vunpack.c.l.b16 %v1307
        %v3356 = vunpack.c.l.b16 %v1308
        %v3357 = vunpack.c.l.b16 %v1309
        %v3358 = vunpack.c.l.b16 %v1310
        %v3359 = vunpack.c.l.b16 %v1311
        %v3360 = vunpack.c.l.b16 %v1312
        %v3361 = vunpack.c.l.b16 %v1313
        %v3362 = vunpack.c.l.b16 %v1314
        %v3363 = vunpack.c.l.b16 %v1315
        %v3364 = vunpack.c.l.b16 %v1316
        %v3365 = vunpack.c.l.b16 %v1317
        %v3366 = vunpack.c.l.b16 %v1318
        %v3367 = vunpack.c.l.b16 %v1319
        %v3368 = vunpack.c.l.b16 %v1320
        %v3369 = vunpack.c.l.b16 %v1321
        %v3370 = vunpack.c.l.b16 %v1322
        %v3371 = vunpack.c.l.b16 %v1323
        %v3372 = vunpack.c.l.b16 %v1324
        %v3373 = vunpack.c.l.b16 %v1325
        %v3374 = vunpack.c.l.b16 %v1326
        %v3375 = vunpack.c.l.b16 %v1327
        %v3376 = vunpack.c.l.b16 %v1328
        %v3377 = vunpack.c.l.b16 %v1329
        %v3378 = vunpack.c.l.b16 %v1330
        %v3379 = vunpack.c.l.b16 %v1331
        %v3380 = vunpack.c.l.b16 %v1332
        %v3381 = vunpack.c.l.b16 %v1333
        %v3382 = vunpack.c.l.b16 %v1334
        %v3383 = vunpack.c.l.b16 %v1335
        %v3384 = vunpack.c.l.b16 %v1336
        %v3385 = vunpack.c.l.b16 %v1337
        %v3386 = vunpack.c.l.b16 %v1338
        %v3387 = vunpack.c.l.b16 %v1339
        %v3388 = vunpack.c.l.b16 %v1340
        %v3389 = vunpack.c.l.b16 %v1341
        %v3390 = vunpack.c.l.b16 %v1342
        %v3391 = vunpack.c.l.b16 %v1343
        %v3392 = vunpack.c.l.b16 %v1344
        %v3393 = vunpack.c.l.b16 %v1345
        %v3394 = vunpack.c.l.b16 %v1346
        %v3395 = vunpack.c.l.b16 %v1347
        %v3396 = vunpack.c.l.b16 %v1348
        %v3397 = vunpack.c.l.b16 %v1349
        %v3398 = vunpack.c.l.b16 %v1350
        %v3399 = vunpack.c.l.b16 %v1351
        %v3400 = vunpack.c.l.b16 %v1352
        %v3401 = vunpack.c.l.b16 %v1353
        %v3402 = vunpack.c.l.b16 %v1354
        %v3403 = vunpack.c.l.b16 %v1355
        %v3404 = vunpack.c.l.b16 %v1356
        %v3405 = vunpack.c.l.b16 %v1357
        %v3406 = vunpack.c.l.b16 %v1358
        %v3407 = vunpack.c.l.b16 %v1359
        %v3408 = vunpack.c.l.b16 %v1360
        %v3409 = vunpack.c.l.b16 %v1361
        %v3410 = vunpack.c.l.b16 %v1362
        %v3411 = vunpack.c.l.b16 %v1363
        %v3412 = vunpack.c.l.b16 %v1364
        %v3413 = vunpack.c.l.b16 %v1365
        %v3414 = vunpack.c.l.b16 %v1366
        %v3415 = vunpack.c.l.b16 %v1367
        %v3416 = vunpack.c.l.b16 %v1368
        %v3417 = vunpack.c.l.b16 %v1369
        %v3418 = vunpack.c.l.b16 %v1370
        %v3419 = vunpack.c.l.b16 %v1371
        %v3420 = vunpack.c.l.b16 %v1372
        %v3421 = vunpack.c.l.b16 %v1373
        %v3422 = vunpack.c.l.b16 %v1374
        %v3423 = vunpack.c.l.b16 %v1375
        %v3424 = vunpack.c.l.b16 %v1376
        %v3425 = vunpack.c.l.b16 %v1377
        %v3426 = vunpack.c.l.b16 %v1378
        %v3427 = vunpack.c.l.b16 %v1379
        %v3428 = vunpack.c.l.b16 %v1380
        %v3429 = vunpack.c.l.b16 %v1381
        %v3430 = vunpack.c.l.b16 %v1382
        %v3431 = vunpack.c.l.b16 %v1383
        %v3432 = vunpack.c.l.b16 %v1384
        %v3433 = vunpack.c.l.b16 %v1385
        %v3434 = vunpack.c.l.b16 %v1386
        %v3435 = vunpack.c.l.b16 %v1387
        %v3436 = vunpack.c.l.b16 %v1388
        %v3437 = vunpack.c.l.b16 %v1389
        %v3438 = vunpack.c.l.b16 %v1390
        %v3439 = vunpack.c.l.b16 %v1391
        %v3440 = vunpack.c.l.b16 %v1392
        %v3441 = vunpack.c.l.b16 %v1393
        %v3442 = vunpack.c.l.b16 %v1394
        %v3443 = vunpack.c.l.b16 %v1395
        %v3444 = vunpack.c.l.b16 %v1396
        %v3445 = vunpack.c.l.b16 %v1397
        %v3446 = vunpack.c.l.b16 %v1398
        %v3447 = vunpack.c.l.b16 %v1399
        %v3448 = vunpack.c.l.b16 %v1400
        %v3449 = vunpack.c.l.b16 %v1401
        %v3450 = vunpack.c.l.b16 %v1402
        %v3451 = vunpack.c.l.b16 %v1403
        %v3452 = vunpack.c.l.b16 %v1404
        %v3453 = vunpack.c.l.b16 %v1405
        %v3454 = vunpack.c.l.b16 %v1406
        %v3455 = vunpack.c.l.b16 %v1407
        %v3456 = vunpack.c.l.b16 %v1408
        %v3457 = vunpack.c.l.b16 %v1409
        %v3458 = vunpack.c.l.b16 %v1410
        %v3459 = vunpack.c.l.b16 %v1411
        %v3460 = vunpack.c.l.b16 %v1412
        %v3461 = vunpack.c.l.b16 %v1413
        %v3462 = vunpack.c.l.b16 %v1414
        %v3463 = vunpack.c.l.b16 %v1415
        %v3464 = vunpack.c.l.b16 %v1416
        %v3465 = vunpack.c.l.b16 %v1417
        %v3466 = vunpack.c.l.b16 %v1418
        %v3467 = vunpack.c.l.b16 %v1419
        %v3468 = vunpack.c.l.b16 %v1420
        %v3469 = vunpack.c.l.b16 %v1421
        %v3470 = vunpack.c.l.b16 %v1422
        %v3471 = vunpack.c.l.b16 %v1423
        %v3472 = vunpack.c.l.b16 %v1424
        %v3473 = vunpack.c.l.b16 %v1425
        %v3474 = vunpack.c.l.b16 %v1426
        %v3475 = vunpack.c.l.b16 %v1427
        %v3476 = vunpack.c.l.b16 %v1428
        %v3477 = vunpack.c.l.b16 %v1429
        %v3478 = vunpack.c.l.b16 %v1430
        %v3479 = vunpack.c.l.b16 %v1431
        %v3480 = vunpack.c.l.b16 %v1432
        %v3481 = vunpack.c.l.b16 %v1433
        %v3482 = vunpack.c.l.b16 %v1434
        %v3483 = vunpack.c.l.b16 %v1435
        %v3484 = vunpack.c.l.b16 %v1436
        %v3485 = vunpack.c.l.b16 %v1437
        %v3486 = vunpack.c.l.b16 %v1438
        %v3487 = vunpack.c.l.b16 %v1439
        %v3488 = vunpack.c.l.b16 %v1440
        %v3489 = vunpack.c.l.b16 %v1441
        %v3490 = vunpack.c.l.b16 %v1442
        %v3491 = vunpack.c.l.b16 %v1443
        %v3492 = vunpack.c.l.b16 %v1444
        %v3493 = vunpack.c.l.b16 %v1445
        %v3494 = vunpack.c.l.b16 %v1446
        %v3495 = vunpack.c.l.b16 %v1447
        %v3496 = vunpack.c.l.b16 %v1448
        %v3497 = vunpack.c.l.b16 %v1449
        %v3498 = vunpack.c.l.b16 %v1450
        %v3499 = vunpack.c.l.b16 %v1451
        %v3500 = vunpack.c.l.b16 %v1452
        %v3501 = vunpack.c.l.b16 %v1453
        %v3502 = vunpack.c.l.b16 %v1454
        %v3503 = vunpack.c.l.b16 %v1455
        %v3504 = vunpack.c.l.b16 %v1456
        %v3505 = vunpack.c.l.b16 %v1457
        %v3506 = vunpack.c.l.b16 %v1458
        %v3507 = vunpack.c.l.b16 %v1459
        %v3508 = vunpack.c.l.b16 %v1460
        %v3509 = vunpack.c.l.b16 %v1461
        %v3510 = vunpack.c.l.b16 %v1462
        %v3511 = vunpack.c.l.b16 %v1463
        %v3512 = vunpack.c.l.b16 %v1464
        %v3513 = vunpack.c.l.b16 %v1465
        %v3514 = vunpack.c.l.b16 %v1466
        %v3515 = vunpack.c.l.b16 %v1467
        %v3516 = vunpack.c.l.b16 %v1468
        %v3517 = vunpack.c.l.b16 %v1469
        %v3518 = vunpack.c.l.b16 %v1470
        %v3519 = vunpack.c.l.b16 %v1471
        %v3520 = vunpack.c.l.b16 %v1472
        %v3521 = vunpack.c.l.b16 %v1473
        %v3522 = vunpack.c.l.b16 %v1474
        %v3523 = vunpack.c.l.b16 %v1475
        %v3524 = vunpack.c.l.b16 %v1476
        %v3525 = vunpack.c.l.b16 %v1477
        %v3526 = vunpack.c.l.b16 %v1478
        %v3527 = vunpack.c.l.b16 %v1479
        %v3528 = vunpack.c.l.b16 %v1480
        %v3529 = vunpack.c.l.b16 %v1481
        %v3530 = vunpack.c.l.b16 %v1482
        %v3531 = vunpack.c.l.b16 %v1483
        %v3532 = vunpack.c.l.b16 %v1484
        %v3533 = vunpack.c.l.b16 %v1485
        %v3534 = vunpack.c.l.b16 %v1486
        %v3535 = vunpack.c.l.b16 %v1487
        %v3536 = vunpack.c.l.b16 %v1488
        %v3537 = vunpack.c.l.b16 %v1489
        %v3538 = vunpack.c.l.b16 %v1490
        %v3539 = vunpack.c.l.b16 %v1491
        %v3540 = vunpack.c.l.b16 %v1492
        %v3541 = vunpack.c.l.b16 %v1493
        %v3542 = vunpack.c.l.b16 %v1494
        %v3543 = vunpack.c.l.b16 %v1495
        %v3544 = vunpack.c.l.b16 %v1496
        %v3545 = vunpack.c.l.b16 %v1497
        %v3546 = vunpack.c.l.b16 %v1498
        %v3547 = vunpack.c.l.b16 %v1499
        %v3548 = vunpack.c.l.b16 %v1500
        %v3549 = vunpack.c.l.b16 %v1501
        %v3550 = vunpack.c.l.b16 %v1502
        %v3551 = vunpack.c.l.b16 %v1503
        %v3552 = vunpack.c.l.b16 %v1504
        %v3553 = vunpack.c.l.b16 %v1505
        %v3554 = vunpack.c.l.b16 %v1506
        %v3555 = vunpack.c.l.b16 %v1507
        %v3556 = vunpack.c.l.b16 %v1508
        %v3557 = vunpack.c.l.b16 %v1509
        %v3558 = vunpack.c.l.b16 %v1510
        %v3559 = vunpack.c.l.b16 %v1511
        %v3560 = vunpack.c.l.b16 %v1512
        %v3561 = vunpack.c.l.b16 %v1513
        %v3562 = vunpack.c.l.b16 %v1514
        %v3563 = vunpack.c.l.b16 %v1515
        %v3564 = vunpack.c.l.b16 %v1516
        %v3565 = vunpack.c.l.b16 %v1517
        %v3566 = vunpack.c.l.b16 %v1518
        %v3567 = vunpack.c.l.b16 %v1519
        %v3568 = vunpack.c.l.b16 %v1520
        %v3569 = vunpack.c.l.b16 %v1521
        %v3570 = vunpack.c.l.b16 %v1522
        %v3571 = vunpack.c.l.b16 %v1523
        %v3572 = vunpack.c.l.b16 %v1524
        %v3573 = vunpack.c.l.b16 %v1525
        %v3574 = vunpack.c.l.b16 %v1526
        %v3575 = vunpack.c.l.b16 %v1527
        %v3576 = vunpack.c.l.b16 %v1528
        %v3577 = vunpack.c.l.b16 %v1529
        %v3578 = vunpack.c.l.b16 %v1530
        %v3579 = vunpack.c.l.b16 %v1531
        %v3580 = vunpack.c.l.b16 %v1532
        %v3581 = vunpack.c.l.b16 %v1533
        %v3582 = vunpack.c.l.b16 %v1534
        %v3583 = vunpack.c.l.b16 %v1535
        %v3584 = vunpack.c.l.b16 %v1536
        %v3585 = vunpack.c.l.b16 %v1537
        %v3586 = vunpack.c.l.b16 %v1538
        %v3587 = vunpack.c.l.b16 %v1539
        %v3588 = vunpack.c.l.b16 %v1540
        %v3589 = vunpack.c.l.b16 %v1541
        %v3590 = vunpack.c.l.b16 %v1542
        %v3591 = vunpack.c.l.b16 %v1543
        %v3592 = vunpack.c.l.b16 %v1544
        %v3593 = vunpack.c.l.b16 %v1545
        %v3594 = vunpack.c.l.b16 %v1546
        %v3595 = vunpack.c.l.b16 %v1547
        %v3596 = vunpack.c.l.b16 %v1548
        %v3597 = vunpack.c.l.b16 %v1549
        %v3598 = vunpack.c.l.b16 %v1550
        %v3599 = vunpack.c.l.b16 %v1551
        %v3600 = vunpack.c.l.b16 %v1552
        %v3601 = vunpack.c.l.b16 %v1553
        %v3602 = vunpack.c.l.b16 %v1554
        %v3603 = vunpack.c.l.b16 %v1555
        %v3604 = vunpack.c.l.b16 %v1556
        %v3605 = vunpack.c.l.b16 %v1557
        %v3606 = vunpack.c.l.b16 %v1558
        %v3607 = vunpack.c.l.b16 %v1559
        %v3608 = vunpack.c.l.b16 %v1560
        %v3609 = vunpack.c.l.b16 %v1561
        %v3610 = vunpack.c.l.b16 %v1562
        %v3611 = vunpack.c.l.b16 %v1563
        %v3612 = vunpack.c.l.b16 %v1564
        %v3613 = vunpack.c.l.b16 %v1565
        %v3614 = vunpack.c.l.b16 %v1566
        %v3615 = vunpack.c.l.b16 %v1567
        %v3616 = vunpack.c.l.b16 %v1568
        %v3617 = vunpack.c.l.b16 %v1569
        %v3618 = vunpack.c.l.b16 %v1570
        %v3619 = vunpack.c.l.b16 %v1571
        %v3620 = vunpack.c.l.b16 %v1572
        %v3621 = vunpack.c.l.b16 %v1573
        %v3622 = vunpack.c.l.b16 %v1574
        %v3623 = vunpack.c.l.b16 %v1575
        %v3624 = vunpack.c.l.b16 %v1576
        %v3625 = vunpack.c.l.b16 %v1577
        %v3626 = vunpack.c.l.b16 %v1578
        %v3627 = vunpack.c.l.b16 %v1579
        %v3628 = vunpack.c.l.b16 %v1580
        %v3629 = vunpack.c.l.b16 %v1581
        %v3630 = vunpack.c.l.b16 %v1582
        %v3631 = vunpack.c.l.b16 %v1583
        %v3632 = vunpack.c.l.b16 %v1584
        %v3633 = vunpack.c.l.b16 %v1585
        %v3634 = vunpack.c.l.b16 %v1586
        %v3635 = vunpack.c.l.b16 %v1587
        %v3636 = vunpack.c.l.b16 %v1588
        %v3637 = vunpack.c.l.b16 %v1589
        %v3638 = vunpack.c.l.b16 %v1590
        %v3639 = vunpack.c.l.b16 %v1591
        %v3640 = vunpack.c.l.b16 %v1592
        %v3641 = vunpack.c.l.b16 %v1593
        %v3642 = vunpack.c.l.b16 %v1594
        %v3643 = vunpack.c.l.b16 %v1595
        %v3644 = vunpack.c.l.b16 %v1596
        %v3645 = vunpack.c.l.b16 %v1597
        %v3646 = vunpack.c.l.b16 %v1598
        %v3647 = vunpack.c.l.b16 %v1599
        %v3648 = vunpack.c.l.b16 %v1600
        %v3649 = vunpack.c.l.b16 %v1601
        %v3650 = vunpack.c.l.b16 %v1602
        %v3651 = vunpack.c.l.b16 %v1603
        %v3652 = vunpack.c.l.b16 %v1604
        %v3653 = vunpack.c.l.b16 %v1605
        %v3654 = vunpack.c.l.b16 %v1606
        %v3655 = vunpack.c.l.b16 %v1607
        %v3656 = vunpack.c.l.b16 %v1608
        %v3657 = vunpack.c.l.b16 %v1609
        %v3658 = vunpack.c.l.b16 %v1610
        %v3659 = vunpack.c.l.b16 %v1611
        %v3660 = vunpack.c.l.b16 %v1612
        %v3661 = vunpack.c.l.b16 %v1613
        %v3662 = vunpack.c.l.b16 %v1614
        %v3663 = vunpack.c.l.b16 %v1615
        %v3664 = vunpack.c.l.b16 %v1616
        %v3665 = vunpack.c.l.b16 %v1617
        %v3666 = vunpack.c.l.b16 %v1618
        %v3667 = vunpack.c.l.b16 %v1619
        %v3668 = vunpack.c.l.b16 %v1620
        %v3669 = vunpack.c.l.b16 %v1621
        %v3670 = vunpack.c.l.b16 %v1622
        %v3671 = vunpack.c.l.b16 %v1623
        %v3672 = vunpack.c.l.b16 %v1624
        %v3673 = vunpack.c.l.b16 %v1625
        %v3674 = vunpack.c.l.b16 %v1626
        %v3675 = vunpack.c.l.b16 %v1627
        %v3676 = vunpack.c.l.b16 %v1628
        %v3677 = vunpack.c.l.b16 %v1629
        %v3678 = vunpack.c.l.b16 %v1630
        %v3679 = vunpack.c.l.b16 %v1631
        %v3680 = vunpack.c.l.b16 %v1632
        %v3681 = vunpack.c.l.b16 %v1633
        %v3682 = vunpack.c.l.b16 %v1634
        %v3683 = vunpack.c.l.b16 %v1635
        %v3684 = vunpack.c.l.b16 %v1636
        %v3685 = vunpack.c.l.b16 %v1637
        %v3686 = vunpack.c.l.b16 %v1638
        %v3687 = vunpack.c.l.b16 %v1639
        %v3688 = vunpack.c.l.b16 %v1640
        %v3689 = vunpack.c.l.b16 %v1641
        %v3690 = vunpack.c.l.b16 %v1642
        %v3691 = vunpack.c.l.b16 %v1643
        %v3692 = vunpack.c.l.b16 %v1644
        %v3693 = vunpack.c.l.b16 %v1645
        %v3694 = vunpack.c.l.b16 %v1646
        %v3695 = vunpack.c.l.b16 %v1647
        %v3696 = vunpack.c.l.b16 %v1648
        %v3697 = vunpack.c.l.b16 %v1649
        %v3698 = vunpack.c.l.b16 %v1650
        %v3699 = vunpack.c.l.b16 %v1651
        %v3700 = vunpack.c.l.b16 %v1652
        %v3701 = vunpack.c.l.b16 %v1653
        %v3702 = vunpack.c.l.b16 %v1654
        %v3703 = vunpack.c.l.b16 %v1655
        %v3704 = vunpack.c.l.b16 %v1656
        %v3705 = vunpack.c.l.b16 %v1657
        %v3706 = vunpack.c.l.b16 %v1658
        %v3707 = vunpack.c.l.b16 %v1659
        %v3708 = vunpack.c.l.b16 %v1660
        %v3709 = vunpack.c.l.b16 %v1661
        %v3710 = vunpack.c.l.b16 %v1662
        %v3711 = vunpack.c.l.b16 %v1663
        %v3712 = vunpack.c.l.b16 %v1664
        %v3713 = vunpack.c.l.b16 %v1665
        %v3714 = vunpack.c.l.b16 %v1666
        %v3715 = vunpack.c.l.b16 %v1667
        %v3716 = vunpack.c.l.b16 %v1668
        %v3717 = vunpack.c.l.b16 %v1669
        %v3718 = vunpack.c.l.b16 %v1670
        %v3719 = vunpack.c.l.b16 %v1671
        %v3720 = vunpack.c.l.b16 %v1672
        %v3721 = vunpack.c.l.b16 %v1673
        %v3722 = vunpack.c.l.b16 %v1674
        %v3723 = vunpack.c.l.b16 %v1675
        %v3724 = vunpack.c.l.b16 %v1676
        %v3725 = vunpack.c.l.b16 %v1677
        %v3726 = vunpack.c.l.b16 %v1678
        %v3727 = vunpack.c.l.b16 %v1679
        %v3728 = vunpack.c.l.b16 %v1680
        %v3729 = vunpack.c.l.b16 %v1681
        %v3730 = vunpack.c.l.b16 %v1682
        %v3731 = vunpack.c.l.b16 %v1683
        %v3732 = vunpack.c.l.b16 %v1684
        %v3733 = vunpack.c.l.b16 %v1685
        %v3734 = vunpack.c.l.b16 %v1686
        %v3735 = vunpack.c.l.b16 %v1687
        %v3736 = vunpack.c.l.b16 %v1688
        %v3737 = vunpack.c.l.b16 %v1689
        %v3738 = vunpack.c.l.b16 %v1690
        %v3739 = vunpack.c.l.b16 %v1691
        %v3740 = vunpack.c.l.b16 %v1692
        %v3741 = vunpack.c.l.b16 %v1693
        %v3742 = vunpack.c.l.b16 %v1694
        %v3743 = vunpack.c.l.b16 %v1695
        %v3744 = vunpack.c.l.b16 %v1696
        %v3745 = vunpack.c.l.b16 %v1697
        %v3746 = vunpack.c.l.b16 %v1698
        %v3747 = vunpack.c.l.b16 %v1699
        %v3748 = vunpack.c.l.b16 %v1700
        %v3749 = vunpack.c.l.b16 %v1701
        %v3750 = vunpack.c.l.b16 %v1702
        %v3751 = vunpack.c.l.b16 %v1703
        %v3752 = vunpack.c.l.b16 %v1704
        %v3753 = vunpack.c.l.b16 %v1705
        %v3754 = vunpack.c.l.b16 %v1706
        %v3755 = vunpack.c.l.b16 %v1707
        %v3756 = vunpack.c.l.b16 %v1708
        %v3757 = vunpack.c.l.b16 %v1709
        %v3758 = vunpack.c.l.b16 %v1710
        %v3759 = vunpack.c.l.b16 %v1711
        %v3760 = vunpack.c.l.b16 %v1712
        %v3761 = vunpack.c.l.b16 %v1713
        %v3762 = vunpack.c.l.b16 %v1714
        %v3763 = vunpack.c.l.b16 %v1715
        %v3764 = vunpack.c.l.b16 %v1716
        %v3765 = vunpack.c.l.b16 %v1717
        %v3766 = vunpack.c.l.b16 %v1718
        %v3767 = vunpack.c.l.b16 %v1719
        %v3768 = vunpack.c.l.b16 %v1720
        %v3769 = vunpack.c.l.b16 %v1721
        %v3770 = vunpack.c.l.b16 %v1722
        %v3771 = vunpack.c.l.b16 %v1723
        %v3772 = vunpack.c.l.b16 %v1724
        %v3773 = vunpack.c.l.b16 %v1725
        %v3774 = vunpack.c.l.b16 %v1726
        %v3775 = vunpack.c.l.b16 %v1727
        %v3776 = vunpack.c.l.b16 %v1728
        %v3777 = vunpack.c.l.b16 %v1729
        %v3778 = vunpack.c.l.b16 %v1730
        %v3779 = vunpack.c.l.b16 %v1731
        %v3780 = vunpack.c.l.b16 %v1732
        %v3781 = vunpack.c.l.b16 %v1733
        %v3782 = vunpack.c.l.b16 %v1734
        %v3783 = vunpack.c.l.b16 %v1735
        %v3784 = vunpack.c.l.b16 %v1736
        %v3785 = vunpack.c.l.b16 %v1737
        %v3786 = vunpack.c.l.b16 %v1738
        %v3787 = vunpack.c.l.b16 %v1739
        %v3788 = vunpack.c.l.b16 %v1740
        %v3789 = vunpack.c.l.b16 %v1741
        %v3790 = vunpack.c.l.b16 %v1742
        %v3791 = vunpack.c.l.b16 %v1743
        %v3792 = vunpack.c.l.b16 %v1744
        %v3793 = vunpack.c.l.b16 %v1745
        %v3794 = vunpack.c.l.b16 %v1746
        %v3795 = vunpack.c.l.b16 %v1747
        %v3796 = vunpack.c.l.b16 %v1748
        %v3797 = vunpack.c.l.b16 %v1749
        %v3798 = vunpack.c.l.b16 %v1750
        %v3799 = vunpack.c.l.b16 %v1751
        %v3800 = vunpack.c.l.b16 %v1752
        %v3801 = vunpack.c.l.b16 %v1753
        %v3802 = vunpack.c.l.b16 %v1754
        %v3803 = vunpack.c.l.b16 %v1755
        %v3804 = vunpack.c.l.b16 %v1756
        %v3805 = vunpack.c.l.b16 %v1757
        %v3806 = vunpack.c.l.b16 %v1758
        %v3807 = vunpack.c.l.b16 %v1759
        %v3808 = vunpack.c.l.b16 %v1760
        %v3809 = vunpack.c.l.b16 %v1761
        %v3810 = vunpack.c.l.b16 %v1762
        %v3811 = vunpack.c.l.b16 %v1763
        %v3812 = vunpack.c.l.b16 %v1764
        %v3813 = vunpack.c.l.b16 %v1765
        %v3814 = vunpack.c.l.b16 %v1766
        %v3815 = vunpack.c.l.b16 %v1767
        %v3816 = vunpack.c.l.b16 %v1768
        %v3817 = vunpack.c.l.b16 %v1769
        %v3818 = vunpack.c.l.b16 %v1770
        %v3819 = vunpack.c.l.b16 %v1771
        %v3820 = vunpack.c.l.b16 %v1772
        %v3821 = vunpack.c.l.b16 %v1773
        %v3822 = vunpack.c.l.b16 %v1774
        %v3823 = vunpack.c.l.b16 %v1775
        %v3824 = vunpack.c.l.b16 %v1776
        %v3825 = vunpack.c.l.b16 %v1777
        %v3826 = vunpack.c.l.b16 %v1778
        %v3827 = vunpack.c.l.b16 %v1779
        %v3828 = vunpack.c.l.b16 %v1780
        %v3829 = vunpack.c.l.b16 %v1781
        %v3830 = vunpack.c.l.b16 %v1782
        %v3831 = vunpack.c.l.b16 %v1783
        %v3832 = vunpack.c.l.b16 %v1784
        %v3833 = vunpack.c.l.b16 %v1785
        %v3834 = vunpack.c.l.b16 %v1786
        %v3835 = vunpack.c.l.b16 %v1787
        %v3836 = vunpack.c.l.b16 %v1788
        %v3837 = vunpack.c.l.b16 %v1789
        %v3838 = vunpack.c.l.b16 %v1790
        %v3839 = vunpack.c.l.b16 %v1791
        %v3840 = vunpack.c.l.b16 %v1792
        %v3841 = vunpack.c.l.b16 %v1793
        %v3842 = vunpack.c.l.b16 %v1794
        %v3843 = vunpack.c.l.b16 %v1795
        %v3844 = vunpack.c.l.b16 %v1796
        %v3845 = vunpack.c.l.b16 %v1797
        %v3846 = vunpack.c.l.b16 %v1798
        %v3847 = vunpack.c.l.b16 %v1799
        %v3848 = vunpack.c.l.b16 %v1800
        %v3849 = vunpack.c.l.b16 %v1801
        %v3850 = vunpack.c.l.b16 %v1802
        %v3851 = vunpack.c.l.b16 %v1803
        %v3852 = vunpack.c.l.b16 %v1804
        %v3853 = vunpack.c.l.b16 %v1805
        %v3854 = vunpack.c.l.b16 %v1806
        %v3855 = vunpack.c.l.b16 %v1807
        %v3856 = vunpack.c.l.b16 %v1808
        %v3857 = vunpack.c.l.b16 %v1809
        %v3858 = vunpack.c.l.b16 %v1810
        %v3859 = vunpack.c.l.b16 %v1811
        %v3860 = vunpack.c.l.b16 %v1812
        %v3861 = vunpack.c.l.b16 %v1813
        %v3862 = vunpack.c.l.b16 %v1814
        %v3863 = vunpack.c.l.b16 %v1815
        %v3864 = vunpack.c.l.b16 %v1816
        %v3865 = vunpack.c.l.b16 %v1817
        %v3866 = vunpack.c.l.b16 %v1818
        %v3867 = vunpack.c.l.b16 %v1819
        %v3868 = vunpack.c.l.b16 %v1820
        %v3869 = vunpack.c.l.b16 %v1821
        %v3870 = vunpack.c.l.b16 %v1822
        %v3871 = vunpack.c.l.b16 %v1823
        %v3872 = vunpack.c.l.b16 %v1824
        %v3873 = vunpack.c.l.b16 %v1825
        %v3874 = vunpack.c.l.b16 %v1826
        %v3875 = vunpack.c.l.b16 %v1827
        %v3876 = vpack.c.b16 %v2853, %v2852
        %v3877 = vpack.c.b16 %v2855, %v2854
        %v3878 = vpack.c.b16 %v2857, %v2856
        %v3879 = vpack.c.b16 %v2859, %v2858
        %v3880 = vpack.c.b16 %v2861, %v2860
        %v3881 = vpack.c.b16 %v2863, %v2862
        %v3882 = vpack.c.b16 %v2865, %v2864
        %v3883 = vpack.c.b16 %v2867, %v2866
        %v3884 = vpack.c.b16 %v2869, %v2868
        %v3885 = vpack.c.b16 %v2871, %v2870
        %v3886 = vpack.c.b16 %v2873, %v2872
        %v3887 = vpack.c.b16 %v2875, %v2874
        %v3888 = vpack.c.b16 %v2877, %v2876
        %v3889 = vpack.c.b16 %v2879, %v2878
        %v3890 = vpack.c.b16 %v2881, %v2880
        %v3891 = vpack.c.b16 %v2883, %v2882
        %v3892 = vpack.c.b16 %v2885, %v2884
        %v3893 = vpack.c.b16 %v2887, %v2886
        %v3894 = vpack.c.b16 %v2889, %v2888
        %v3895 = vpack.c.b16 %v2891, %v2890
        %v3896 = vpack.c.b16 %v2893, %v2892
        %v3897 = vpack.c.b16 %v2895, %v2894
        %v3898 = vpack.c.b16 %v2897, %v2896
        %v3899 = vpack.c.b16 %v2899, %v2898
        %v3900 = vpack.c.b16 %v2901, %v2900
        %v3901 = vpack.c.b16 %v2903, %v2902
        %v3902 = vpack.c.b16 %v2905, %v2904
        %v3903 = vpack.c.b16 %v2907, %v2906
        %v3904 = vpack.c.b16 %v2909, %v2908
        %v3905 = vpack.c.b16 %v2911, %v2910
        %v3906 = vpack.c.b16 %v2913, %v2912
        %v3907 = vpack.c.b16 %v2915, %v2914
        %v3908 = vpack.c.b16 %v2917, %v2916
        %v3909 = vpack.c.b16 %v2919, %v2918
        %v3910 = vpack.c.b16 %v2921, %v2920
        %v3911 = vpack.c.b16 %v2923, %v2922
        %v3912 = vpack.c.b16 %v2925, %v2924
        %v3913 = vpack.c.b16 %v2927, %v2926
        %v3914 = vpack.c.b16 %v2929, %v2928
        %v3915 = vpack.c.b16 %v2931, %v2930
        %v3916 = vpack.c.b16 %v2933, %v2932
        %v3917 = vpack.c.b16 %v2935, %v2934
        %v3918 = vpack.c.b16 %v2937, %v2936
        %v3919 = vpack.c.b16 %v2939, %v2938
        %v3920 = vpack.c.b16 %v2941, %v2940
        %v3921 = vpack.c.b16 %v2943, %v2942
        %v3922 = vpack.c.b16 %v2945, %v2944
        %v3923 = vpack.c.b16 %v2947, %v2946
        %v3924 = vpack.c.b16 %v2949, %v2948
        %v3925 = vpack.c.b16 %v2951, %v2950
        %v3926 = vpack.c.b16 %v2953, %v2952
        %v3927 = vpack.c.b16 %v2955, %v2954
        %v3928 = vpack.c.b16 %v2957, %v2956
        %v3929 = vpack.c.b16 %v2959, %v2958
        %v3930 = vpack.c.b16 %v2961, %v2960
        %v3931 = vpack.c.b16 %v2963, %v2962
        %v3932 = vpack.c.b16 %v2965, %v2964
        %v3933 = vpack.c.b16 %v2967, %v2966
        %v3934 = vpack.c.b16 %v2969, %v2968
        %v3935 = vpack.c.b16 %v2971, %v2970
        %v3936 = vpack.c.b16 %v2973, %v2972
        %v3937 = vpack.c.b16 %v2975, %v2974
        %v3938 = vpack.c.b16 %v2977, %v2976
        %v3939 = vpack.c.b16 %v2979, %v2978
        %v3940 = vpack.c.b16 %v2981, %v2980
        %v3941 = vpack.c.b16 %v2983, %v2982
        %v3942 = vpack.c.b16 %v2985, %v2984
        %v3943 = vpack.c.b16 %v2987, %v2986
        %v3944 = vpack.c.b16 %v2989, %v2988
        %v3945 = vpack.c.b16 %v2991, %v2990
        %v3946 = vpack.c.b16 %v2993, %v2992
        %v3947 = vpack.c.b16 %v2995, %v2994
        %v3948 = vpack.c.b16 %v2997, %v2996
        %v3949 = vpack.c.b16 %v2999, %v2998
        %v3950 = vpack.c.b16 %v3001, %v3000
        %v3951 = vpack.c.b16 %v3003, %v3002
        %v3952 = vpack.c.b16 %v3005, %v3004
        %v3953 = vpack.c.b16 %v3007, %v3006
        %v3954 = vpack.c.b16 %v3009, %v3008
        %v3955 = vpack.c.b16 %v3011, %v3010
        %v3956 = vpack.c.b16 %v3013, %v3012
        %v3957 = vpack.c.b16 %v3015, %v3014
        %v3958 = vpack.c.b16 %v3017, %v3016
        %v3959 = vpack.c.b16 %v3019, %v3018
        %v3960 = vpack.c.b16 %v3021, %v3020
        %v3961 = vpack.c.b16 %v3023, %v3022
        %v3962 = vpack.c.b16 %v3025, %v3024
        %v3963 = vpack.c.b16 %v3027, %v3026
        %v3964 = vpack.c.b16 %v3029, %v3028
        %v3965 = vpack.c.b16 %v3031, %v3030
        %v3966 = vpack.c.b16 %v3033, %v3032
        %v3967 = vpack.c.b16 %v3035, %v3034
        %v3968 = vpack.c.b16 %v3037, %v3036
        %v3969 = vpack.c.b16 %v3039, %v3038
        %v3970 = vpack.c.b16 %v3041, %v3040
        %v3971 = vpack.c.b16 %v3043, %v3042
        %v3972 = vpack.c.b16 %v3045, %v3044
        %v3973 = vpack.c.b16 %v3047, %v3046
        %v3974 = vpack.c.b16 %v3049, %v3048
        %v3975 = vpack.c.b16 %v3051, %v3050
        %v3976 = vpack.c.b16 %v3053, %v3052
        %v3977 = vpack.c.b16 %v3055, %v3054
        %v3978 = vpack.c.b16 %v3057, %v3056
        %v3979 = vpack.c.b16 %v3059, %v3058
        %v3980 = vpack.c.b16 %v3061, %v3060
        %v3981 = vpack.c.b16 %v3063, %v3062
        %v3982 = vpack.c.b16 %v3065, %v3064
        %v3983 = vpack.c.b16 %v3067, %v3066
        %v3984 = vpack.c.b16 %v3069, %v3068
        %v3985 = vpack.c.b16 %v3071, %v3070
        %v3986 = vpack.c.b16 %v3073, %v3072
        %v3987 = vpack.c.b16 %v3075, %v3074
        %v3988 = vpack.c.b16 %v3077, %v3076
        %v3989 = vpack.c.b16 %v3079, %v3078
        %v3990 = vpack.c.b16 %v3081, %v3080
        %v3991 = vpack.c.b16 %v3083, %v3082
        %v3992 = vpack.c.b16 %v3085, %v3084
        %v3993 = vpack.c.b16 %v3087, %v3086
        %v3994 = vpack.c.b16 %v3089, %v3088
        %v3995 = vpack.c.b16 %v3091, %v3090
        %v3996 = vpack.c.b16 %v3093, %v3092
        %v3997 = vpack.c.b16 %v3095, %v3094
        %v3998 = vpack.c.b16 %v3097, %v3096
        %v3999 = vpack.c.b16 %v3099, %v3098
        %v4000 = vpack.c.b16 %v3101, %v3100
        %v4001 = vpack.c.b16 %v3103, %v3102
        %v4002 = vpack.c.b16 %v3105, %v3104
        %v4003 = vpack.c.b16 %v3107, %v3106
        %v4004 = vpack.c.b16 %v3109, %v3108
        %v4005 = vpack.c.b16 %v3111, %v3110
        %v4006 = vpack.c.b16 %v3113, %v3112
        %v4007 = vpack.c.b16 %v3115, %v3114
        %v4008 = vpack.c.b16 %v3117, %v3116
        %v4009 = vpack.c.b16 %v3119, %v3118
        %v4010 = vpack.c.b16 %v3121, %v3120
        %v4011 = vpack.c.b16 %v3123, %v3122
        %v4012 = vpack.c.b16 %v3125, %v3124
        %v4013 = vpack.c.b16 %v3127, %v3126
        %v4014 = vpack.c.b16 %v3129, %v3128
        %v4015 = vpack.c.b16 %v3131, %v3130
        %v4016 = vpack.c.b16 %v3133, %v3132
        %v4017 = vpack.c.b16 %v3135, %v3134
        %v4018 = vpack.c.b16 %v3137, %v3136
        %v4019 = vpack.c.b16 %v3139, %v3138
        %v4020 = vpack.c.b16 %v3141, %v3140
        %v4021 = vpack.c.b16 %v3143, %v3142
        %v4022 = vpack.c.b16 %v3145, %v3144
        %v4023 = vpack.c.b16 %v3147, %v3146
        %v4024 = vpack.c.b16 %v3149, %v3148
        %v4025 = vpack.c.b16 %v3151, %v3150
        %v4026 = vpack.c.b16 %v3153, %v3152
        %v4027 = vpack.c.b16 %v3155, %v3154
        %v4028 = vpack.c.b16 %v3157, %v3156
        %v4029 = vpack.c.b16 %v3159, %v3158
        %v4030 = vpack.c.b16 %v3161, %v3160
        %v4031 = vpack.c.b16 %v3163, %v3162
        %v4032 = vpack.c.b16 %v3165, %v3164
        %v4033 = vpack.c.b16 %v3167, %v3166
        %v4034 = vpack.c.b16 %v3169, %v3168
        %v4035 = vpack.c.b16 %v3171, %v3170
        %v4036 = vpack.c.b16 %v3173, %v3172
        %v4037 = vpack.c.b16 %v3175, %v3174
        %v4038 = vpack.c.b16 %v3177, %v3176
        %v4039 = vpack.c.b16 %v3179, %v3178
        %v4040 = vpack.c.b16 %v3181, %v3180
        %v4041 = vpack.c.b16 %v3183, %v3182
        %v4042 = vpack.c.b16 %v3185, %v3184
        %v4043 = vpack.c.b16 %v3187, %v3186
        %v4044 = vpack.c.b16 %v3189, %v3188
        %v4045 = vpack.c.b16 %v3191, %v3190
        %v4046 = vpack.c.b16 %v3193, %v3192
        %v4047 = vpack.c.b16 %v3195, %v3194
        %v4048 = vpack.c.b16 %v3197, %v3196
        %v4049 = vpack.c.b16 %v3199, %v3198
        %v4050 = vpack.c.b16 %v3201, %v3200
        %v4051 = vpack.c.b16 %v3203, %v3202
        %v4052 = vpack.c.b16 %v3205, %v3204
        %v4053 = vpack.c.b16 %v3207, %v3206
        %v4054 = vpack.c.b16 %v3209, %v3208
        %v4055 = vpack.c.b16 %v3211, %v3210
        %v4056 = vpack.c.b16 %v3213, %v3212
        %v4057 = vpack.c.b16 %v3215, %v3214
        %v4058 = vpack.c.b16 %v3217, %v3216
        %v4059 = vpack.c.b16 %v3219, %v3218
        %v4060 = vpack.c.b16 %v3221, %v3220
        %v4061 = vpack.c.b16 %v3223, %v3222
        %v4062 = vpack.c.b16 %v3225, %v3224
        %v4063 = vpack.c.b16 %v3227, %v3226
        %v4064 = vpack.c.b16 %v3229, %v3228
        %v4065 = vpack.c.b16 %v3231, %v3230
        %v4066 = vpack.c.b16 %v3233, %v3232
        %v4067 = vpack.c.b16 %v3235, %v3234
        %v4068 = vpack.c.b16 %v3237, %v3236
        %v4069 = vpack.c.b16 %v3239, %v3238
        %v4070 = vpack.c.b16 %v3241, %v3240
        %v4071 = vpack.c.b16 %v3243, %v3242
        %v4072 = vpack.c.b16 %v3245, %v3244
        %v4073 = vpack.c.b16 %v3247, %v3246
        %v4074 = vpack.c.b16 %v3249, %v3248
        %v4075 = vpack.c.b16 %v3251, %v3250
        %v4076 = vpack.c.b16 %v3253, %v3252
        %v4077 = vpack.c.b16 %v3255, %v3254
        %v4078 = vpack.c.b16 %v3257, %v3256
        %v4079 = vpack.c.b16 %v3259, %v3258
        %v4080 = vpack.c.b16 %v3261, %v3260
        %v4081 = vpack.c.b16 %v3263, %v3262
        %v4082 = vpack.c.b16 %v3265, %v3264
        %v4083 = vpack.c.b16 %v3267, %v3266
        %v4084 = vpack.c.b16 %v3269, %v3268
        %v4085 = vpack.c.b16 %v3271, %v3270
        %v4086 = vpack.c.b16 %v3273, %v3272
        %v4087 = vpack.c.b16 %v3275, %v3274
        %v4088 = vpack.c.b16 %v3277, %v3276
        %v4089 = vpack.c.b16 %v3279, %v3278
        %v4090 = vpack.c.b16 %v3281, %v3280
        %v4091 = vpack.c.b16 %v3283, %v3282
        %v4092 = vpack.c.b16 %v3285, %v3284
        %v4093 = vpack.c.b16 %v3287, %v3286
        %v4094 = vpack.c.b16 %v3289, %v3288
        %v4095 = vpack.c.b16 %v3291, %v3290
        %v4096 = vpack.c.b16 %v3293, %v3292
        %v4097 = vpack.c.b16 %v3295, %v3294
        %v4098 = vpack.c.b16 %v3297, %v3296
        %v4099 = vpack.c.b16 %v3299, %v3298
        %v4100 = vpack.c.b16 %v3301, %v3300
        %v4101 = vpack.c.b16 %v3303, %v3302
        %v4102 = vpack.c.b16 %v3305, %v3304
        %v4103 = vpack.c.b16 %v3307, %v3306
        %v4104 = vpack.c.b16 %v3309, %v3308
        %v4105 = vpack.c.b16 %v3311, %v3310
        %v4106 = vpack.c.b16 %v3313, %v3312
        %v4107 = vpack.c.b16 %v3315, %v3314
        %v4108 = vpack.c.b16 %v3317, %v3316
        %v4109 = vpack.c.b16 %v3319, %v3318
        %v4110 = vpack.c.b16 %v3321, %v3320
        %v4111 = vpack.c.b16 %v3323, %v3322
        %v4112 = vpack.c.b16 %v3325, %v3324
        %v4113 = vpack.c.b16 %v3327, %v3326
        %v4114 = vpack.c.b16 %v3329, %v3328
        %v4115 = vpack.c.b16 %v3331, %v3330
        %v4116 = vpack.c.b16 %v3333, %v3332
        %v4117 = vpack.c.b16 %v3335, %v3334
        %v4118 = vpack.c.b16 %v3337, %v3336
        %v4119 = vpack.c.b16 %v3339, %v3338
        %v4120 = vpack.c.b16 %v3341, %v3340
        %v4121 = vpack.c.b16 %v3343, %v3342
        %v4122 = vpack.c.b16 %v3345, %v3344
        %v4123 = vpack.c.b16 %v3347, %v3346
        %v4124 = vpack.c.b16 %v3349, %v3348
        %v4125 = vpack.c.b16 %v3351, %v3350
        %v4126 = vpack.c.b16 %v3353, %v3352
        %v4127 = vpack.c.b16 %v3355, %v3354
        %v4128 = vpack.c.b16 %v3357, %v3356
        %v4129 = vpack.c.b16 %v3359, %v3358
        %v4130 = vpack.c.b16 %v3361, %v3360
        %v4131 = vpack.c.b16 %v3363, %v3362
        %v4132 = vpack.c.b16 %v3365, %v3364
        %v4133 = vpack.c.b16 %v3367, %v3366
        %v4134 = vpack.c.b16 %v3369, %v3368
        %v4135 = vpack.c.b16 %v3371, %v3370
        %v4136 = vpack.c.b16 %v3373, %v3372
        %v4137 = vpack.c.b16 %v3375, %v3374
        %v4138 = vpack.c.b16 %v3377, %v3376
        %v4139 = vpack.c.b16 %v3379, %v3378
        %v4140 = vpack.c.b16 %v3381, %v3380
        %v4141 = vpack.c.b16 %v3383, %v3382
        %v4142 = vpack.c.b16 %v3385, %v3384
        %v4143 = vpack.c.b16 %v3387, %v3386
        %v4144 = vpack.c.b16 %v3389, %v3388
        %v4145 = vpack.c.b16 %v3391, %v3390
        %v4146 = vpack.c.b16 %v3393, %v3392
        %v4147 = vpack.c.b16 %v3395, %v3394
        %v4148 = vpack.c.b16 %v3397, %v3396
        %v4149 = vpack.c.b16 %v3399, %v3398
        %v4150 = vpack.c.b16 %v3401, %v3400
        %v4151 = vpack.c.b16 %v3403, %v3402
        %v4152 = vpack.c.b16 %v3405, %v3404
        %v4153 = vpack.c.b16 %v3407, %v3406
        %v4154 = vpack.c.b16 %v3409, %v3408
        %v4155 = vpack.c.b16 %v3411, %v3410
        %v4156 = vpack.c.b16 %v3413, %v3412
        %v4157 = vpack.c.b16 %v3415, %v3414
        %v4158 = vpack.c.b16 %v3417, %v3416
        %v4159 = vpack.c.b16 %v3419, %v3418
        %v4160 = vpack.c.b16 %v3421, %v3420
        %v4161 = vpack.c.b16 %v3423, %v3422
        %v4162 = vpack.c.b16 %v3425, %v3424
        %v4163 = vpack.c.b16 %v3427, %v3426
        %v4164 = vpack.c.b16 %v3429, %v3428
        %v4165 = vpack.c.b16 %v3431, %v3430
        %v4166 = vpack.c.b16 %v3433, %v3432
        %v4167 = vpack.c.b16 %v3435, %v3434
        %v4168 = vpack.c.b16 %v3437, %v3436
        %v4169 = vpack.c.b16 %v3439, %v3438
        %v4170 = vpack.c.b16 %v3441, %v3440
        %v4171 = vpack.c.b16 %v3443, %v3442
        %v4172 = vpack.c.b16 %v3445, %v3444
        %v4173 = vpack.c.b16 %v3447, %v3446
        %v4174 = vpack.c.b16 %v3449, %v3448
        %v4175 = vpack.c.b16 %v3451, %v3450
        %v4176 = vpack.c.b16 %v3453, %v3452
        %v4177 = vpack.c.b16 %v3455, %v3454
        %v4178 = vpack.c.b16 %v3457, %v3456
        %v4179 = vpack.c.b16 %v3459, %v3458
        %v4180 = vpack.c.b16 %v3461, %v3460
        %v4181 = vpack.c.b16 %v3463, %v3462
        %v4182 = vpack.c.b16 %v3465, %v3464
        %v4183 = vpack.c.b16 %v3467, %v3466
        %v4184 = vpack.c.b16 %v3469, %v3468
        %v4185 = vpack.c.b16 %v3471, %v3470
        %v4186 = vpack.c.b16 %v3473, %v3472
        %v4187 = vpack.c.b16 %v3475, %v3474
        %v4188 = vpack.c.b16 %v3477, %v3476
        %v4189 = vpack.c.b16 %v3479, %v3478
        %v4190 = vpack.c.b16 %v3481, %v3480
        %v4191 = vpack.c.b16 %v3483, %v3482
        %v4192 = vpack.c.b16 %v3485, %v3484
        %v4193 = vpack.c.b16 %v3487, %v3486
        %v4194 = vpack.c.b16 %v3489, %v3488
        %v4195 = vpack.c.b16 %v3491, %v3490
        %v4196 = vpack.c.b16 %v3493, %v3492
        %v4197 = vpack.c.b16 %v3495, %v3494
        %v4198 = vpack.c.b16 %v3497, %v3496
        %v4199 = vpack.c.b16 %v3499, %v3498
        %v4200 = vpack.c.b16 %v3501, %v3500
        %v4201 = vpack.c.b16 %v3503, %v3502
        %v4202 = vpack.c.b16 %v3505, %v3504
        %v4203 = vpack.c.b16 %v3507, %v3506
        %v4204 = vpack.c.b16 %v3509, %v3508
        %v4205 = vpack.c.b16 %v3511, %v3510
        %v4206 = vpack.c.b16 %v3513, %v3512
        %v4207 = vpack.c.b16 %v3515, %v3514
        %v4208 = vpack.c.b16 %v3517, %v3516
        %v4209 = vpack.c.b16 %v3519, %v3518
        %v4210 = vpack.c.b16 %v3521, %v3520
        %v4211 = vpack.c.b16 %v3523, %v3522
        %v4212 = vpack.c.b16 %v3525, %v3524
        %v4213 = vpack.c.b16 %v3527, %v3526
        %v4214 = vpack.c.b16 %v3529, %v3528
        %v4215 = vpack.c.b16 %v3531, %v3530
        %v4216 = vpack.c.b16 %v3533, %v3532
        %v4217 = vpack.c.b16 %v3535, %v3534
        %v4218 = vpack.c.b16 %v3537, %v3536
        %v4219 = vpack.c.b16 %v3539, %v3538
        %v4220 = vpack.c.b16 %v3541, %v3540
        %v4221 = vpack.c.b16 %v3543, %v3542
        %v4222 = vpack.c.b16 %v3545, %v3544
        %v4223 = vpack.c.b16 %v3547, %v3546
        %v4224 = vpack.c.b16 %v3549, %v3548
        %v4225 = vpack.c.b16 %v3551, %v3550
        %v4226 = vpack.c.b16 %v3553, %v3552
        %v4227 = vpack.c.b16 %v3555, %v3554
        %v4228 = vpack.c.b16 %v3557, %v3556
        %v4229 = vpack.c.b16 %v3559, %v3558
        %v4230 = vpack.c.b16 %v3561, %v3560
        %v4231 = vpack.c.b16 %v3563, %v3562
        %v4232 = vpack.c.b16 %v3565, %v3564
        %v4233 = vpack.c.b16 %v3567, %v3566
        %v4234 = vpack.c.b16 %v3569, %v3568
        %v4235 = vpack.c.b16 %v3571, %v3570
        %v4236 = vpack.c.b16 %v3573, %v3572
        %v4237 = vpack.c.b16 %v3575, %v3574
        %v4238 = vpack.c.b16 %v3577, %v3576
        %v4239 = vpack.c.b16 %v3579, %v3578
        %v4240 = vpack.c.b16 %v3581, %v3580
        %v4241 = vpack.c.b16 %v3583, %v3582
        %v4242 = vpack.c.b16 %v3585, %v3584
        %v4243 = vpack.c.b16 %v3587, %v3586
        %v4244 = vpack.c.b16 %v3589, %v3588
        %v4245 = vpack.c.b16 %v3591, %v3590
        %v4246 = vpack.c.b16 %v3593, %v3592
        %v4247 = vpack.c.b16 %v3595, %v3594
        %v4248 = vpack.c.b16 %v3597, %v3596
        %v4249 = vpack.c.b16 %v3599, %v3598
        %v4250 = vpack.c.b16 %v3601, %v3600
        %v4251 = vpack.c.b16 %v3603, %v3602
        %v4252 = vpack.c.b16 %v3605, %v3604
        %v4253 = vpack.c.b16 %v3607, %v3606
        %v4254 = vpack.c.b16 %v3609, %v3608
        %v4255 = vpack.c.b16 %v3611, %v3610
        %v4256 = vpack.c.b16 %v3613, %v3612
        %v4257 = vpack.c.b16 %v3615, %v3614
        %v4258 = vpack.c.b16 %v3617, %v3616
        %v4259 = vpack.c.b16 %v3619, %v3618
        %v4260 = vpack.c.b16 %v3621, %v3620
        %v4261 = vpack.c.b16 %v3623, %v3622
        %v4262 = vpack.c.b16 %v3625, %v3624
        %v4263 = vpack.c.b16 %v3627, %v3626
        %v4264 = vpack.c.b16 %v3629, %v3628
        %v4265 = vpack.c.b16 %v3631, %v3630
        %v4266 = vpack.c.b16 %v3633, %v3632
        %v4267 = vpack.c.b16 %v3635, %v3634
        %v4268 = vpack.c.b16 %v3637, %v3636
        %v4269 = vpack.c.b16 %v3639, %v3638
        %v4270 = vpack.c.b16 %v3641, %v3640
        %v4271 = vpack.c.b16 %v3643, %v3642
        %v4272 = vpack.c.b16 %v3645, %v3644
        %v4273 = vpack.c.b16 %v3647, %v3646
        %v4274 = vpack.c.b16 %v3649, %v3648
        %v4275 = vpack.c.b16 %v3651, %v3650
        %v4276 = vpack.c.b16 %v3653, %v3652
        %v4277 = vpack.c.b16 %v3655, %v3654
        %v4278 = vpack.c.b16 %v3657, %v3656
        %v4279 = vpack.c.b16 %v3659, %v3658
        %v4280 = vpack.c.b16 %v3661, %v3660
        %v4281 = vpack.c.b16 %v3663, %v3662
        %v4282 = vpack.c.b16 %v3665, %v3664
        %v4283 = vpack.c.b16 %v3667, %v3666
        %v4284 = vpack.c.b16 %v3669, %v3668
        %v4285 = vpack.c.b16 %v3671, %v3670
        %v4286 = vpack.c.b16 %v3673, %v3672
        %v4287 = vpack.c.b16 %v3675, %v3674
        %v4288 = vpack.c.b16 %v3677, %v3676
        %v4289 = vpack.c.b16 %v3679, %v3678
        %v4290 = vpack.c.b16 %v3681, %v3680
        %v4291 = vpack.c.b16 %v3683, %v3682
        %v4292 = vpack.c.b16 %v3685, %v3684
        %v4293 = vpack.c.b16 %v3687, %v3686
        %v4294 = vpack.c.b16 %v3689, %v3688
        %v4295 = vpack.c.b16 %v3691, %v3690
        %v4296 = vpack.c.b16 %v3693, %v3692
        %v4297 = vpack.c.b16 %v3695, %v3694
        %v4298 = vpack.c.b16 %v3697, %v3696
        %v4299 = vpack.c.b16 %v3699, %v3698
        %v4300 = vpack.c.b16 %v3701, %v3700
        %v4301 = vpack.c.b16 %v3703, %v3702
        %v4302 = vpack.c.b16 %v3705, %v3704
        %v4303 = vpack.c.b16 %v3707, %v3706
        %v4304 = vpack.c.b16 %v3709, %v3708
        %v4305 = vpack.c.b16 %v3711, %v3710
        %v4306 = vpack.c.b16 %v3713, %v3712
        %v4307 = vpack.c.b16 %v3715, %v3714
        %v4308 = vpack.c.b16 %v3717, %v3716
        %v4309 = vpack.c.b16 %v3719, %v3718
        %v4310 = vpack.c.b16 %v3721, %v3720
        %v4311 = vpack.c.b16 %v3723, %v3722
        %v4312 = vpack.c.b16 %v3725, %v3724
        %v4313 = vpack.c.b16 %v3727, %v3726
        %v4314 = vpack.c.b16 %v3729, %v3728
        %v4315 = vpack.c.b16 %v3731, %v3730
        %v4316 = vpack.c.b16 %v3733, %v3732
        %v4317 = vpack.c.b16 %v3735, %v3734
        %v4318 = vpack.c.b16 %v3737, %v3736
        %v4319 = vpack.c.b16 %v3739, %v3738
        %v4320 = vpack.c.b16 %v3741, %v3740
        %v4321 = vpack.c.b16 %v3743, %v3742
        %v4322 = vpack.c.b16 %v3745, %v3744
        %v4323 = vpack.c.b16 %v3747, %v3746
        %v4324 = vpack.c.b16 %v3749, %v3748
        %v4325 = vpack.c.b16 %v3751, %v3750
        %v4326 = vpack.c.b16 %v3753, %v3752
        %v4327 = vpack.c.b16 %v3755, %v3754
        %v4328 = vpack.c.b16 %v3757, %v3756
        %v4329 = vpack.c.b16 %v3759, %v3758
        %v4330 = vpack.c.b16 %v3761, %v3760
        %v4331 = vpack.c.b16 %v3763, %v3762
        %v4332 = vpack.c.b16 %v3765, %v3764
        %v4333 = vpack.c.b16 %v3767, %v3766
        %v4334 = vpack.c.b16 %v3769, %v3768
        %v4335 = vpack.c.b16 %v3771, %v3770
        %v4336 = vpack.c.b16 %v3773, %v3772
        %v4337 = vpack.c.b16 %v3775, %v3774
        %v4338 = vpack.c.b16 %v3777, %v3776
        %v4339 = vpack.c.b16 %v3779, %v3778
        %v4340 = vpack.c.b16 %v3781, %v3780
        %v4341 = vpack.c.b16 %v3783, %v3782
        %v4342 = vpack.c.b16 %v3785, %v3784
        %v4343 = vpack.c.b16 %v3787, %v3786
        %v4344 = vpack.c.b16 %v3789, %v3788
        %v4345 = vpack.c.b16 %v3791, %v3790
        %v4346 = vpack.c.b16 %v3793, %v3792
        %v4347 = vpack.c.b16 %v3795, %v3794
        %v4348 = vpack.c.b16 %v3797, %v3796
        %v4349 = vpack.c.b16 %v3799, %v3798
        %v4350 = vpack.c.b16 %v3801, %v3800
        %v4351 = vpack.c.b16 %v3803, %v3802
        %v4352 = vpack.c.b16 %v3805, %v3804
        %v4353 = vpack.c.b16 %v3807, %v3806
        %v4354 = vpack.c.b16 %v3809, %v3808
        %v4355 = vpack.c.b16 %v3811, %v3810
        %v4356 = vpack.c.b16 %v3813, %v3812
        %v4357 = vpack.c.b16 %v3815, %v3814
        %v4358 = vpack.c.b16 %v3817, %v3816
        %v4359 = vpack.c.b16 %v3819, %v3818
        %v4360 = vpack.c.b16 %v3821, %v3820
        %v4361 = vpack.c.b16 %v3823, %v3822
        %v4362 = vpack.c.b16 %v3825, %v3824
        %v4363 = vpack.c.b16 %v3827, %v3826
        %v4364 = vpack.c.b16 %v3829, %v3828
        %v4365 = vpack.c.b16 %v3831, %v3830
        %v4366 = vpack.c.b16 %v3833, %v3832
        %v4367 = vpack.c.b16 %v3835, %v3834
        %v4368 = vpack.c.b16 %v3837, %v3836
        %v4369 = vpack.c.b16 %v3839, %v3838
        %v4370 = vpack.c.b16 %v3841, %v3840
        %v4371 = vpack.c.b16 %v3843, %v3842
        %v4372 = vpack.c.b16 %v3845, %v3844
        %v4373 = vpack.c.b16 %v3847, %v3846
        %v4374 = vpack.c.b16 %v3849, %v3848
        %v4375 = vpack.c.b16 %v3851, %v3850
        %v4376 = vpack.c.b16 %v3853, %v3852
        %v4377 = vpack.c.b16 %v3855, %v3854
        %v4378 = vpack.c.b16 %v3857, %v3856
        %v4379 = vpack.c.b16 %v3859, %v3858
        %v4380 = vpack.c.b16 %v3861, %v3860
        %v4381 = vpack.c.b16 %v3863, %v3862
        %v4382 = vpack.c.b16 %v3865, %v3864
        %v4383 = vpack.c.b16 %v3867, %v3866
        %v4384 = vpack.c.b16 %v3869, %v3868
        %v4385 = vpack.c.b16 %v3871, %v3870
        %v4386 = vpack.c.b16 %v3873, %v3872
        %v4387 = vpack.c.b16 %v3875, %v3874
        %4900 = vmatprep.subr.bf16.mxu0 0
        %4901 = vmatpush1.bf16.msra.mxu0 %v3883
        %4902 = vmatprep.subr.bf16.mxu0 0
        %4903 = vmatpush1.bf16.msra.mxu0 %v3882
        %4904 = vmatprep.subr.bf16.mxu0 0
        %4905 = vmatpush1.bf16.msra.mxu0 %v3881
        %4906 = vmatprep.subr.bf16.mxu0 0
        %4907 = vmatpush1.bf16.msra.mxu0 %v3880
        %4908 = vmatprep.subr.bf16.mxu0 0
        %4909 = vmatpush1.bf16.msra.mxu0 %v3879
        %4910 = vmatprep.subr.bf16.mxu0 0
        %4911 = vmatpush1.bf16.msra.mxu0 %v3878
        %4912 = vmatprep.subr.bf16.mxu0 0
        %4913 = vmatpush1.bf16.msra.mxu0 %v3877
        %4914 = vmatprep.subr.bf16.mxu0 0
        %4915 = vmatpush1.bf16.msra.mxu0 %v3876
        %4916 = vmatprep.subr.bf16.mxu0 0
        %4917 = vmatpush2.bf16.msra.mxu0 %v3891
        %4918 = vmatprep.subr.bf16.mxu0 0
        %4919 = vmatpush2.bf16.msra.mxu0 %v3890
        %4920 = vmatprep.subr.bf16.mxu0 0
        %4921 = vmatpush2.bf16.msra.mxu0 %v3889
        %4922 = vmatprep.subr.bf16.mxu0 0
        %4923 = vmatpush2.bf16.msra.mxu0 %v3888
        %4924 = vmatprep.subr.bf16.mxu0 0
        %4925 = vmatpush2.bf16.msra.mxu0 %v3887
        %4926 = vmatprep.subr.bf16.mxu0 0
        %4927 = vmatpush2.bf16.msra.mxu0 %v3886
        %4928 = vmatprep.subr.bf16.mxu0 0
        %4929 = vmatpush2.bf16.msra.mxu0 %v3885
        %4930 = vmatprep.subr.bf16.mxu0 0
        %4931 = vmatpush2.bf16.msra.mxu0 %v3884
        %4932 = vmatprep.mubr.bf16.mxu0 %v740
        %4933 = vmatmul.mubr.bf16.gmra.mxu0 %v739
        %v4934 = vpop.f32.mrf.mxu0
        %v4935 = vadd.f32 0.0, %v4934
        %v4936 = vpop.f32.mrf.mxu0
        %v4937 = vpop.f32.mrf.mxu0
        %v4938 = vpop.f32.mrf.mxu0
        %4939 = vdwg.mxu0
        %4940 = vmatprep.subr.bf16.mxu0 0
        %4941 = vmatpush1.bf16.msra.mxu0 %v3899
        %4942 = vmatprep.subr.bf16.mxu0 0
        %4943 = vmatpush1.bf16.msra.mxu0 %v3898
        %4944 = vmatprep.subr.bf16.mxu0 0
        %4945 = vmatpush1.bf16.msra.mxu0 %v3897
        %4946 = vmatprep.subr.bf16.mxu0 0
        %4947 = vmatpush1.bf16.msra.mxu0 %v3896
        %4948 = vmatprep.subr.bf16.mxu0 0
        %4949 = vmatpush1.bf16.msra.mxu0 %v3895
        %4950 = vmatprep.subr.bf16.mxu0 0
        %4951 = vmatpush1.bf16.msra.mxu0 %v3894
        %4952 = vmatprep.subr.bf16.mxu0 0
        %4953 = vmatpush1.bf16.msra.mxu0 %v3893
        %4954 = vmatprep.subr.bf16.mxu0 0
        %4955 = vmatpush1.bf16.msra.mxu0 %v3892
        %4956 = vmatprep.subr.bf16.mxu0 0
        %4957 = vmatpush2.bf16.msra.mxu0 %v3907
        %4958 = vmatprep.subr.bf16.mxu0 0
        %4959 = vmatpush2.bf16.msra.mxu0 %v3906
        %4960 = vmatprep.subr.bf16.mxu0 0
        %4961 = vmatpush2.bf16.msra.mxu0 %v3905
        %4962 = vmatprep.subr.bf16.mxu0 0
        %4963 = vmatpush2.bf16.msra.mxu0 %v3904
        %4964 = vmatprep.subr.bf16.mxu0 0
        %4965 = vmatpush2.bf16.msra.mxu0 %v3903
        %4966 = vmatprep.subr.bf16.mxu0 0
        %4967 = vmatpush2.bf16.msra.mxu0 %v3902
        %4968 = vmatprep.subr.bf16.mxu0 0
        %4969 = vmatpush2.bf16.msra.mxu0 %v3901
        %4970 = vmatprep.subr.bf16.mxu0 0
        %4971 = vmatpush2.bf16.msra.mxu0 %v3900
        %4972 = vmatprep.mubr.bf16.mxu0 %v742
        %4973 = vmatmul.mubr.bf16.gmra.mxu0 %v741
        %v4974 = vpop.f32.mrf.mxu0
        %v4975 = vadd.f32 %v4935, %v4974
        %v4976 = vpop.f32.mrf.mxu0
        %v4977 = vpop.f32.mrf.mxu0
        %v4978 = vpop.f32.mrf.mxu0
        %4979 = vdwg.mxu0
        %4980 = vmatprep.subr.bf16.mxu0 0
        %4981 = vmatpush1.bf16.msra.mxu0 %v3915
        %4982 = vmatprep.subr.bf16.mxu0 0
        %4983 = vmatpush1.bf16.msra.mxu0 %v3914
        %4984 = vmatprep.subr.bf16.mxu0 0
        %4985 = vmatpush1.bf16.msra.mxu0 %v3913
        %4986 = vmatprep.subr.bf16.mxu0 0
        %4987 = vmatpush1.bf16.msra.mxu0 %v3912
        %4988 = vmatprep.subr.bf16.mxu0 0
        %4989 = vmatpush1.bf16.msra.mxu0 %v3911
        %4990 = vmatprep.subr.bf16.mxu0 0
        %4991 = vmatpush1.bf16.msra.mxu0 %v3910
        %4992 = vmatprep.subr.bf16.mxu0 0
        %4993 = vmatpush1.bf16.msra.mxu0 %v3909
        %4994 = vmatprep.subr.bf16.mxu0 0
        %4995 = vmatpush1.bf16.msra.mxu0 %v3908
        %4996 = vmatprep.subr.bf16.mxu0 0
        %4997 = vmatpush2.bf16.msra.mxu0 %v3923
        %4998 = vmatprep.subr.bf16.mxu0 0
        %4999 = vmatpush2.bf16.msra.mxu0 %v3922
        %5000 = vmatprep.subr.bf16.mxu0 0
        %5001 = vmatpush2.bf16.msra.mxu0 %v3921
        %5002 = vmatprep.subr.bf16.mxu0 0
        %5003 = vmatpush2.bf16.msra.mxu0 %v3920
        %5004 = vmatprep.subr.bf16.mxu0 0
        %5005 = vmatpush2.bf16.msra.mxu0 %v3919
        %5006 = vmatprep.subr.bf16.mxu0 0
        %5007 = vmatpush2.bf16.msra.mxu0 %v3918
        %5008 = vmatprep.subr.bf16.mxu0 0
        %5009 = vmatpush2.bf16.msra.mxu0 %v3917
        %5010 = vmatprep.subr.bf16.mxu0 0
        %5011 = vmatpush2.bf16.msra.mxu0 %v3916
        %5012 = vmatprep.mubr.bf16.mxu0 %v744
        %5013 = vmatmul.mubr.bf16.gmra.mxu0 %v743
        %v5014 = vpop.f32.mrf.mxu0
        %v5015 = vadd.f32 %v4975, %v5014
        %v5016 = vpop.f32.mrf.mxu0
        %v5017 = vpop.f32.mrf.mxu0
        %v5018 = vpop.f32.mrf.mxu0
        %5019 = vdwg.mxu0
        %5020 = vmatprep.subr.bf16.mxu0 0
        %5021 = vmatpush1.bf16.msra.mxu0 %v3931
        %5022 = vmatprep.subr.bf16.mxu0 0
        %5023 = vmatpush1.bf16.msra.mxu0 %v3930
        %5024 = vmatprep.subr.bf16.mxu0 0
        %5025 = vmatpush1.bf16.msra.mxu0 %v3929
        %5026 = vmatprep.subr.bf16.mxu0 0
        %5027 = vmatpush1.bf16.msra.mxu0 %v3928
        %5028 = vmatprep.subr.bf16.mxu0 0
        %5029 = vmatpush1.bf16.msra.mxu0 %v3927
        %5030 = vmatprep.subr.bf16.mxu0 0
        %5031 = vmatpush1.bf16.msra.mxu0 %v3926
        %5032 = vmatprep.subr.bf16.mxu0 0
        %5033 = vmatpush1.bf16.msra.mxu0 %v3925
        %5034 = vmatprep.subr.bf16.mxu0 0
        %5035 = vmatpush1.bf16.msra.mxu0 %v3924
        %5036 = vmatprep.subr.bf16.mxu0 0
        %5037 = vmatpush2.bf16.msra.mxu0 %v3939
        %5038 = vmatprep.subr.bf16.mxu0 0
        %5039 = vmatpush2.bf16.msra.mxu0 %v3938
        %5040 = vmatprep.subr.bf16.mxu0 0
        %5041 = vmatpush2.bf16.msra.mxu0 %v3937
        %5042 = vmatprep.subr.bf16.mxu0 0
        %5043 = vmatpush2.bf16.msra.mxu0 %v3936
        %5044 = vmatprep.subr.bf16.mxu0 0
        %5045 = vmatpush2.bf16.msra.mxu0 %v3935
        %5046 = vmatprep.subr.bf16.mxu0 0
        %5047 = vmatpush2.bf16.msra.mxu0 %v3934
        %5048 = vmatprep.subr.bf16.mxu0 0
        %5049 = vmatpush2.bf16.msra.mxu0 %v3933
        %5050 = vmatprep.subr.bf16.mxu0 0
        %5051 = vmatpush2.bf16.msra.mxu0 %v3932
        %5052 = vmatprep.mubr.bf16.mxu0 %v746
        %5053 = vmatmul.mubr.bf16.gmra.mxu0 %v745
        %v5054 = vpop.f32.mrf.mxu0
        %v5055 = vadd.f32 %v5015, %v5054
        %v5056 = vpop.f32.mrf.mxu0
        %v5057 = vpop.f32.mrf.mxu0
        %v5058 = vpop.f32.mrf.mxu0
        %5059 = vdwg.mxu0
        %5060 = vmatprep.subr.bf16.mxu0 0
        %5061 = vmatpush1.bf16.msra.mxu0 %v3947
        %5062 = vmatprep.subr.bf16.mxu0 0
        %5063 = vmatpush1.bf16.msra.mxu0 %v3946
        %5064 = vmatprep.subr.bf16.mxu0 0
        %5065 = vmatpush1.bf16.msra.mxu0 %v3945
        %5066 = vmatprep.subr.bf16.mxu0 0
        %5067 = vmatpush1.bf16.msra.mxu0 %v3944
        %5068 = vmatprep.subr.bf16.mxu0 0
        %5069 = vmatpush1.bf16.msra.mxu0 %v3943
        %5070 = vmatprep.subr.bf16.mxu0 0
        %5071 = vmatpush1.bf16.msra.mxu0 %v3942
        %5072 = vmatprep.subr.bf16.mxu0 0
        %5073 = vmatpush1.bf16.msra.mxu0 %v3941
        %5074 = vmatprep.subr.bf16.mxu0 0
        %5075 = vmatpush1.bf16.msra.mxu0 %v3940
        %5076 = vmatprep.subr.bf16.mxu0 0
        %5077 = vmatpush2.bf16.msra.mxu0 %v3955
        %5078 = vmatprep.subr.bf16.mxu0 0
        %5079 = vmatpush2.bf16.msra.mxu0 %v3954
        %5080 = vmatprep.subr.bf16.mxu0 0
        %5081 = vmatpush2.bf16.msra.mxu0 %v3953
        %5082 = vmatprep.subr.bf16.mxu0 0
        %5083 = vmatpush2.bf16.msra.mxu0 %v3952
        %5084 = vmatprep.subr.bf16.mxu0 0
        %5085 = vmatpush2.bf16.msra.mxu0 %v3951
        %5086 = vmatprep.subr.bf16.mxu0 0
        %5087 = vmatpush2.bf16.msra.mxu0 %v3950
        %5088 = vmatprep.subr.bf16.mxu0 0
        %5089 = vmatpush2.bf16.msra.mxu0 %v3949
        %5090 = vmatprep.subr.bf16.mxu0 0
        %5091 = vmatpush2.bf16.msra.mxu0 %v3948
        %5092 = vmatprep.mubr.bf16.mxu0 %v748
        %5093 = vmatmul.mubr.bf16.gmra.mxu0 %v747
        %v5094 = vpop.f32.mrf.mxu0
        %v5095 = vadd.f32 %v5055, %v5094
        %v5096 = vpop.f32.mrf.mxu0
        %v5097 = vpop.f32.mrf.mxu0
        %v5098 = vpop.f32.mrf.mxu0
        %5099 = vdwg.mxu0
        %5100 = vmatprep.subr.bf16.mxu0 0
        %5101 = vmatpush1.bf16.msra.mxu0 %v3963
        %5102 = vmatprep.subr.bf16.mxu0 0
        %5103 = vmatpush1.bf16.msra.mxu0 %v3962
        %5104 = vmatprep.subr.bf16.mxu0 0
        %5105 = vmatpush1.bf16.msra.mxu0 %v3961
        %5106 = vmatprep.subr.bf16.mxu0 0
        %5107 = vmatpush1.bf16.msra.mxu0 %v3960
        %5108 = vmatprep.subr.bf16.mxu0 0
        %5109 = vmatpush1.bf16.msra.mxu0 %v3959
        %5110 = vmatprep.subr.bf16.mxu0 0
        %5111 = vmatpush1.bf16.msra.mxu0 %v3958
        %5112 = vmatprep.subr.bf16.mxu0 0
        %5113 = vmatpush1.bf16.msra.mxu0 %v3957
        %5114 = vmatprep.subr.bf16.mxu0 0
        %5115 = vmatpush1.bf16.msra.mxu0 %v3956
        %5116 = vmatprep.subr.bf16.mxu0 0
        %5117 = vmatpush2.bf16.msra.mxu0 %v3971
        %5118 = vmatprep.subr.bf16.mxu0 0
        %5119 = vmatpush2.bf16.msra.mxu0 %v3970
        %5120 = vmatprep.subr.bf16.mxu0 0
        %5121 = vmatpush2.bf16.msra.mxu0 %v3969
        %5122 = vmatprep.subr.bf16.mxu0 0
        %5123 = vmatpush2.bf16.msra.mxu0 %v3968
        %5124 = vmatprep.subr.bf16.mxu0 0
        %5125 = vmatpush2.bf16.msra.mxu0 %v3967
        %5126 = vmatprep.subr.bf16.mxu0 0
        %5127 = vmatpush2.bf16.msra.mxu0 %v3966
        %5128 = vmatprep.subr.bf16.mxu0 0
        %5129 = vmatpush2.bf16.msra.mxu0 %v3965
        %5130 = vmatprep.subr.bf16.mxu0 0
        %5131 = vmatpush2.bf16.msra.mxu0 %v3964
        %5132 = vmatprep.mubr.bf16.mxu0 %v750
        %5133 = vmatmul.mubr.bf16.gmra.mxu0 %v749
        %v5134 = vpop.f32.mrf.mxu0
        %v5135 = vadd.f32 %v5095, %v5134
        %v5136 = vpop.f32.mrf.mxu0
        %v5137 = vpop.f32.mrf.mxu0
        %v5138 = vpop.f32.mrf.mxu0
        %5139 = vdwg.mxu0
        %5140 = vmatprep.subr.bf16.mxu0 0
        %5141 = vmatpush1.bf16.msra.mxu0 %v3979
        %5142 = vmatprep.subr.bf16.mxu0 0
        %5143 = vmatpush1.bf16.msra.mxu0 %v3978
        %5144 = vmatprep.subr.bf16.mxu0 0
        %5145 = vmatpush1.bf16.msra.mxu0 %v3977
        %5146 = vmatprep.subr.bf16.mxu0 0
        %5147 = vmatpush1.bf16.msra.mxu0 %v3976
        %5148 = vmatprep.subr.bf16.mxu0 0
        %5149 = vmatpush1.bf16.msra.mxu0 %v3975
        %5150 = vmatprep.subr.bf16.mxu0 0
        %5151 = vmatpush1.bf16.msra.mxu0 %v3974
        %5152 = vmatprep.subr.bf16.mxu0 0
        %5153 = vmatpush1.bf16.msra.mxu0 %v3973
        %5154 = vmatprep.subr.bf16.mxu0 0
        %5155 = vmatpush1.bf16.msra.mxu0 %v3972
        %5156 = vmatprep.subr.bf16.mxu0 0
        %5157 = vmatpush2.bf16.msra.mxu0 %v3987
        %5158 = vmatprep.subr.bf16.mxu0 0
        %5159 = vmatpush2.bf16.msra.mxu0 %v3986
        %5160 = vmatprep.subr.bf16.mxu0 0
        %5161 = vmatpush2.bf16.msra.mxu0 %v3985
        %5162 = vmatprep.subr.bf16.mxu0 0
        %5163 = vmatpush2.bf16.msra.mxu0 %v3984
        %5164 = vmatprep.subr.bf16.mxu0 0
        %5165 = vmatpush2.bf16.msra.mxu0 %v3983
        %5166 = vmatprep.subr.bf16.mxu0 0
        %5167 = vmatpush2.bf16.msra.mxu0 %v3982
        %5168 = vmatprep.subr.bf16.mxu0 0
        %5169 = vmatpush2.bf16.msra.mxu0 %v3981
        %5170 = vmatprep.subr.bf16.mxu0 0
        %5171 = vmatpush2.bf16.msra.mxu0 %v3980
        %5172 = vmatprep.mubr.bf16.mxu0 %v752
        %5173 = vmatmul.mubr.bf16.gmra.mxu0 %v751
        %v5174 = vpop.f32.mrf.mxu0
        %v5175 = vadd.f32 %v5135, %v5174
        %v5176 = vpop.f32.mrf.mxu0
        %v5177 = vpop.f32.mrf.mxu0
        %v5178 = vpop.f32.mrf.mxu0
        %5179 = vdwg.mxu0
        %5180 = vmatprep.subr.bf16.mxu0 0
        %5181 = vmatpush1.bf16.msra.mxu0 %v3995
        %5182 = vmatprep.subr.bf16.mxu0 0
        %5183 = vmatpush1.bf16.msra.mxu0 %v3994
        %5184 = vmatprep.subr.bf16.mxu0 0
        %5185 = vmatpush1.bf16.msra.mxu0 %v3993
        %5186 = vmatprep.subr.bf16.mxu0 0
        %5187 = vmatpush1.bf16.msra.mxu0 %v3992
        %5188 = vmatprep.subr.bf16.mxu0 0
        %5189 = vmatpush1.bf16.msra.mxu0 %v3991
        %5190 = vmatprep.subr.bf16.mxu0 0
        %5191 = vmatpush1.bf16.msra.mxu0 %v3990
        %5192 = vmatprep.subr.bf16.mxu0 0
        %5193 = vmatpush1.bf16.msra.mxu0 %v3989
        %5194 = vmatprep.subr.bf16.mxu0 0
        %5195 = vmatpush1.bf16.msra.mxu0 %v3988
        %5196 = vmatprep.subr.bf16.mxu0 0
        %5197 = vmatpush2.bf16.msra.mxu0 %v4003
        %5198 = vmatprep.subr.bf16.mxu0 0
        %5199 = vmatpush2.bf16.msra.mxu0 %v4002
        %5200 = vmatprep.subr.bf16.mxu0 0
        %5201 = vmatpush2.bf16.msra.mxu0 %v4001
        %5202 = vmatprep.subr.bf16.mxu0 0
        %5203 = vmatpush2.bf16.msra.mxu0 %v4000
        %5204 = vmatprep.subr.bf16.mxu0 0
        %5205 = vmatpush2.bf16.msra.mxu0 %v3999
        %5206 = vmatprep.subr.bf16.mxu0 0
        %5207 = vmatpush2.bf16.msra.mxu0 %v3998
        %5208 = vmatprep.subr.bf16.mxu0 0
        %5209 = vmatpush2.bf16.msra.mxu0 %v3997
        %5210 = vmatprep.subr.bf16.mxu0 0
        %5211 = vmatpush2.bf16.msra.mxu0 %v3996
        %5212 = vmatprep.mubr.bf16.mxu0 %v754
        %5213 = vmatmul.mubr.bf16.gmra.mxu0 %v753
        %v5214 = vpop.f32.mrf.mxu0
        %v5215 = vadd.f32 %v5175, %v5214
        %v5216 = vpop.f32.mrf.mxu0
        %v5217 = vpop.f32.mrf.mxu0
        %v5218 = vpop.f32.mrf.mxu0
        %5219 = vdwg.mxu0
        %5220 = vmatprep.subr.bf16.mxu0 0
        %5221 = vmatpush1.bf16.msra.mxu0 %v4011
        %5222 = vmatprep.subr.bf16.mxu0 0
        %5223 = vmatpush1.bf16.msra.mxu0 %v4010
        %5224 = vmatprep.subr.bf16.mxu0 0
        %5225 = vmatpush1.bf16.msra.mxu0 %v4009
        %5226 = vmatprep.subr.bf16.mxu0 0
        %5227 = vmatpush1.bf16.msra.mxu0 %v4008
        %5228 = vmatprep.subr.bf16.mxu0 0
        %5229 = vmatpush1.bf16.msra.mxu0 %v4007
        %5230 = vmatprep.subr.bf16.mxu0 0
        %5231 = vmatpush1.bf16.msra.mxu0 %v4006
        %5232 = vmatprep.subr.bf16.mxu0 0
        %5233 = vmatpush1.bf16.msra.mxu0 %v4005
        %5234 = vmatprep.subr.bf16.mxu0 0
        %5235 = vmatpush1.bf16.msra.mxu0 %v4004
        %5236 = vmatprep.subr.bf16.mxu0 0
        %5237 = vmatpush2.bf16.msra.mxu0 %v4019
        %5238 = vmatprep.subr.bf16.mxu0 0
        %5239 = vmatpush2.bf16.msra.mxu0 %v4018
        %5240 = vmatprep.subr.bf16.mxu0 0
        %5241 = vmatpush2.bf16.msra.mxu0 %v4017
        %5242 = vmatprep.subr.bf16.mxu0 0
        %5243 = vmatpush2.bf16.msra.mxu0 %v4016
        %5244 = vmatprep.subr.bf16.mxu0 0
        %5245 = vmatpush2.bf16.msra.mxu0 %v4015
        %5246 = vmatprep.subr.bf16.mxu0 0
        %5247 = vmatpush2.bf16.msra.mxu0 %v4014
        %5248 = vmatprep.subr.bf16.mxu0 0
        %5249 = vmatpush2.bf16.msra.mxu0 %v4013
        %5250 = vmatprep.subr.bf16.mxu0 0
        %5251 = vmatpush2.bf16.msra.mxu0 %v4012
        %5252 = vmatprep.mubr.bf16.mxu0 %v756
        %5253 = vmatmul.mubr.bf16.gmra.mxu0 %v755
        %v5254 = vpop.f32.mrf.mxu0
        %v5255 = vadd.f32 %v5215, %v5254
        %v5256 = vpop.f32.mrf.mxu0
        %v5257 = vpop.f32.mrf.mxu0
        %v5258 = vpop.f32.mrf.mxu0
        %5259 = vdwg.mxu0
        %5260 = vmatprep.subr.bf16.mxu0 0
        %5261 = vmatpush1.bf16.msra.mxu0 %v4027
        %5262 = vmatprep.subr.bf16.mxu0 0
        %5263 = vmatpush1.bf16.msra.mxu0 %v4026
        %5264 = vmatprep.subr.bf16.mxu0 0
        %5265 = vmatpush1.bf16.msra.mxu0 %v4025
        %5266 = vmatprep.subr.bf16.mxu0 0
        %5267 = vmatpush1.bf16.msra.mxu0 %v4024
        %5268 = vmatprep.subr.bf16.mxu0 0
        %5269 = vmatpush1.bf16.msra.mxu0 %v4023
        %5270 = vmatprep.subr.bf16.mxu0 0
        %5271 = vmatpush1.bf16.msra.mxu0 %v4022
        %5272 = vmatprep.subr.bf16.mxu0 0
        %5273 = vmatpush1.bf16.msra.mxu0 %v4021
        %5274 = vmatprep.subr.bf16.mxu0 0
        %5275 = vmatpush1.bf16.msra.mxu0 %v4020
        %5276 = vmatprep.subr.bf16.mxu0 0
        %5277 = vmatpush2.bf16.msra.mxu0 %v4035
        %5278 = vmatprep.subr.bf16.mxu0 0
        %5279 = vmatpush2.bf16.msra.mxu0 %v4034
        %5280 = vmatprep.subr.bf16.mxu0 0
        %5281 = vmatpush2.bf16.msra.mxu0 %v4033
        %5282 = vmatprep.subr.bf16.mxu0 0
        %5283 = vmatpush2.bf16.msra.mxu0 %v4032
        %5284 = vmatprep.subr.bf16.mxu0 0
        %5285 = vmatpush2.bf16.msra.mxu0 %v4031
        %5286 = vmatprep.subr.bf16.mxu0 0
        %5287 = vmatpush2.bf16.msra.mxu0 %v4030
        %5288 = vmatprep.subr.bf16.mxu0 0
        %5289 = vmatpush2.bf16.msra.mxu0 %v4029
        %5290 = vmatprep.subr.bf16.mxu0 0
        %5291 = vmatpush2.bf16.msra.mxu0 %v4028
        %5292 = vmatprep.mubr.bf16.mxu0 %v758
        %5293 = vmatmul.mubr.bf16.gmra.mxu0 %v757
        %v5294 = vpop.f32.mrf.mxu0
        %v5295 = vadd.f32 %v5255, %v5294
        %v5296 = vpop.f32.mrf.mxu0
        %v5297 = vpop.f32.mrf.mxu0
        %v5298 = vpop.f32.mrf.mxu0
        %5299 = vdwg.mxu0
        %5300 = vmatprep.subr.bf16.mxu0 0
        %5301 = vmatpush1.bf16.msra.mxu0 %v4043
        %5302 = vmatprep.subr.bf16.mxu0 0
        %5303 = vmatpush1.bf16.msra.mxu0 %v4042
        %5304 = vmatprep.subr.bf16.mxu0 0
        %5305 = vmatpush1.bf16.msra.mxu0 %v4041
        %5306 = vmatprep.subr.bf16.mxu0 0
        %5307 = vmatpush1.bf16.msra.mxu0 %v4040
        %5308 = vmatprep.subr.bf16.mxu0 0
        %5309 = vmatpush1.bf16.msra.mxu0 %v4039
        %5310 = vmatprep.subr.bf16.mxu0 0
        %5311 = vmatpush1.bf16.msra.mxu0 %v4038
        %5312 = vmatprep.subr.bf16.mxu0 0
        %5313 = vmatpush1.bf16.msra.mxu0 %v4037
        %5314 = vmatprep.subr.bf16.mxu0 0
        %5315 = vmatpush1.bf16.msra.mxu0 %v4036
        %5316 = vmatprep.subr.bf16.mxu0 0
        %5317 = vmatpush2.bf16.msra.mxu0 %v4051
        %5318 = vmatprep.subr.bf16.mxu0 0
        %5319 = vmatpush2.bf16.msra.mxu0 %v4050
        %5320 = vmatprep.subr.bf16.mxu0 0
        %5321 = vmatpush2.bf16.msra.mxu0 %v4049
        %5322 = vmatprep.subr.bf16.mxu0 0
        %5323 = vmatpush2.bf16.msra.mxu0 %v4048
        %5324 = vmatprep.subr.bf16.mxu0 0
        %5325 = vmatpush2.bf16.msra.mxu0 %v4047
        %5326 = vmatprep.subr.bf16.mxu0 0
        %5327 = vmatpush2.bf16.msra.mxu0 %v4046
        %5328 = vmatprep.subr.bf16.mxu0 0
        %5329 = vmatpush2.bf16.msra.mxu0 %v4045
        %5330 = vmatprep.subr.bf16.mxu0 0
        %5331 = vmatpush2.bf16.msra.mxu0 %v4044
        %5332 = vmatprep.mubr.bf16.mxu0 %v760
        %5333 = vmatmul.mubr.bf16.gmra.mxu0 %v759
        %v5334 = vpop.f32.mrf.mxu0
        %v5335 = vadd.f32 %v5295, %v5334
        %v5336 = vpop.f32.mrf.mxu0
        %v5337 = vpop.f32.mrf.mxu0
        %v5338 = vpop.f32.mrf.mxu0
        %5339 = vdwg.mxu0
        %5340 = vmatprep.subr.bf16.mxu0 0
        %5341 = vmatpush1.bf16.msra.mxu0 %v4059
        %5342 = vmatprep.subr.bf16.mxu0 0
        %5343 = vmatpush1.bf16.msra.mxu0 %v4058
        %5344 = vmatprep.subr.bf16.mxu0 0
        %5345 = vmatpush1.bf16.msra.mxu0 %v4057
        %5346 = vmatprep.subr.bf16.mxu0 0
        %5347 = vmatpush1.bf16.msra.mxu0 %v4056
        %5348 = vmatprep.subr.bf16.mxu0 0
        %5349 = vmatpush1.bf16.msra.mxu0 %v4055
        %5350 = vmatprep.subr.bf16.mxu0 0
        %5351 = vmatpush1.bf16.msra.mxu0 %v4054
        %5352 = vmatprep.subr.bf16.mxu0 0
        %5353 = vmatpush1.bf16.msra.mxu0 %v4053
        %5354 = vmatprep.subr.bf16.mxu0 0
        %5355 = vmatpush1.bf16.msra.mxu0 %v4052
        %5356 = vmatprep.subr.bf16.mxu0 0
        %5357 = vmatpush2.bf16.msra.mxu0 %v4067
        %5358 = vmatprep.subr.bf16.mxu0 0
        %5359 = vmatpush2.bf16.msra.mxu0 %v4066
        %5360 = vmatprep.subr.bf16.mxu0 0
        %5361 = vmatpush2.bf16.msra.mxu0 %v4065
        %5362 = vmatprep.subr.bf16.mxu0 0
        %5363 = vmatpush2.bf16.msra.mxu0 %v4064
        %5364 = vmatprep.subr.bf16.mxu0 0
        %5365 = vmatpush2.bf16.msra.mxu0 %v4063
        %5366 = vmatprep.subr.bf16.mxu0 0
        %5367 = vmatpush2.bf16.msra.mxu0 %v4062
        %5368 = vmatprep.subr.bf16.mxu0 0
        %5369 = vmatpush2.bf16.msra.mxu0 %v4061
        %5370 = vmatprep.subr.bf16.mxu0 0
        %5371 = vmatpush2.bf16.msra.mxu0 %v4060
        %5372 = vmatprep.mubr.bf16.mxu0 %v762
        %5373 = vmatmul.mubr.bf16.gmra.mxu0 %v761
        %v5374 = vpop.f32.mrf.mxu0
        %v5375 = vadd.f32 %v5335, %v5374
        %v5376 = vpop.f32.mrf.mxu0
        %v5377 = vpop.f32.mrf.mxu0
        %v5378 = vpop.f32.mrf.mxu0
        %5379 = vdwg.mxu0
        %5380 = vmatprep.subr.bf16.mxu0 0
        %5381 = vmatpush1.bf16.msra.mxu0 %v4075
        %5382 = vmatprep.subr.bf16.mxu0 0
        %5383 = vmatpush1.bf16.msra.mxu0 %v4074
        %5384 = vmatprep.subr.bf16.mxu0 0
        %5385 = vmatpush1.bf16.msra.mxu0 %v4073
        %5386 = vmatprep.subr.bf16.mxu0 0
        %5387 = vmatpush1.bf16.msra.mxu0 %v4072
        %5388 = vmatprep.subr.bf16.mxu0 0
        %5389 = vmatpush1.bf16.msra.mxu0 %v4071
        %5390 = vmatprep.subr.bf16.mxu0 0
        %5391 = vmatpush1.bf16.msra.mxu0 %v4070
        %5392 = vmatprep.subr.bf16.mxu0 0
        %5393 = vmatpush1.bf16.msra.mxu0 %v4069
        %5394 = vmatprep.subr.bf16.mxu0 0
        %5395 = vmatpush1.bf16.msra.mxu0 %v4068
        %5396 = vmatprep.subr.bf16.mxu0 0
        %5397 = vmatpush2.bf16.msra.mxu0 %v4083
        %5398 = vmatprep.subr.bf16.mxu0 0
        %5399 = vmatpush2.bf16.msra.mxu0 %v4082
        %5400 = vmatprep.subr.bf16.mxu0 0
        %5401 = vmatpush2.bf16.msra.mxu0 %v4081
        %5402 = vmatprep.subr.bf16.mxu0 0
        %5403 = vmatpush2.bf16.msra.mxu0 %v4080
        %5404 = vmatprep.subr.bf16.mxu0 0
        %5405 = vmatpush2.bf16.msra.mxu0 %v4079
        %5406 = vmatprep.subr.bf16.mxu0 0
        %5407 = vmatpush2.bf16.msra.mxu0 %v4078
        %5408 = vmatprep.subr.bf16.mxu0 0
        %5409 = vmatpush2.bf16.msra.mxu0 %v4077
        %5410 = vmatprep.subr.bf16.mxu0 0
        %5411 = vmatpush2.bf16.msra.mxu0 %v4076
        %5412 = vmatprep.mubr.bf16.mxu0 %v764
        %5413 = vmatmul.mubr.bf16.gmra.mxu0 %v763
        %v5414 = vpop.f32.mrf.mxu0
        %v5415 = vadd.f32 %v5375, %v5414
        %v5416 = vpop.f32.mrf.mxu0
        %v5417 = vpop.f32.mrf.mxu0
        %v5418 = vpop.f32.mrf.mxu0
        %5419 = vdwg.mxu0
        %5420 = vmatprep.subr.bf16.mxu0 0
        %5421 = vmatpush1.bf16.msra.mxu0 %v4091
        %5422 = vmatprep.subr.bf16.mxu0 0
        %5423 = vmatpush1.bf16.msra.mxu0 %v4090
        %5424 = vmatprep.subr.bf16.mxu0 0
        %5425 = vmatpush1.bf16.msra.mxu0 %v4089
        %5426 = vmatprep.subr.bf16.mxu0 0
        %5427 = vmatpush1.bf16.msra.mxu0 %v4088
        %5428 = vmatprep.subr.bf16.mxu0 0
        %5429 = vmatpush1.bf16.msra.mxu0 %v4087
        %5430 = vmatprep.subr.bf16.mxu0 0
        %5431 = vmatpush1.bf16.msra.mxu0 %v4086
        %5432 = vmatprep.subr.bf16.mxu0 0
        %5433 = vmatpush1.bf16.msra.mxu0 %v4085
        %5434 = vmatprep.subr.bf16.mxu0 0
        %5435 = vmatpush1.bf16.msra.mxu0 %v4084
        %5436 = vmatprep.subr.bf16.mxu0 0
        %5437 = vmatpush2.bf16.msra.mxu0 %v4099
        %5438 = vmatprep.subr.bf16.mxu0 0
        %5439 = vmatpush2.bf16.msra.mxu0 %v4098
        %5440 = vmatprep.subr.bf16.mxu0 0
        %5441 = vmatpush2.bf16.msra.mxu0 %v4097
        %5442 = vmatprep.subr.bf16.mxu0 0
        %5443 = vmatpush2.bf16.msra.mxu0 %v4096
        %5444 = vmatprep.subr.bf16.mxu0 0
        %5445 = vmatpush2.bf16.msra.mxu0 %v4095
        %5446 = vmatprep.subr.bf16.mxu0 0
        %5447 = vmatpush2.bf16.msra.mxu0 %v4094
        %5448 = vmatprep.subr.bf16.mxu0 0
        %5449 = vmatpush2.bf16.msra.mxu0 %v4093
        %5450 = vmatprep.subr.bf16.mxu0 0
        %5451 = vmatpush2.bf16.msra.mxu0 %v4092
        %5452 = vmatprep.mubr.bf16.mxu0 %v766
        %5453 = vmatmul.mubr.bf16.gmra.mxu0 %v765
        %v5454 = vpop.f32.mrf.mxu0
        %v5455 = vadd.f32 %v5415, %v5454
        %v5456 = vpop.f32.mrf.mxu0
        %v5457 = vpop.f32.mrf.mxu0
        %v5458 = vpop.f32.mrf.mxu0
        %5459 = vdwg.mxu0
        %5460 = vmatprep.subr.bf16.mxu0 0
        %5461 = vmatpush1.bf16.msra.mxu0 %v4107
        %5462 = vmatprep.subr.bf16.mxu0 0
        %5463 = vmatpush1.bf16.msra.mxu0 %v4106
        %5464 = vmatprep.subr.bf16.mxu0 0
        %5465 = vmatpush1.bf16.msra.mxu0 %v4105
        %5466 = vmatprep.subr.bf16.mxu0 0
        %5467 = vmatpush1.bf16.msra.mxu0 %v4104
        %5468 = vmatprep.subr.bf16.mxu0 0
        %5469 = vmatpush1.bf16.msra.mxu0 %v4103
        %5470 = vmatprep.subr.bf16.mxu0 0
        %5471 = vmatpush1.bf16.msra.mxu0 %v4102
        %5472 = vmatprep.subr.bf16.mxu0 0
        %5473 = vmatpush1.bf16.msra.mxu0 %v4101
        %5474 = vmatprep.subr.bf16.mxu0 0
        %5475 = vmatpush1.bf16.msra.mxu0 %v4100
        %5476 = vmatprep.subr.bf16.mxu0 0
        %5477 = vmatpush2.bf16.msra.mxu0 %v4115
        %5478 = vmatprep.subr.bf16.mxu0 0
        %5479 = vmatpush2.bf16.msra.mxu0 %v4114
        %5480 = vmatprep.subr.bf16.mxu0 0
        %5481 = vmatpush2.bf16.msra.mxu0 %v4113
        %5482 = vmatprep.subr.bf16.mxu0 0
        %5483 = vmatpush2.bf16.msra.mxu0 %v4112
        %5484 = vmatprep.subr.bf16.mxu0 0
        %5485 = vmatpush2.bf16.msra.mxu0 %v4111
        %5486 = vmatprep.subr.bf16.mxu0 0
        %5487 = vmatpush2.bf16.msra.mxu0 %v4110
        %5488 = vmatprep.subr.bf16.mxu0 0
        %5489 = vmatpush2.bf16.msra.mxu0 %v4109
        %5490 = vmatprep.subr.bf16.mxu0 0
        %5491 = vmatpush2.bf16.msra.mxu0 %v4108
        %5492 = vmatprep.mubr.bf16.mxu0 %v768
        %5493 = vmatmul.mubr.bf16.gmra.mxu0 %v767
        %v5494 = vpop.f32.mrf.mxu0
        %v5495 = vadd.f32 %v5455, %v5494
        %v5496 = vpop.f32.mrf.mxu0
        %v5497 = vpop.f32.mrf.mxu0
        %v5498 = vpop.f32.mrf.mxu0
        %5499 = vdwg.mxu0
        %5500 = vmatprep.subr.bf16.mxu0 0
        %5501 = vmatpush1.bf16.msra.mxu0 %v4123
        %5502 = vmatprep.subr.bf16.mxu0 0
        %5503 = vmatpush1.bf16.msra.mxu0 %v4122
        %5504 = vmatprep.subr.bf16.mxu0 0
        %5505 = vmatpush1.bf16.msra.mxu0 %v4121
        %5506 = vmatprep.subr.bf16.mxu0 0
        %5507 = vmatpush1.bf16.msra.mxu0 %v4120
        %5508 = vmatprep.subr.bf16.mxu0 0
        %5509 = vmatpush1.bf16.msra.mxu0 %v4119
        %5510 = vmatprep.subr.bf16.mxu0 0
        %5511 = vmatpush1.bf16.msra.mxu0 %v4118
        %5512 = vmatprep.subr.bf16.mxu0 0
        %5513 = vmatpush1.bf16.msra.mxu0 %v4117
        %5514 = vmatprep.subr.bf16.mxu0 0
        %5515 = vmatpush1.bf16.msra.mxu0 %v4116
        %5516 = vmatprep.subr.bf16.mxu0 0
        %5517 = vmatpush2.bf16.msra.mxu0 %v4131
        %5518 = vmatprep.subr.bf16.mxu0 0
        %5519 = vmatpush2.bf16.msra.mxu0 %v4130
        %5520 = vmatprep.subr.bf16.mxu0 0
        %5521 = vmatpush2.bf16.msra.mxu0 %v4129
        %5522 = vmatprep.subr.bf16.mxu0 0
        %5523 = vmatpush2.bf16.msra.mxu0 %v4128
        %5524 = vmatprep.subr.bf16.mxu0 0
        %5525 = vmatpush2.bf16.msra.mxu0 %v4127
        %5526 = vmatprep.subr.bf16.mxu0 0
        %5527 = vmatpush2.bf16.msra.mxu0 %v4126
        %5528 = vmatprep.subr.bf16.mxu0 0
        %5529 = vmatpush2.bf16.msra.mxu0 %v4125
        %5530 = vmatprep.subr.bf16.mxu0 0
        %5531 = vmatpush2.bf16.msra.mxu0 %v4124
        %5532 = vmatprep.mubr.bf16.mxu0 %v770
        %5533 = vmatmul.mubr.bf16.gmra.mxu0 %v769
        %v5534 = vpop.f32.mrf.mxu0
        %v5535 = vadd.f32 %v5495, %v5534
        %v5536 = vpop.f32.mrf.mxu0
        %v5537 = vpop.f32.mrf.mxu0
        %v5538 = vpop.f32.mrf.mxu0
        %5539 = vdwg.mxu0
        %5540 = vmatprep.subr.bf16.mxu0 0
        %5541 = vmatpush1.bf16.msra.mxu0 %v4139
        %5542 = vmatprep.subr.bf16.mxu0 0
        %5543 = vmatpush1.bf16.msra.mxu0 %v4138
        %5544 = vmatprep.subr.bf16.mxu0 0
        %5545 = vmatpush1.bf16.msra.mxu0 %v4137
        %5546 = vmatprep.subr.bf16.mxu0 0
        %5547 = vmatpush1.bf16.msra.mxu0 %v4136
        %5548 = vmatprep.subr.bf16.mxu0 0
        %5549 = vmatpush1.bf16.msra.mxu0 %v4135
        %5550 = vmatprep.subr.bf16.mxu0 0
        %5551 = vmatpush1.bf16.msra.mxu0 %v4134
        %5552 = vmatprep.subr.bf16.mxu0 0
        %5553 = vmatpush1.bf16.msra.mxu0 %v4133
        %5554 = vmatprep.subr.bf16.mxu0 0
        %5555 = vmatpush1.bf16.msra.mxu0 %v4132
        %5556 = vmatprep.subr.bf16.mxu0 0
        %5557 = vmatpush2.bf16.msra.mxu0 %v4147
        %5558 = vmatprep.subr.bf16.mxu0 0
        %5559 = vmatpush2.bf16.msra.mxu0 %v4146
        %5560 = vmatprep.subr.bf16.mxu0 0
        %5561 = vmatpush2.bf16.msra.mxu0 %v4145
        %5562 = vmatprep.subr.bf16.mxu0 0
        %5563 = vmatpush2.bf16.msra.mxu0 %v4144
        %5564 = vmatprep.subr.bf16.mxu0 0
        %5565 = vmatpush2.bf16.msra.mxu0 %v4143
        %5566 = vmatprep.subr.bf16.mxu0 0
        %5567 = vmatpush2.bf16.msra.mxu0 %v4142
        %5568 = vmatprep.subr.bf16.mxu0 0
        %5569 = vmatpush2.bf16.msra.mxu0 %v4141
        %5570 = vmatprep.subr.bf16.mxu0 0
        %5571 = vmatpush2.bf16.msra.mxu0 %v4140
        %5572 = vmatprep.mubr.bf16.mxu0 %v772
        %5573 = vmatmul.mubr.bf16.gmra.mxu0 %v771
        %v5574 = vpop.f32.mrf.mxu0
        %v5575 = vadd.f32 %v5535, %v5574
        %v5576 = vpop.f32.mrf.mxu0
        %v5577 = vpop.f32.mrf.mxu0
        %v5578 = vpop.f32.mrf.mxu0
        %5579 = vdwg.mxu0
        %5580 = vmatprep.subr.bf16.mxu0 0
        %5581 = vmatpush1.bf16.msra.mxu0 %v4155
        %5582 = vmatprep.subr.bf16.mxu0 0
        %5583 = vmatpush1.bf16.msra.mxu0 %v4154
        %5584 = vmatprep.subr.bf16.mxu0 0
        %5585 = vmatpush1.bf16.msra.mxu0 %v4153
        %5586 = vmatprep.subr.bf16.mxu0 0
        %5587 = vmatpush1.bf16.msra.mxu0 %v4152
        %5588 = vmatprep.subr.bf16.mxu0 0
        %5589 = vmatpush1.bf16.msra.mxu0 %v4151
        %5590 = vmatprep.subr.bf16.mxu0 0
        %5591 = vmatpush1.bf16.msra.mxu0 %v4150
        %5592 = vmatprep.subr.bf16.mxu0 0
        %5593 = vmatpush1.bf16.msra.mxu0 %v4149
        %5594 = vmatprep.subr.bf16.mxu0 0
        %5595 = vmatpush1.bf16.msra.mxu0 %v4148
        %5596 = vmatprep.subr.bf16.mxu0 0
        %5597 = vmatpush2.bf16.msra.mxu0 %v4163
        %5598 = vmatprep.subr.bf16.mxu0 0
        %5599 = vmatpush2.bf16.msra.mxu0 %v4162
        %5600 = vmatprep.subr.bf16.mxu0 0
        %5601 = vmatpush2.bf16.msra.mxu0 %v4161
        %5602 = vmatprep.subr.bf16.mxu0 0
        %5603 = vmatpush2.bf16.msra.mxu0 %v4160
        %5604 = vmatprep.subr.bf16.mxu0 0
        %5605 = vmatpush2.bf16.msra.mxu0 %v4159
        %5606 = vmatprep.subr.bf16.mxu0 0
        %5607 = vmatpush2.bf16.msra.mxu0 %v4158
        %5608 = vmatprep.subr.bf16.mxu0 0
        %5609 = vmatpush2.bf16.msra.mxu0 %v4157
        %5610 = vmatprep.subr.bf16.mxu0 0
        %5611 = vmatpush2.bf16.msra.mxu0 %v4156
        %5612 = vmatprep.mubr.bf16.mxu0 %v774
        %5613 = vmatmul.mubr.bf16.gmra.mxu0 %v773
        %v5614 = vpop.f32.mrf.mxu0
        %v5615 = vadd.f32 %v5575, %v5614
        %v5616 = vpop.f32.mrf.mxu0
        %v5617 = vpop.f32.mrf.mxu0
        %v5618 = vpop.f32.mrf.mxu0
        %5619 = vdwg.mxu0
        %5620 = vmatprep.subr.bf16.mxu0 0
        %5621 = vmatpush1.bf16.msra.mxu0 %v4171
        %5622 = vmatprep.subr.bf16.mxu0 0
        %5623 = vmatpush1.bf16.msra.mxu0 %v4170
        %5624 = vmatprep.subr.bf16.mxu0 0
        %5625 = vmatpush1.bf16.msra.mxu0 %v4169
        %5626 = vmatprep.subr.bf16.mxu0 0
        %5627 = vmatpush1.bf16.msra.mxu0 %v4168
        %5628 = vmatprep.subr.bf16.mxu0 0
        %5629 = vmatpush1.bf16.msra.mxu0 %v4167
        %5630 = vmatprep.subr.bf16.mxu0 0
        %5631 = vmatpush1.bf16.msra.mxu0 %v4166
        %5632 = vmatprep.subr.bf16.mxu0 0
        %5633 = vmatpush1.bf16.msra.mxu0 %v4165
        %5634 = vmatprep.subr.bf16.mxu0 0
        %5635 = vmatpush1.bf16.msra.mxu0 %v4164
        %5636 = vmatprep.subr.bf16.mxu0 0
        %5637 = vmatpush2.bf16.msra.mxu0 %v4179
        %5638 = vmatprep.subr.bf16.mxu0 0
        %5639 = vmatpush2.bf16.msra.mxu0 %v4178
        %5640 = vmatprep.subr.bf16.mxu0 0
        %5641 = vmatpush2.bf16.msra.mxu0 %v4177
        %5642 = vmatprep.subr.bf16.mxu0 0
        %5643 = vmatpush2.bf16.msra.mxu0 %v4176
        %5644 = vmatprep.subr.bf16.mxu0 0
        %5645 = vmatpush2.bf16.msra.mxu0 %v4175
        %5646 = vmatprep.subr.bf16.mxu0 0
        %5647 = vmatpush2.bf16.msra.mxu0 %v4174
        %5648 = vmatprep.subr.bf16.mxu0 0
        %5649 = vmatpush2.bf16.msra.mxu0 %v4173
        %5650 = vmatprep.subr.bf16.mxu0 0
        %5651 = vmatpush2.bf16.msra.mxu0 %v4172
        %5652 = vmatprep.mubr.bf16.mxu0 %v776
        %5653 = vmatmul.mubr.bf16.gmra.mxu0 %v775
        %v5654 = vpop.f32.mrf.mxu0
        %v5655 = vadd.f32 %v5615, %v5654
        %v5656 = vpop.f32.mrf.mxu0
        %v5657 = vpop.f32.mrf.mxu0
        %v5658 = vpop.f32.mrf.mxu0
        %5659 = vdwg.mxu0
        %5660 = vmatprep.subr.bf16.mxu0 0
        %5661 = vmatpush1.bf16.msra.mxu0 %v4187
        %5662 = vmatprep.subr.bf16.mxu0 0
        %5663 = vmatpush1.bf16.msra.mxu0 %v4186
        %5664 = vmatprep.subr.bf16.mxu0 0
        %5665 = vmatpush1.bf16.msra.mxu0 %v4185
        %5666 = vmatprep.subr.bf16.mxu0 0
        %5667 = vmatpush1.bf16.msra.mxu0 %v4184
        %5668 = vmatprep.subr.bf16.mxu0 0
        %5669 = vmatpush1.bf16.msra.mxu0 %v4183
        %5670 = vmatprep.subr.bf16.mxu0 0
        %5671 = vmatpush1.bf16.msra.mxu0 %v4182
        %5672 = vmatprep.subr.bf16.mxu0 0
        %5673 = vmatpush1.bf16.msra.mxu0 %v4181
        %5674 = vmatprep.subr.bf16.mxu0 0
        %5675 = vmatpush1.bf16.msra.mxu0 %v4180
        %5676 = vmatprep.subr.bf16.mxu0 0
        %5677 = vmatpush2.bf16.msra.mxu0 %v4195
        %5678 = vmatprep.subr.bf16.mxu0 0
        %5679 = vmatpush2.bf16.msra.mxu0 %v4194
        %5680 = vmatprep.subr.bf16.mxu0 0
        %5681 = vmatpush2.bf16.msra.mxu0 %v4193
        %5682 = vmatprep.subr.bf16.mxu0 0
        %5683 = vmatpush2.bf16.msra.mxu0 %v4192
        %5684 = vmatprep.subr.bf16.mxu0 0
        %5685 = vmatpush2.bf16.msra.mxu0 %v4191
        %5686 = vmatprep.subr.bf16.mxu0 0
        %5687 = vmatpush2.bf16.msra.mxu0 %v4190
        %5688 = vmatprep.subr.bf16.mxu0 0
        %5689 = vmatpush2.bf16.msra.mxu0 %v4189
        %5690 = vmatprep.subr.bf16.mxu0 0
        %5691 = vmatpush2.bf16.msra.mxu0 %v4188
        %5692 = vmatprep.mubr.bf16.mxu0 %v778
        %5693 = vmatmul.mubr.bf16.gmra.mxu0 %v777
        %v5694 = vpop.f32.mrf.mxu0
        %v5695 = vadd.f32 %v5655, %v5694
        %v5696 = vpop.f32.mrf.mxu0
        %v5697 = vpop.f32.mrf.mxu0
        %v5698 = vpop.f32.mrf.mxu0
        %5699 = vdwg.mxu0
        %5700 = vmatprep.subr.bf16.mxu0 0
        %5701 = vmatpush1.bf16.msra.mxu0 %v4203
        %5702 = vmatprep.subr.bf16.mxu0 0
        %5703 = vmatpush1.bf16.msra.mxu0 %v4202
        %5704 = vmatprep.subr.bf16.mxu0 0
        %5705 = vmatpush1.bf16.msra.mxu0 %v4201
        %5706 = vmatprep.subr.bf16.mxu0 0
        %5707 = vmatpush1.bf16.msra.mxu0 %v4200
        %5708 = vmatprep.subr.bf16.mxu0 0
        %5709 = vmatpush1.bf16.msra.mxu0 %v4199
        %5710 = vmatprep.subr.bf16.mxu0 0
        %5711 = vmatpush1.bf16.msra.mxu0 %v4198
        %5712 = vmatprep.subr.bf16.mxu0 0
        %5713 = vmatpush1.bf16.msra.mxu0 %v4197
        %5714 = vmatprep.subr.bf16.mxu0 0
        %5715 = vmatpush1.bf16.msra.mxu0 %v4196
        %5716 = vmatprep.subr.bf16.mxu0 0
        %5717 = vmatpush2.bf16.msra.mxu0 %v4211
        %5718 = vmatprep.subr.bf16.mxu0 0
        %5719 = vmatpush2.bf16.msra.mxu0 %v4210
        %5720 = vmatprep.subr.bf16.mxu0 0
        %5721 = vmatpush2.bf16.msra.mxu0 %v4209
        %5722 = vmatprep.subr.bf16.mxu0 0
        %5723 = vmatpush2.bf16.msra.mxu0 %v4208
        %5724 = vmatprep.subr.bf16.mxu0 0
        %5725 = vmatpush2.bf16.msra.mxu0 %v4207
        %5726 = vmatprep.subr.bf16.mxu0 0
        %5727 = vmatpush2.bf16.msra.mxu0 %v4206
        %5728 = vmatprep.subr.bf16.mxu0 0
        %5729 = vmatpush2.bf16.msra.mxu0 %v4205
        %5730 = vmatprep.subr.bf16.mxu0 0
        %5731 = vmatpush2.bf16.msra.mxu0 %v4204
        %5732 = vmatprep.mubr.bf16.mxu0 %v780
        %5733 = vmatmul.mubr.bf16.gmra.mxu0 %v779
        %v5734 = vpop.f32.mrf.mxu0
        %v5735 = vadd.f32 %v5695, %v5734
        %v5736 = vpop.f32.mrf.mxu0
        %v5737 = vpop.f32.mrf.mxu0
        %v5738 = vpop.f32.mrf.mxu0
        %5739 = vdwg.mxu0
        %5740 = vmatprep.subr.bf16.mxu0 0
        %5741 = vmatpush1.bf16.msra.mxu0 %v4219
        %5742 = vmatprep.subr.bf16.mxu0 0
        %5743 = vmatpush1.bf16.msra.mxu0 %v4218
        %5744 = vmatprep.subr.bf16.mxu0 0
        %5745 = vmatpush1.bf16.msra.mxu0 %v4217
        %5746 = vmatprep.subr.bf16.mxu0 0
        %5747 = vmatpush1.bf16.msra.mxu0 %v4216
        %5748 = vmatprep.subr.bf16.mxu0 0
        %5749 = vmatpush1.bf16.msra.mxu0 %v4215
        %5750 = vmatprep.subr.bf16.mxu0 0
        %5751 = vmatpush1.bf16.msra.mxu0 %v4214
        %5752 = vmatprep.subr.bf16.mxu0 0
        %5753 = vmatpush1.bf16.msra.mxu0 %v4213
        %5754 = vmatprep.subr.bf16.mxu0 0
        %5755 = vmatpush1.bf16.msra.mxu0 %v4212
        %5756 = vmatprep.subr.bf16.mxu0 0
        %5757 = vmatpush2.bf16.msra.mxu0 %v4227
        %5758 = vmatprep.subr.bf16.mxu0 0
        %5759 = vmatpush2.bf16.msra.mxu0 %v4226
        %5760 = vmatprep.subr.bf16.mxu0 0
        %5761 = vmatpush2.bf16.msra.mxu0 %v4225
        %5762 = vmatprep.subr.bf16.mxu0 0
        %5763 = vmatpush2.bf16.msra.mxu0 %v4224
        %5764 = vmatprep.subr.bf16.mxu0 0
        %5765 = vmatpush2.bf16.msra.mxu0 %v4223
        %5766 = vmatprep.subr.bf16.mxu0 0
        %5767 = vmatpush2.bf16.msra.mxu0 %v4222
        %5768 = vmatprep.subr.bf16.mxu0 0
        %5769 = vmatpush2.bf16.msra.mxu0 %v4221
        %5770 = vmatprep.subr.bf16.mxu0 0
        %5771 = vmatpush2.bf16.msra.mxu0 %v4220
        %5772 = vmatprep.mubr.bf16.mxu0 %v782
        %5773 = vmatmul.mubr.bf16.gmra.mxu0 %v781
        %v5774 = vpop.f32.mrf.mxu0
        %v5775 = vadd.f32 %v5735, %v5774
        %v5776 = vpop.f32.mrf.mxu0
        %v5777 = vpop.f32.mrf.mxu0
        %v5778 = vpop.f32.mrf.mxu0
        %5779 = vdwg.mxu0
        %5780 = vmatprep.subr.bf16.mxu0 0
        %5781 = vmatpush1.bf16.msra.mxu0 %v4235
        %5782 = vmatprep.subr.bf16.mxu0 0
        %5783 = vmatpush1.bf16.msra.mxu0 %v4234
        %5784 = vmatprep.subr.bf16.mxu0 0
        %5785 = vmatpush1.bf16.msra.mxu0 %v4233
        %5786 = vmatprep.subr.bf16.mxu0 0
        %5787 = vmatpush1.bf16.msra.mxu0 %v4232
        %5788 = vmatprep.subr.bf16.mxu0 0
        %5789 = vmatpush1.bf16.msra.mxu0 %v4231
        %5790 = vmatprep.subr.bf16.mxu0 0
        %5791 = vmatpush1.bf16.msra.mxu0 %v4230
        %5792 = vmatprep.subr.bf16.mxu0 0
        %5793 = vmatpush1.bf16.msra.mxu0 %v4229
        %5794 = vmatprep.subr.bf16.mxu0 0
        %5795 = vmatpush1.bf16.msra.mxu0 %v4228
        %5796 = vmatprep.subr.bf16.mxu0 0
        %5797 = vmatpush2.bf16.msra.mxu0 %v4243
        %5798 = vmatprep.subr.bf16.mxu0 0
        %5799 = vmatpush2.bf16.msra.mxu0 %v4242
        %5800 = vmatprep.subr.bf16.mxu0 0
        %5801 = vmatpush2.bf16.msra.mxu0 %v4241
        %5802 = vmatprep.subr.bf16.mxu0 0
        %5803 = vmatpush2.bf16.msra.mxu0 %v4240
        %5804 = vmatprep.subr.bf16.mxu0 0
        %5805 = vmatpush2.bf16.msra.mxu0 %v4239
        %5806 = vmatprep.subr.bf16.mxu0 0
        %5807 = vmatpush2.bf16.msra.mxu0 %v4238
        %5808 = vmatprep.subr.bf16.mxu0 0
        %5809 = vmatpush2.bf16.msra.mxu0 %v4237
        %5810 = vmatprep.subr.bf16.mxu0 0
        %5811 = vmatpush2.bf16.msra.mxu0 %v4236
        %5812 = vmatprep.mubr.bf16.mxu0 %v784
        %5813 = vmatmul.mubr.bf16.gmra.mxu0 %v783
        %v5814 = vpop.f32.mrf.mxu0
        %v5815 = vadd.f32 %v5775, %v5814
        %v5816 = vpop.f32.mrf.mxu0
        %v5817 = vpop.f32.mrf.mxu0
        %v5818 = vpop.f32.mrf.mxu0
        %5819 = vdwg.mxu0
        %5820 = vmatprep.subr.bf16.mxu0 0
        %5821 = vmatpush1.bf16.msra.mxu0 %v4251
        %5822 = vmatprep.subr.bf16.mxu0 0
        %5823 = vmatpush1.bf16.msra.mxu0 %v4250
        %5824 = vmatprep.subr.bf16.mxu0 0
        %5825 = vmatpush1.bf16.msra.mxu0 %v4249
        %5826 = vmatprep.subr.bf16.mxu0 0
        %5827 = vmatpush1.bf16.msra.mxu0 %v4248
        %5828 = vmatprep.subr.bf16.mxu0 0
        %5829 = vmatpush1.bf16.msra.mxu0 %v4247
        %5830 = vmatprep.subr.bf16.mxu0 0
        %5831 = vmatpush1.bf16.msra.mxu0 %v4246
        %5832 = vmatprep.subr.bf16.mxu0 0
        %5833 = vmatpush1.bf16.msra.mxu0 %v4245
        %5834 = vmatprep.subr.bf16.mxu0 0
        %5835 = vmatpush1.bf16.msra.mxu0 %v4244
        %5836 = vmatprep.subr.bf16.mxu0 0
        %5837 = vmatpush2.bf16.msra.mxu0 %v4259
        %5838 = vmatprep.subr.bf16.mxu0 0
        %5839 = vmatpush2.bf16.msra.mxu0 %v4258
        %5840 = vmatprep.subr.bf16.mxu0 0
        %5841 = vmatpush2.bf16.msra.mxu0 %v4257
        %5842 = vmatprep.subr.bf16.mxu0 0
        %5843 = vmatpush2.bf16.msra.mxu0 %v4256
        %5844 = vmatprep.subr.bf16.mxu0 0
        %5845 = vmatpush2.bf16.msra.mxu0 %v4255
        %5846 = vmatprep.subr.bf16.mxu0 0
        %5847 = vmatpush2.bf16.msra.mxu0 %v4254
        %5848 = vmatprep.subr.bf16.mxu0 0
        %5849 = vmatpush2.bf16.msra.mxu0 %v4253
        %5850 = vmatprep.subr.bf16.mxu0 0
        %5851 = vmatpush2.bf16.msra.mxu0 %v4252
        %5852 = vmatprep.mubr.bf16.mxu0 %v786
        %5853 = vmatmul.mubr.bf16.gmra.mxu0 %v785
        %v5854 = vpop.f32.mrf.mxu0
        %v5855 = vadd.f32 %v5815, %v5854
        %v5856 = vpop.f32.mrf.mxu0
        %v5857 = vpop.f32.mrf.mxu0
        %v5858 = vpop.f32.mrf.mxu0
        %5859 = vdwg.mxu0
        %5860 = vmatprep.subr.bf16.mxu0 0
        %5861 = vmatpush1.bf16.msra.mxu0 %v4267
        %5862 = vmatprep.subr.bf16.mxu0 0
        %5863 = vmatpush1.bf16.msra.mxu0 %v4266
        %5864 = vmatprep.subr.bf16.mxu0 0
        %5865 = vmatpush1.bf16.msra.mxu0 %v4265
        %5866 = vmatprep.subr.bf16.mxu0 0
        %5867 = vmatpush1.bf16.msra.mxu0 %v4264
        %5868 = vmatprep.subr.bf16.mxu0 0
        %5869 = vmatpush1.bf16.msra.mxu0 %v4263
        %5870 = vmatprep.subr.bf16.mxu0 0
        %5871 = vmatpush1.bf16.msra.mxu0 %v4262
        %5872 = vmatprep.subr.bf16.mxu0 0
        %5873 = vmatpush1.bf16.msra.mxu0 %v4261
        %5874 = vmatprep.subr.bf16.mxu0 0
        %5875 = vmatpush1.bf16.msra.mxu0 %v4260
        %5876 = vmatprep.subr.bf16.mxu0 0
        %5877 = vmatpush2.bf16.msra.mxu0 %v4275
        %5878 = vmatprep.subr.bf16.mxu0 0
        %5879 = vmatpush2.bf16.msra.mxu0 %v4274
        %5880 = vmatprep.subr.bf16.mxu0 0
        %5881 = vmatpush2.bf16.msra.mxu0 %v4273
        %5882 = vmatprep.subr.bf16.mxu0 0
        %5883 = vmatpush2.bf16.msra.mxu0 %v4272
        %5884 = vmatprep.subr.bf16.mxu0 0
        %5885 = vmatpush2.bf16.msra.mxu0 %v4271
        %5886 = vmatprep.subr.bf16.mxu0 0
        %5887 = vmatpush2.bf16.msra.mxu0 %v4270
        %5888 = vmatprep.subr.bf16.mxu0 0
        %5889 = vmatpush2.bf16.msra.mxu0 %v4269
        %5890 = vmatprep.subr.bf16.mxu0 0
        %5891 = vmatpush2.bf16.msra.mxu0 %v4268
        %5892 = vmatprep.mubr.bf16.mxu0 %v788
        %5893 = vmatmul.mubr.bf16.gmra.mxu0 %v787
        %v5894 = vpop.f32.mrf.mxu0
        %v5895 = vadd.f32 %v5855, %v5894
        %v5896 = vpop.f32.mrf.mxu0
        %v5897 = vpop.f32.mrf.mxu0
        %v5898 = vpop.f32.mrf.mxu0
        %5899 = vdwg.mxu0
        %5900 = vmatprep.subr.bf16.mxu0 0
        %5901 = vmatpush1.bf16.msra.mxu0 %v4283
        %5902 = vmatprep.subr.bf16.mxu0 0
        %5903 = vmatpush1.bf16.msra.mxu0 %v4282
        %5904 = vmatprep.subr.bf16.mxu0 0
        %5905 = vmatpush1.bf16.msra.mxu0 %v4281
        %5906 = vmatprep.subr.bf16.mxu0 0
        %5907 = vmatpush1.bf16.msra.mxu0 %v4280
        %5908 = vmatprep.subr.bf16.mxu0 0
        %5909 = vmatpush1.bf16.msra.mxu0 %v4279
        %5910 = vmatprep.subr.bf16.mxu0 0
        %5911 = vmatpush1.bf16.msra.mxu0 %v4278
        %5912 = vmatprep.subr.bf16.mxu0 0
        %5913 = vmatpush1.bf16.msra.mxu0 %v4277
        %5914 = vmatprep.subr.bf16.mxu0 0
        %5915 = vmatpush1.bf16.msra.mxu0 %v4276
        %5916 = vmatprep.subr.bf16.mxu0 0
        %5917 = vmatpush2.bf16.msra.mxu0 %v4291
        %5918 = vmatprep.subr.bf16.mxu0 0
        %5919 = vmatpush2.bf16.msra.mxu0 %v4290
        %5920 = vmatprep.subr.bf16.mxu0 0
        %5921 = vmatpush2.bf16.msra.mxu0 %v4289
        %5922 = vmatprep.subr.bf16.mxu0 0
        %5923 = vmatpush2.bf16.msra.mxu0 %v4288
        %5924 = vmatprep.subr.bf16.mxu0 0
        %5925 = vmatpush2.bf16.msra.mxu0 %v4287
        %5926 = vmatprep.subr.bf16.mxu0 0
        %5927 = vmatpush2.bf16.msra.mxu0 %v4286
        %5928 = vmatprep.subr.bf16.mxu0 0
        %5929 = vmatpush2.bf16.msra.mxu0 %v4285
        %5930 = vmatprep.subr.bf16.mxu0 0
        %5931 = vmatpush2.bf16.msra.mxu0 %v4284
        %5932 = vmatprep.mubr.bf16.mxu0 %v790
        %5933 = vmatmul.mubr.bf16.gmra.mxu0 %v789
        %v5934 = vpop.f32.mrf.mxu0
        %v5935 = vadd.f32 %v5895, %v5934
        %v5936 = vpop.f32.mrf.mxu0
        %v5937 = vpop.f32.mrf.mxu0
        %v5938 = vpop.f32.mrf.mxu0
        %5939 = vdwg.mxu0
        %5940 = vmatprep.subr.bf16.mxu0 0
        %5941 = vmatpush1.bf16.msra.mxu0 %v4299
        %5942 = vmatprep.subr.bf16.mxu0 0
        %5943 = vmatpush1.bf16.msra.mxu0 %v4298
        %5944 = vmatprep.subr.bf16.mxu0 0
        %5945 = vmatpush1.bf16.msra.mxu0 %v4297
        %5946 = vmatprep.subr.bf16.mxu0 0
        %5947 = vmatpush1.bf16.msra.mxu0 %v4296
        %5948 = vmatprep.subr.bf16.mxu0 0
        %5949 = vmatpush1.bf16.msra.mxu0 %v4295
        %5950 = vmatprep.subr.bf16.mxu0 0
        %5951 = vmatpush1.bf16.msra.mxu0 %v4294
        %5952 = vmatprep.subr.bf16.mxu0 0
        %5953 = vmatpush1.bf16.msra.mxu0 %v4293
        %5954 = vmatprep.subr.bf16.mxu0 0
        %5955 = vmatpush1.bf16.msra.mxu0 %v4292
        %5956 = vmatprep.subr.bf16.mxu0 0
        %5957 = vmatpush2.bf16.msra.mxu0 %v4307
        %5958 = vmatprep.subr.bf16.mxu0 0
        %5959 = vmatpush2.bf16.msra.mxu0 %v4306
        %5960 = vmatprep.subr.bf16.mxu0 0
        %5961 = vmatpush2.bf16.msra.mxu0 %v4305
        %5962 = vmatprep.subr.bf16.mxu0 0
        %5963 = vmatpush2.bf16.msra.mxu0 %v4304
        %5964 = vmatprep.subr.bf16.mxu0 0
        %5965 = vmatpush2.bf16.msra.mxu0 %v4303
        %5966 = vmatprep.subr.bf16.mxu0 0
        %5967 = vmatpush2.bf16.msra.mxu0 %v4302
        %5968 = vmatprep.subr.bf16.mxu0 0
        %5969 = vmatpush2.bf16.msra.mxu0 %v4301
        %5970 = vmatprep.subr.bf16.mxu0 0
        %5971 = vmatpush2.bf16.msra.mxu0 %v4300
        %5972 = vmatprep.mubr.bf16.mxu0 %v792
        %5973 = vmatmul.mubr.bf16.gmra.mxu0 %v791
        %v5974 = vpop.f32.mrf.mxu0
        %v5975 = vadd.f32 %v5935, %v5974
        %v5976 = vpop.f32.mrf.mxu0
        %v5977 = vpop.f32.mrf.mxu0
        %v5978 = vpop.f32.mrf.mxu0
        %5979 = vdwg.mxu0
        %5980 = vmatprep.subr.bf16.mxu0 0
        %5981 = vmatpush1.bf16.msra.mxu0 %v4315
        %5982 = vmatprep.subr.bf16.mxu0 0
        %5983 = vmatpush1.bf16.msra.mxu0 %v4314
        %5984 = vmatprep.subr.bf16.mxu0 0
        %5985 = vmatpush1.bf16.msra.mxu0 %v4313
        %5986 = vmatprep.subr.bf16.mxu0 0
        %5987 = vmatpush1.bf16.msra.mxu0 %v4312
        %5988 = vmatprep.subr.bf16.mxu0 0
        %5989 = vmatpush1.bf16.msra.mxu0 %v4311
        %5990 = vmatprep.subr.bf16.mxu0 0
        %5991 = vmatpush1.bf16.msra.mxu0 %v4310
        %5992 = vmatprep.subr.bf16.mxu0 0
        %5993 = vmatpush1.bf16.msra.mxu0 %v4309
        %5994 = vmatprep.subr.bf16.mxu0 0
        %5995 = vmatpush1.bf16.msra.mxu0 %v4308
        %5996 = vmatprep.subr.bf16.mxu0 0
        %5997 = vmatpush2.bf16.msra.mxu0 %v4323
        %5998 = vmatprep.subr.bf16.mxu0 0
        %5999 = vmatpush2.bf16.msra.mxu0 %v4322
        %6000 = vmatprep.subr.bf16.mxu0 0
        %6001 = vmatpush2.bf16.msra.mxu0 %v4321
        %6002 = vmatprep.subr.bf16.mxu0 0
        %6003 = vmatpush2.bf16.msra.mxu0 %v4320
        %6004 = vmatprep.subr.bf16.mxu0 0
        %6005 = vmatpush2.bf16.msra.mxu0 %v4319
        %6006 = vmatprep.subr.bf16.mxu0 0
        %6007 = vmatpush2.bf16.msra.mxu0 %v4318
        %6008 = vmatprep.subr.bf16.mxu0 0
        %6009 = vmatpush2.bf16.msra.mxu0 %v4317
        %6010 = vmatprep.subr.bf16.mxu0 0
        %6011 = vmatpush2.bf16.msra.mxu0 %v4316
        %6012 = vmatprep.mubr.bf16.mxu0 %v794
        %6013 = vmatmul.mubr.bf16.gmra.mxu0 %v793
        %v6014 = vpop.f32.mrf.mxu0
        %v6015 = vadd.f32 %v5975, %v6014
        %v6016 = vpop.f32.mrf.mxu0
        %v6017 = vpop.f32.mrf.mxu0
        %v6018 = vpop.f32.mrf.mxu0
        %6019 = vdwg.mxu0
        %6020 = vmatprep.subr.bf16.mxu0 0
        %6021 = vmatpush1.bf16.msra.mxu0 %v4331
        %6022 = vmatprep.subr.bf16.mxu0 0
        %6023 = vmatpush1.bf16.msra.mxu0 %v4330
        %6024 = vmatprep.subr.bf16.mxu0 0
        %6025 = vmatpush1.bf16.msra.mxu0 %v4329
        %6026 = vmatprep.subr.bf16.mxu0 0
        %6027 = vmatpush1.bf16.msra.mxu0 %v4328
        %6028 = vmatprep.subr.bf16.mxu0 0
        %6029 = vmatpush1.bf16.msra.mxu0 %v4327
        %6030 = vmatprep.subr.bf16.mxu0 0
        %6031 = vmatpush1.bf16.msra.mxu0 %v4326
        %6032 = vmatprep.subr.bf16.mxu0 0
        %6033 = vmatpush1.bf16.msra.mxu0 %v4325
        %6034 = vmatprep.subr.bf16.mxu0 0
        %6035 = vmatpush1.bf16.msra.mxu0 %v4324
        %6036 = vmatprep.subr.bf16.mxu0 0
        %6037 = vmatpush2.bf16.msra.mxu0 %v4339
        %6038 = vmatprep.subr.bf16.mxu0 0
        %6039 = vmatpush2.bf16.msra.mxu0 %v4338
        %6040 = vmatprep.subr.bf16.mxu0 0
        %6041 = vmatpush2.bf16.msra.mxu0 %v4337
        %6042 = vmatprep.subr.bf16.mxu0 0
        %6043 = vmatpush2.bf16.msra.mxu0 %v4336
        %6044 = vmatprep.subr.bf16.mxu0 0
        %6045 = vmatpush2.bf16.msra.mxu0 %v4335
        %6046 = vmatprep.subr.bf16.mxu0 0
        %6047 = vmatpush2.bf16.msra.mxu0 %v4334
        %6048 = vmatprep.subr.bf16.mxu0 0
        %6049 = vmatpush2.bf16.msra.mxu0 %v4333
        %6050 = vmatprep.subr.bf16.mxu0 0
        %6051 = vmatpush2.bf16.msra.mxu0 %v4332
        %6052 = vmatprep.mubr.bf16.mxu0 %v796
        %6053 = vmatmul.mubr.bf16.gmra.mxu0 %v795
        %v6054 = vpop.f32.mrf.mxu0
        %v6055 = vadd.f32 %v6015, %v6054
        %v6056 = vpop.f32.mrf.mxu0
        %v6057 = vpop.f32.mrf.mxu0
        %v6058 = vpop.f32.mrf.mxu0
        %6059 = vdwg.mxu0
        %6060 = vmatprep.subr.bf16.mxu0 0
        %6061 = vmatpush1.bf16.msra.mxu0 %v4347
        %6062 = vmatprep.subr.bf16.mxu0 0
        %6063 = vmatpush1.bf16.msra.mxu0 %v4346
        %6064 = vmatprep.subr.bf16.mxu0 0
        %6065 = vmatpush1.bf16.msra.mxu0 %v4345
        %6066 = vmatprep.subr.bf16.mxu0 0
        %6067 = vmatpush1.bf16.msra.mxu0 %v4344
        %6068 = vmatprep.subr.bf16.mxu0 0
        %6069 = vmatpush1.bf16.msra.mxu0 %v4343
        %6070 = vmatprep.subr.bf16.mxu0 0
        %6071 = vmatpush1.bf16.msra.mxu0 %v4342
        %6072 = vmatprep.subr.bf16.mxu0 0
        %6073 = vmatpush1.bf16.msra.mxu0 %v4341
        %6074 = vmatprep.subr.bf16.mxu0 0
        %6075 = vmatpush1.bf16.msra.mxu0 %v4340
        %6076 = vmatprep.subr.bf16.mxu0 0
        %6077 = vmatpush2.bf16.msra.mxu0 %v4355
        %6078 = vmatprep.subr.bf16.mxu0 0
        %6079 = vmatpush2.bf16.msra.mxu0 %v4354
        %6080 = vmatprep.subr.bf16.mxu0 0
        %6081 = vmatpush2.bf16.msra.mxu0 %v4353
        %6082 = vmatprep.subr.bf16.mxu0 0
        %6083 = vmatpush2.bf16.msra.mxu0 %v4352
        %6084 = vmatprep.subr.bf16.mxu0 0
        %6085 = vmatpush2.bf16.msra.mxu0 %v4351
        %6086 = vmatprep.subr.bf16.mxu0 0
        %6087 = vmatpush2.bf16.msra.mxu0 %v4350
        %6088 = vmatprep.subr.bf16.mxu0 0
        %6089 = vmatpush2.bf16.msra.mxu0 %v4349
        %6090 = vmatprep.subr.bf16.mxu0 0
        %6091 = vmatpush2.bf16.msra.mxu0 %v4348
        %6092 = vmatprep.mubr.bf16.mxu0 %v798
        %6093 = vmatmul.mubr.bf16.gmra.mxu0 %v797
        %v6094 = vpop.f32.mrf.mxu0
        %v6095 = vadd.f32 %v6055, %v6094
        %v6096 = vpop.f32.mrf.mxu0
        %v6097 = vpop.f32.mrf.mxu0
        %v6098 = vpop.f32.mrf.mxu0
        %6099 = vdwg.mxu0
        %6100 = vmatprep.subr.bf16.mxu0 0
        %6101 = vmatpush1.bf16.msra.mxu0 %v4363
        %6102 = vmatprep.subr.bf16.mxu0 0
        %6103 = vmatpush1.bf16.msra.mxu0 %v4362
        %6104 = vmatprep.subr.bf16.mxu0 0
        %6105 = vmatpush1.bf16.msra.mxu0 %v4361
        %6106 = vmatprep.subr.bf16.mxu0 0
        %6107 = vmatpush1.bf16.msra.mxu0 %v4360
        %6108 = vmatprep.subr.bf16.mxu0 0
        %6109 = vmatpush1.bf16.msra.mxu0 %v4359
        %6110 = vmatprep.subr.bf16.mxu0 0
        %6111 = vmatpush1.bf16.msra.mxu0 %v4358
        %6112 = vmatprep.subr.bf16.mxu0 0
        %6113 = vmatpush1.bf16.msra.mxu0 %v4357
        %6114 = vmatprep.subr.bf16.mxu0 0
        %6115 = vmatpush1.bf16.msra.mxu0 %v4356
        %6116 = vmatprep.subr.bf16.mxu0 0
        %6117 = vmatpush2.bf16.msra.mxu0 %v4371
        %6118 = vmatprep.subr.bf16.mxu0 0
        %6119 = vmatpush2.bf16.msra.mxu0 %v4370
        %6120 = vmatprep.subr.bf16.mxu0 0
        %6121 = vmatpush2.bf16.msra.mxu0 %v4369
        %6122 = vmatprep.subr.bf16.mxu0 0
        %6123 = vmatpush2.bf16.msra.mxu0 %v4368
        %6124 = vmatprep.subr.bf16.mxu0 0
        %6125 = vmatpush2.bf16.msra.mxu0 %v4367
        %6126 = vmatprep.subr.bf16.mxu0 0
        %6127 = vmatpush2.bf16.msra.mxu0 %v4366
        %6128 = vmatprep.subr.bf16.mxu0 0
        %6129 = vmatpush2.bf16.msra.mxu0 %v4365
        %6130 = vmatprep.subr.bf16.mxu0 0
        %6131 = vmatpush2.bf16.msra.mxu0 %v4364
        %6132 = vmatprep.mubr.bf16.mxu0 %v800
        %6133 = vmatmul.mubr.bf16.gmra.mxu0 %v799
        %v6134 = vpop.f32.mrf.mxu0
        %v6135 = vadd.f32 %v6095, %v6134
        %v6136 = vpop.f32.mrf.mxu0
        %v6137 = vpop.f32.mrf.mxu0
        %v6138 = vpop.f32.mrf.mxu0
        %6139 = vdwg.mxu0
        %6140 = vmatprep.subr.bf16.mxu0 0
        %6141 = vmatpush1.bf16.msra.mxu0 %v4379
        %6142 = vmatprep.subr.bf16.mxu0 0
        %6143 = vmatpush1.bf16.msra.mxu0 %v4378
        %6144 = vmatprep.subr.bf16.mxu0 0
        %6145 = vmatpush1.bf16.msra.mxu0 %v4377
        %6146 = vmatprep.subr.bf16.mxu0 0
        %6147 = vmatpush1.bf16.msra.mxu0 %v4376
        %6148 = vmatprep.subr.bf16.mxu0 0
        %6149 = vmatpush1.bf16.msra.mxu0 %v4375
        %6150 = vmatprep.subr.bf16.mxu0 0
        %6151 = vmatpush1.bf16.msra.mxu0 %v4374
        %6152 = vmatprep.subr.bf16.mxu0 0
        %6153 = vmatpush1.bf16.msra.mxu0 %v4373
        %6154 = vmatprep.subr.bf16.mxu0 0
        %6155 = vmatpush1.bf16.msra.mxu0 %v4372
        %6156 = vmatprep.subr.bf16.mxu0 0
        %6157 = vmatpush2.bf16.msra.mxu0 %v4387
        %6158 = vmatprep.subr.bf16.mxu0 0
        %6159 = vmatpush2.bf16.msra.mxu0 %v4386
        %6160 = vmatprep.subr.bf16.mxu0 0
        %6161 = vmatpush2.bf16.msra.mxu0 %v4385
        %6162 = vmatprep.subr.bf16.mxu0 0
        %6163 = vmatpush2.bf16.msra.mxu0 %v4384
        %6164 = vmatprep.subr.bf16.mxu0 0
        %6165 = vmatpush2.bf16.msra.mxu0 %v4383
        %6166 = vmatprep.subr.bf16.mxu0 0
        %6167 = vmatpush2.bf16.msra.mxu0 %v4382
        %6168 = vmatprep.subr.bf16.mxu0 0
        %6169 = vmatpush2.bf16.msra.mxu0 %v4381
        %6170 = vmatprep.subr.bf16.mxu0 0
        %6171 = vmatpush2.bf16.msra.mxu0 %v4380
        %6172 = vmatprep.mubr.bf16.mxu0 %v802
        %6173 = vmatmul.mubr.bf16.gmra.mxu0 %v801
        %v6174 = vpop.f32.mrf.mxu0
        %v6175 = vadd.f32 %v6135, %v6174
        %v6176 = vpop.f32.mrf.mxu0
        %v6177 = vpop.f32.mrf.mxu0
        %v6178 = vpop.f32.mrf.mxu0
        %6179 = vdwg.mxu0
        %v6180 = vadd.f32 %v803, %v6175
        %vm6181 = vcmask 261120
        %6182 = vst.msk [vmem:[#allocation2] sm:$0xff] %vm6181, %v6180
        %p6183 = scmp.eq.s32.totalorder %s18, 3
        // Predicated region
        $region49: #{tpu_custom_call.1} parent=43 // pred_check
          %p6184 = pneg %p6183
        $region50: #{tpu_custom_call.1} parent=43 // pred_check_branch
          %6186 = sbr.rel (%p6184) target = $region52
        $region51: #{tpu_custom_call.1} parent=43 // pred_region
          %v6187 = vld [vmem:[#allocation2] sm:$0xff]
          %v6188 = vld [vmem:[%s3] sm:$0x1]
          %v6190 = vlaneseq
          %v6191 = vshrl.u32 %v6190, 7
          %v6192 = vsub.s32 0, %v6191
          %v6193 = vrot.slane %v6188, %v6192
          %v6195 = vadd.f32 %v6187, %v6193
          %v6196 = vsel %vm6181, %v6195, 0.0
          %6197 = vadd.xlane.f32.xlu0 %v6196
          %v6198 = vpop.xlane.xlu0 %6197
          %v6199 = vrcp.pop 32.0
          %v6200 = vmul.f32 %v6198, %v6199
          %v6201 = vsub.f32 %v6195, %v6200
          %v6202 = vmul.f32 %v6201, %v6201
          %v6203 = vsel %vm6181, %v6202, 0.0
          %6204 = vadd.xlane.f32.xlu0 %v6203
          %v6205 = vpop.xlane.xlu0 %6204
          %v6206 = vmul.f32 %v6205, %v6199
          %v6207 = vadd.f32 %v6206, 1e-05
          %v6208 = vrsqrt.pop %v6207
          %v6209 = vmul.f32 %v6201, %v6208
          %v6210 = vld [vmem:[%s4] sm:$0x1]
          %v6212 = vlaneseq
          %v6213 = vshrl.u32 %v6212, 7
          %v6214 = vsub.s32 0, %v6213
          %v6215 = vrot.slane %v6210, %v6214
          %v6217 = vmul.f32 %v6209, %v6215
          %v6218 = vld [vmem:[%s5] sm:$0x1]
          %v6220 = vlaneseq
          %v6221 = vshrl.u32 %v6220, 7
          %v6222 = vsub.s32 0, %v6221
          %v6223 = vrot.slane %v6218, %v6222
          %v6225 = vadd.f32 %v6217, %v6223
          %6226 = vst.msk [vmem:[#allocation3] sm:$0xff] %vm6181, %v6225
        $region52: #{tpu_custom_call.1} parent=43 // pred_fallthru
          _
        // Predicated region
        $region53: #{tpu_custom_call.1} parent=43 // pred_check
          %p6227 = pneg %p172
        $region54: #{tpu_custom_call.1} parent=43 // pred_check_branch
          %6229 = sbr.rel (%p6227) target = $region56
        $region55: #{tpu_custom_call.1} parent=43 // pred_region
          %s6231 = ssub.s32 128, 128
          %6232 = vsyncadd [#allocation4], %s6231
          %s6234 = sshll.u32 [#allocation3], 4
          %s6235 = int_to_ptr.vmem [resolvable:$true] %s6234
          %6237 = dma.vmem_to_hbm [thread:$0]  %s6235, 128, %s6, [#allocation4]
        $region56: #{tpu_custom_call.1} parent=43 // pred_fallthru
          _
        // Predicated region
        $region57: #{tpu_custom_call.1} parent=43 // pred_check
          %p6238 = pneg %p172
        $region58: #{tpu_custom_call.1} parent=43 // pred_check_branch
          %6240 = sbr.rel (%p6238) target = $region60
        $region59: #{tpu_custom_call.1} parent=43 // pred_region
          %6241 = dma.done [#allocation4], 128
        $region60: #{tpu_custom_call.1} parent=43 // pred_fallthru
          _
      $region44: #{tpu_custom_call.1} parent=5 // pred_fallthru
        _
      %p6242 = scmp.le.s32.totalorder 2, %s13
      // Predicated region
      $region61: #{tpu_custom_call.1} parent=5 // pred_check
        %p6243 = pneg %p6242
      $region62: #{tpu_custom_call.1} parent=5 // pred_check_branch
        %6245 = sbr.rel (%p6243) target = $region64
      $region63: #{tpu_custom_call.1} parent=5 // pred_region
        %s6246 = ssub.s32 %s13, 2
      $region64: #{tpu_custom_call.1} parent=5 // pred_fallthru
        _
    $region6: #{tpu_custom_call.1} parent=1 // loop_footer
      %s17 = sadd.s32 1, %s13
    $region7: #{tpu_custom_call.1} parent=1 // loop_footer_branch
      %12 = sbr.rel target = $region3
    $region8: #{tpu_custom_call.1} parent=1 // loop_exit
      _
    %6247 = vsyncpa [#allocation4], 1
    %s6248 = scalar_lea.sflag [#allocation4], 1
    %6249 = vsyncpa %s6248, 1

</llo_original>
